<compile_context>
chip_gen: v6e
topology: v6e:2x2x1
jax: 0.10.0
libtpu: 0.0.40
codegen_flags: <defaults>
</compile_context>

<pallas_src>
import jax
import jax.numpy as jnp
from jax.experimental import pallas as pl
from jax.experimental.pallas import tpu as pltpu


def _round_up(v, m):
    return (v + m - 1) // m * m


# ----------------------------------------------------------------------------------
# Kernel body
# ----------------------------------------------------------------------------------
def make_cgc_kernel(num_layers, slot_experts, dim_out, compute_dtype, approx_recip):
    """Fused expert MLP + all-task gates + gated mixture, lane-dense."""

    def kernel(*refs):
        x_ref = refs[0]
        w_refs = refs[1:1 + num_layers]
        b_refs = refs[1 + num_layers:1 + 2 * num_layers]
        wg_ref, bg_ref, rseg_ref, rexp_ref, rsum_ref = refs[1 + 2 * num_layers:-1]
        out_ref = refs[-1]                           # (TB, out_pad)

        xc = x_ref[...]                              # already compute_dtype (cast in wrapper)

        # ---- expert MLP ------------------------------------------------------------
        h = xc
        for l in range(num_layers):
            w_ref, b_ref = w_refs[l], b_refs[l]
            if w_ref.ndim == 3:
                # Per-expert unrolled dots (large lane-aligned experts): avoids the
                # E x zero-MAC inflation of the dense block-diagonal fusion.
                e_total, d_prev, _ = w_ref.shape
                z = jnp.concatenate(
                    [jnp.dot(h[:, e * d_prev:(e + 1) * d_prev], w_ref[e],
                             preferred_element_type=jnp.float32)
                     for e in range(e_total)], axis=-1)
            else:
                # Layer 0: expert-concat matmul.  Middle/last small layers: dense
                # block-diagonal matmul (zero MACs only while the MXU has slack).
                z = jnp.dot(h, w_ref[...], preferred_element_type=jnp.float32)
            z = z + b_ref[...]                       # f32 bias broadcast (once per layer)
            h = jnp.maximum(z, 0.0)                  # ReLU (dropout = eval identity)
            if l + 1 < num_layers:
                h = h.astype(compute_dtype)
        # h: (TB, E*dim_out) f32 -- one block per physical expert (no duplication).

        # ---- per-(task, slot) feature slab: cheap lane-slice copies, no MACs --------
        slab = jnp.concatenate(
            [h[:, e * dim_out:(e + 1) * dim_out] for e in slot_experts], axis=-1)
        # slab: (TB, n_slots*dim_out), slot-major [task][pos][d].

        # ---- all task gates at once --------------------------------------------------
        gl = jnp.dot(xc, wg_ref[...], preferred_element_type=jnp.float32) + bg_ref[...]
        m = jnp.max(gl, axis=-1, keepdims=True)      # row-global max (shift-invariant)
        p = jnp.exp(gl - m)
        # Per-task denominators broadcast to every slot via a 0/1 matmul (MXU); clamp
        # guards the pathological case where a whole segment underflows under the
        # global-max shift.
        denom = jnp.dot(p.astype(compute_dtype), rseg_ref[...],
                        preferred_element_type=jnp.float32)
        denom = jnp.maximum(denom, 1e-30)
        if approx_recip:
            gate = p * pl.reciprocal(denom, approx=True)   # EUP, fast path
        else:
            gate = p / denom                                # exact path
        # Broadcast gate[:, slot] across that slot's dim_out lanes on the MXU.
        ge = jnp.dot(gate.astype(compute_dtype), rexp_ref[...],
                     preferred_element_type=jnp.float32)

        # ---- gated mixture + per-task reduction over experts (MXU) -------------------
        # TODO(synk): at production sizes with dim_out % 128 == 0, replace this matmul
        # with e_pt lane-aligned slices + VPU adds (segment sum) to free MXU cycles.
        out = jnp.dot((slab * ge).astype(compute_dtype), rsum_ref[...],
                      preferred_element_type=jnp.float32)

        out_ref[...] = out.astype(out_ref.dtype)     # single lane-dense (>=128) store

    return kernel


# ----------------------------------------------------------------------------------
# One-time parameter fusion (wrapper side — would live in module init in practice)
# ----------------------------------------------------------------------------------
def fuse_cgc_params(expert_ws, expert_bs, gate_w, gate_b, *,
                    shared_num, unique_num, task_num,
                    compute_dtype=jnp.float32,
                    blockdiag_dense_max=512, force_split=None):
    num_layers = len(expert_ws)
    e_total = expert_ws[0].shape[0]
    e_pt = shared_num + unique_num
    n_slots = task_num * e_pt
    dim_out = expert_ws[-1].shape[-1]

    # slot s = j * e_pt + p  ->  physical expert used by task j at gate position p
    slot_experts = tuple(
        (p if p < shared_num else shared_num + j * unique_num + (p - shared_num))
        for j in range(task_num) for p in range(e_pt))

    w_fused, b_fused = [], []
    for l in range(num_layers):
        w, b = expert_ws[l], expert_bs[l]            # (E, d_prev, d_next), (E, 1, d_next)
        d_prev, d_next = w.shape[1], w.shape[2]
        bf = jnp.transpose(b, (1, 0, 2)).reshape(1, e_total * d_next)
        if l == 0:
            # Expert-concat: x @ W0 computes every expert's first layer at once.
            wf = jnp.transpose(w, (1, 0, 2)).reshape(d_prev, e_total * d_next)
        else:
            if force_split is None:
                split = (e_total >= 4 and d_prev % 128 == 0 and d_next % 128 == 0
                         and e_total * min(d_prev, d_next) > blockdiag_dense_max)
            else:
                split = bool(force_split)
            if split:
                wf = w                               # stacked (E,d_prev,d_next): per-expert dots
            else:
                # Dense block-diagonal: all per-expert matmuls as one matmul.
                wf = jnp.zeros((e_total * d_prev, e_total * d_next), w.dtype)
                for e in range(e_total):
                    wf = wf.at[e * d_prev:(e + 1) * d_prev,
                               e * d_next:(e + 1) * d_next].set(w[e])
        w_fused.append(wf.astype(compute_dtype))
        b_fused.append(bf.astype(jnp.float32))       # biases stay f32 (added post-matmul)

    # All task gates concatenated: x @ Wg gives logits for every (task, position).
    # TODO(synk): optionally fold wg/bg into w_fused[0]/b_fused[0] (one fewer tiny matmul).
    wg = jnp.transpose(gate_w, (1, 0, 2)).reshape(gate_w.shape[1], n_slots)
    bg = jnp.transpose(gate_b, (1, 0, 2)).reshape(1, n_slots)

    # 0/1 selection constants (exact in bf16) so the MXU does the per-task segment-sum,
    # the gate->dim_out broadcast and the per-task expert reduction.
    out_pad = _round_up(task_num * dim_out, 128)     # lane-dense output store
    q = jnp.arange(n_slots)
    rseg = (q[:, None] // e_pt == q[None, :] // e_pt)                       # (slots, slots)
    c = jnp.arange(n_slots * dim_out)
    rexp = (q[:, None] == c[None, :] // dim_out)                            # (slots, slots*D)
    o = jnp.arange(out_pad)
    rsum = (((c // (e_pt * dim_out)) * dim_out + (c % dim_out))[:, None]
            == o[None, :])                                                  # (slots*D, out_pad)

    return dict(
        w_fused=w_fused, b_fused=b_fused,
        wg=wg.astype(compute_dtype), bg=bg.astype(jnp.float32),
        rseg=rseg.astype(compute_dtype), rexp=rexp.astype(compute_dtype),
        rsum=rsum.astype(compute_dtype),
        slot_experts=slot_experts, dim_out=dim_out,
        task_num=task_num, out_pad=out_pad)


# ----------------------------------------------------------------------------------
# pallas_call wrapper
# ----------------------------------------------------------------------------------
def customized_gate_control_fused(x, params, *, compute_dtype=jnp.float32,
                                  approx_reciprocal=None, batch_block=256,
                                  vmem_budget_bytes=40 << 20):
    w_fused, b_fused = params["w_fused"], params["b_fused"]
    wg, bg = params["wg"], params["bg"]
    rseg, rexp, rsum = params["rseg"], params["rexp"], params["rsum"]
    slot_experts, dim_out = params["slot_experts"], params["dim_out"]
    task_num, out_pad = params["task_num"], params["out_pad"]

    num_layers = len(w_fused)
    batch, dim_in = x.shape
    if approx_reciprocal is None:
        approx_reciprocal = compute_dtype != jnp.float32

    # bf16 fast path: cast x once in the wrapper (halves x DMA bytes per tile).
    x_in = x.astype(compute_dtype)
    consts = [*w_fused, *b_fused, wg, bg, rseg, rexp, rsum]

    # ---- VMEM budgeting: derate the batch tile so everything fits -------------------
    const_bytes = sum(int(a.size) * a.dtype.itemsize for a in consts)
    widths = [int(b.shape[-1]) for b in b_fused] + [int(rexp.shape[-1]), out_pad]
    max_w = max(widths)
    # per row: double-buffered x/out tiles + ~4 live f32 intermediates of max width
    row_bytes = 2 * (dim_in * x_in.dtype.itemsize + out_pad * 4) + 4 * 4 * max_w
    avail = max(vmem_budget_bytes - const_bytes, 2 << 20)
    tb_cap = max(8, (avail // row_bytes) // 8 * 8)

    # >=2 grid steps when batch allows it (v7x has 2 TensorCores per chip).
    tb = min(batch_block, tb_cap, max(8, _round_up(pl.cdiv(batch, 2), 8)))
    tb = min(tb, _round_up(batch, 8))
    grid = (pl.cdiv(batch, tb),)

    # Explicit scoped-VMEM limit (v5e default is only 16 MiB; keep <= v7x's 64 MiB).
    vmem_limit = int(min(64 << 20, max(32 << 20,
                                       const_bytes + tb * row_bytes + (8 << 20))))

    kernel = make_cgc_kernel(num_layers, slot_experts, dim_out,
                             compute_dtype, approx_reciprocal)

    def build(single_buffer_consts):
        def const_spec(a):
            index_map = lambda i, _nd=a.ndim: (0,) * _nd
            if single_buffer_consts:
                # Constant index_map -> single buffer (no pipelining benefit, half VMEM).
                return pl.BlockSpec(a.shape, index_map, pipeline_mode=pl.Buffered(1))
            return pl.BlockSpec(a.shape, index_map)

        in_specs = ([pl.BlockSpec((tb, dim_in), lambda i: (i, 0))]
                    + [const_spec(a) for a in consts])
        out_specs = pl.BlockSpec((tb, out_pad), lambda i: (i, 0))
        return pl.pallas_call(
            kernel,
            grid=grid,
            out_shape=jax.ShapeDtypeStruct((batch, out_pad), jnp.float32),
            in_specs=in_specs,
            out_specs=out_specs,
            compiler_params=pltpu.CompilerParams(
                dimension_semantics=("parallel",),
                vmem_limit_bytes=vmem_limit))

    try:
        out = build(True)(x_in, *consts)
    except Exception:
        # pipeline_mode=pl.Buffered(1) not supported on this jax version -> default buffering.
        out = build(False)(x_in, *consts)

    return out[:, :task_num * dim_out]


def customized_gate_control(x, expert_ws, expert_bs, gate_w, gate_b, *,
                            shared_num, unique_num, task_num, dim_out,
                            compute_dtype=jnp.float32, approx_reciprocal=None,
                            force_split=None):
    params = fuse_cgc_params(expert_ws, expert_bs, gate_w, gate_b,
                             shared_num=shared_num, unique_num=unique_num,
                             task_num=task_num, compute_dtype=compute_dtype,
                             force_split=force_split)
    assert params["dim_out"] == dim_out
    return customized_gate_control_fused(x, params, compute_dtype=compute_dtype,
                                         approx_reciprocal=approx_reciprocal)


# ----------------------------------------------------------------------------------
# Pure-JAX reference mirroring the PyTorch forward (eval mode)
# ----------------------------------------------------------------------------------
def reference(x, expert_ws, expert_bs, gate_w, gate_b, *,
              shared_num, unique_num, task_num, dim_out):
    num_layers = len(expert_ws)
    e_total = shared_num + unique_num * task_num
    expert_outs = []
    for e in range(e_total):
        h = x
        for l in range(num_layers):
            h = jnp.maximum(h @ expert_ws[l][e] + expert_bs[l][e], 0.0)
        expert_outs.append(h)
    feats = []
    for j in range(task_num):
        logits = x @ gate_w[j] + gate_b[j]
        gate = jax.nn.softmax(logits, axis=-1)
        feat_idx = list(range(shared_num)) + [
            shared_num + j * unique_num + i for i in range(unique_num)]
        feat = jnp.stack([expert_outs[e] for e in feat_idx], axis=-1)   # (B, d, e)
        feats.append(jnp.einsum('bde,be->bd', feat, gate))
    return jnp.concatenate(feats, axis=1)


# ----------------------------------------------------------------------------------
if __name__ == "__main__":
    batch = 8
    dim_in = 32
    dim_hidden = [64, 64]      # 3 layers: exercises concat + block-diag + last-layer paths
    dim_out = 16
    shared_num = 2
    unique_num = 2
    task_num = 2

    dims = [dim_in, *dim_hidden, dim_out]
    num_layers = len(dims) - 1
    e_total = shared_num + unique_num * task_num
    e_per_task = shared_num + unique_num

    key = jax.random.PRNGKey(0)
    keys = jax.random.split(key, 2 * num_layers + 3)

    # Deterministic synthetic parameters (stacked across experts / tasks).
    expert_ws, expert_bs = [], []
    for l in range(num_layers):
        scale = 1.0 / jnp.sqrt(dims[l])
        w = jax.random.normal(keys[l], (e_total, dims[l], dims[l + 1]), jnp.float32) * scale
        b = jax.random.normal(keys[num_layers + l], (e_total, 1, dims[l + 1]), jnp.float32) * scale
        expert_ws.append(w)
        expert_bs.append(b)

    gscale = 1.0 / jnp.sqrt(dim_in)
    gate_w = jax.random.normal(keys[-3], (task_num, dim_in, e_per_task), jnp.float32) * gscale
    gate_b = jax.random.normal(keys[-2], (task_num, 1, e_per_task), jnp.float32) * gscale
    x = jax.random.normal(keys[-1], (batch, dim_in), jnp.float32)

    with jax.default_matmul_precision("highest"):
        ref = reference(x, expert_ws, expert_bs, gate_w, gate_b,
                        shared_num=shared_num, unique_num=unique_num,
                        task_num=task_num, dim_out=dim_out)

    # --- exact (fp32) path: dense fused block-diagonal middle/last layers ---
    out = jax.block_until_ready(customized_gate_control(
        x, expert_ws, expert_bs, gate_w, gate_b,
        shared_num=shared_num, unique_num=unique_num,
        task_num=task_num, dim_out=dim_out))
    assert out.shape == (batch, task_num * dim_out)
    assert jnp.allclose(out, ref, atol=1e-4, rtol=1e-4), float(jnp.max(jnp.abs(out - ref)))

    # --- fp32 path with forced per-expert (split) layers: validates the scale path ---
    out_split = jax.block_until_ready(customized_gate_control(
        x, expert_ws, expert_bs, gate_w, gate_b,
        shared_num=shared_num, unique_num=unique_num,
        task_num=task_num, dim_out=dim_out, force_split=True))
    assert jnp.allclose(out_split, ref, atol=1e-4, rtol=1e-4), float(jnp.max(jnp.abs(out_split - ref)))

    # --- bf16 fast path (bf16 MXU operands incl. selection matrices; f32 elementwise) ---
    out_fast = jax.block_until_ready(customized_gate_control(
        x, expert_ws, expert_bs, gate_w, gate_b,
        shared_num=shared_num, unique_num=unique_num,
        task_num=task_num, dim_out=dim_out, compute_dtype=jnp.bfloat16))
    assert jnp.allclose(out_fast, ref, atol=5e-2, rtol=5e-2), float(jnp.max(jnp.abs(out_fast - ref)))

    print("KERNEL_OK")
</pallas_src>

<mosaic_0001>
module attributes {stable_mosaic.version = 11 : i64} {
  func.func @kernel(%arg0: i32, %arg1: memref<8x32xf32, #tpu.memory_space<vmem>>, %arg2: memref<32x384xf32, #tpu.memory_space<vmem>>, %arg3: memref<384x384xf32, #tpu.memory_space<vmem>>, %arg4: memref<384x96xf32, #tpu.memory_space<vmem>>, %arg5: memref<1x384xf32, #tpu.memory_space<vmem>>, %arg6: memref<1x384xf32, #tpu.memory_space<vmem>>, %arg7: memref<1x96xf32, #tpu.memory_space<vmem>>, %arg8: memref<32x8xf32, #tpu.memory_space<vmem>>, %arg9: memref<1x8xf32, #tpu.memory_space<vmem>>, %arg10: memref<8x8xf32, #tpu.memory_space<vmem>>, %arg11: memref<8x128xf32, #tpu.memory_space<vmem>>, %arg12: memref<128x128xf32, #tpu.memory_space<vmem>>, %arg13: memref<8x128xf32, #tpu.memory_space<vmem>>) attributes {dimension_semantics = [#tpu.dimension_semantics<parallel>], iteration_bounds = array<i64: 1>, scalar_prefetch = 0 : i64, scratch_operands = 0 : i64, tpu.core_type = #tpu.core_type<tc>, window_params = [{transform_indices = @transform_0, window_bounds = array<i64: 8, 32>}, {pipeline_mode = #tpu.pipeline_mode<synchronous>, transform_indices = @transform_1, window_bounds = array<i64: 32, 384>}, {pipeline_mode = #tpu.pipeline_mode<synchronous>, transform_indices = @transform_2, window_bounds = array<i64: 384, 384>}, {pipeline_mode = #tpu.pipeline_mode<synchronous>, transform_indices = @transform_3, window_bounds = array<i64: 384, 96>}, {pipeline_mode = #tpu.pipeline_mode<synchronous>, transform_indices = @transform_4, window_bounds = array<i64: 1, 384>}, {pipeline_mode = #tpu.pipeline_mode<synchronous>, transform_indices = @transform_5, window_bounds = array<i64: 1, 384>}, {pipeline_mode = #tpu.pipeline_mode<synchronous>, transform_indices = @transform_6, window_bounds = array<i64: 1, 96>}, {pipeline_mode = #tpu.pipeline_mode<synchronous>, transform_indices = @transform_7, window_bounds = array<i64: 32, 8>}, {pipeline_mode = #tpu.pipeline_mode<synchronous>, transform_indices = @transform_8, window_bounds = array<i64: 1, 8>}, {pipeline_mode = #tpu.pipeline_mode<synchronous>, transform_indices = @transform_9, window_bounds = array<i64: 8, 8>}, {pipeline_mode = #tpu.pipeline_mode<synchronous>, transform_indices = @transform_10, window_bounds = array<i64: 8, 128>}, {pipeline_mode = #tpu.pipeline_mode<synchronous>, transform_indices = @transform_11, window_bounds = array<i64: 128, 128>}, {transform_indices = @transform_12, window_bounds = array<i64: 8, 128>}]} {
    %c0 = arith.constant 0 : index
    %c0_0 = arith.constant 0 : index
    %0 = vector.load %arg1[%c0, %c0_0] : memref<8x32xf32, #tpu.memory_space<vmem>>, vector<8x32xf32>
    %c0_1 = arith.constant 0 : index
    %c0_2 = arith.constant 0 : index
    %1 = vector.load %arg2[%c0_1, %c0_2] : memref<32x384xf32, #tpu.memory_space<vmem>>, vector<32x384xf32>
    %cst = arith.constant dense<0.000000e+00> : vector<8x384xf32>
    %2 = tpu.matmul %0, %1, %cst {dimension_numbers = #tpu.dot_dimension_numbers<[1], [0], [0], [1], [0, 0, 1, 1], [], []>} : vector<8x32xf32>, vector<32x384xf32>, vector<8x384xf32> -> vector<8x384xf32>
    %c0_3 = arith.constant 0 : index
    %c0_4 = arith.constant 0 : index
    %3 = vector.load %arg5[%c0_3, %c0_4] : memref<1x384xf32, #tpu.memory_space<vmem>>, vector<1x384xf32>
    %4 = vector.broadcast %3 : vector<1x384xf32> to vector<8x384xf32>
    %5 = arith.addf %2, %4 : vector<8x384xf32>
    %cst_5 = arith.constant 0.000000e+00 : f32
    %6 = vector.broadcast %cst_5 : f32 to vector<8x384xf32>
    %7 = arith.maximumf %5, %6 : vector<8x384xf32>
    %c0_6 = arith.constant 0 : index
    %c0_7 = arith.constant 0 : index
    %8 = vector.load %arg3[%c0_6, %c0_7] : memref<384x384xf32, #tpu.memory_space<vmem>>, vector<384x384xf32>
    %cst_8 = arith.constant dense<0.000000e+00> : vector<8x384xf32>
    %9 = tpu.matmul %7, %8, %cst_8 {dimension_numbers = #tpu.dot_dimension_numbers<[1], [0], [0], [1], [0, 0, 1, 1], [], []>} : vector<8x384xf32>, vector<384x384xf32>, vector<8x384xf32> -> vector<8x384xf32>
    %c0_9 = arith.constant 0 : index
    %c0_10 = arith.constant 0 : index
    %10 = vector.load %arg6[%c0_9, %c0_10] : memref<1x384xf32, #tpu.memory_space<vmem>>, vector<1x384xf32>
    %11 = vector.broadcast %10 : vector<1x384xf32> to vector<8x384xf32>
    %12 = arith.addf %9, %11 : vector<8x384xf32>
    %cst_11 = arith.constant 0.000000e+00 : f32
    %13 = vector.broadcast %cst_11 : f32 to vector<8x384xf32>
    %14 = arith.maximumf %12, %13 : vector<8x384xf32>
    %c0_12 = arith.constant 0 : index
    %c0_13 = arith.constant 0 : index
    %15 = vector.load %arg4[%c0_12, %c0_13] : memref<384x96xf32, #tpu.memory_space<vmem>>, vector<384x96xf32>
    %cst_14 = arith.constant dense<0.000000e+00> : vector<8x96xf32>
    %16 = tpu.matmul %14, %15, %cst_14 {dimension_numbers = #tpu.dot_dimension_numbers<[1], [0], [0], [1], [0, 0, 1, 1], [], []>} : vector<8x384xf32>, vector<384x96xf32>, vector<8x96xf32> -> vector<8x96xf32>
    %c0_15 = arith.constant 0 : index
    %c0_16 = arith.constant 0 : index
    %17 = vector.load %arg7[%c0_15, %c0_16] : memref<1x96xf32, #tpu.memory_space<vmem>>, vector<1x96xf32>
    %18 = vector.broadcast %17 : vector<1x96xf32> to vector<8x96xf32>
    %19 = arith.addf %16, %18 : vector<8x96xf32>
    %cst_17 = arith.constant 0.000000e+00 : f32
    %20 = vector.broadcast %cst_17 : f32 to vector<8x96xf32>
    %21 = arith.maximumf %19, %20 : vector<8x96xf32>
    %22 = vector.extract_strided_slice %21 {offsets = [0, 0], sizes = [8, 16], strides = [1, 1]} : vector<8x96xf32> to vector<8x16xf32>
    %23 = vector.extract_strided_slice %21 {offsets = [0, 16], sizes = [8, 16], strides = [1, 1]} : vector<8x96xf32> to vector<8x16xf32>
    %24 = vector.extract_strided_slice %21 {offsets = [0, 32], sizes = [8, 16], strides = [1, 1]} : vector<8x96xf32> to vector<8x16xf32>
    %25 = vector.extract_strided_slice %21 {offsets = [0, 48], sizes = [8, 16], strides = [1, 1]} : vector<8x96xf32> to vector<8x16xf32>
    %26 = vector.extract_strided_slice %21 {offsets = [0, 0], sizes = [8, 16], strides = [1, 1]} : vector<8x96xf32> to vector<8x16xf32>
    %27 = vector.extract_strided_slice %21 {offsets = [0, 16], sizes = [8, 16], strides = [1, 1]} : vector<8x96xf32> to vector<8x16xf32>
    %28 = vector.extract_strided_slice %21 {offsets = [0, 64], sizes = [8, 16], strides = [1, 1]} : vector<8x96xf32> to vector<8x16xf32>
    %29 = vector.extract_strided_slice %21 {offsets = [0, 80], sizes = [8, 16], strides = [1, 1]} : vector<8x96xf32> to vector<8x16xf32>
    %30 = tpu.concatenate %22, %23, %24, %25, %26, %27, %28, %29 in 1 : vector<8x16xf32>, vector<8x16xf32>, vector<8x16xf32>, vector<8x16xf32>, vector<8x16xf32>, vector<8x16xf32>, vector<8x16xf32>, vector<8x16xf32> -> vector<8x128xf32>
    %c0_18 = arith.constant 0 : index
    %c0_19 = arith.constant 0 : index
    %31 = vector.load %arg8[%c0_18, %c0_19] : memref<32x8xf32, #tpu.memory_space<vmem>>, vector<32x8xf32>
    %cst_20 = arith.constant dense<0.000000e+00> : vector<8x8xf32>
    %32 = tpu.matmul %0, %31, %cst_20 {dimension_numbers = #tpu.dot_dimension_numbers<[1], [0], [0], [1], [0, 0, 1, 1], [], []>} : vector<8x32xf32>, vector<32x8xf32>, vector<8x8xf32> -> vector<8x8xf32>
    %c0_21 = arith.constant 0 : index
    %c0_22 = arith.constant 0 : index
    %33 = vector.load %arg9[%c0_21, %c0_22] : memref<1x8xf32, #tpu.memory_space<vmem>>, vector<1x8xf32>
    %34 = vector.broadcast %33 : vector<1x8xf32> to vector<8x8xf32>
    %35 = arith.addf %32, %34 : vector<8x8xf32>
    %cst_23 = arith.constant dense<0xFF800000> : vector<8xf32>
    %36 = vector.multi_reduction <maximumf>, %35, %cst_23 [1] : vector<8x8xf32> to vector<8xf32>
    %37 = vector.shape_cast %36 : vector<8xf32> to vector<8x1xf32>
    %38 = vector.broadcast %37 : vector<8x1xf32> to vector<8x8xf32>
    %39 = arith.subf %35, %38 : vector<8x8xf32>
    %40 = math.exp %39 : vector<8x8xf32>
    %c0_24 = arith.constant 0 : index
    %c0_25 = arith.constant 0 : index
    %41 = vector.load %arg10[%c0_24, %c0_25] : memref<8x8xf32, #tpu.memory_space<vmem>>, vector<8x8xf32>
    %cst_26 = arith.constant dense<0.000000e+00> : vector<8x8xf32>
    %42 = tpu.matmul %40, %41, %cst_26 {dimension_numbers = #tpu.dot_dimension_numbers<[1], [0], [0], [1], [0, 0, 1, 1], [], []>} : vector<8x8xf32>, vector<8x8xf32>, vector<8x8xf32> -> vector<8x8xf32>
    %cst_27 = arith.constant 1.000000e-30 : f32
    %43 = vector.broadcast %cst_27 : f32 to vector<8x8xf32>
    %44 = arith.maximumf %42, %43 : vector<8x8xf32>
    %45 = arith.divf %40, %44 : vector<8x8xf32>
    %c0_28 = arith.constant 0 : index
    %c0_29 = arith.constant 0 : index
    %46 = vector.load %arg11[%c0_28, %c0_29] : memref<8x128xf32, #tpu.memory_space<vmem>>, vector<8x128xf32>
    %cst_30 = arith.constant dense<0.000000e+00> : vector<8x128xf32>
    %47 = tpu.matmul %45, %46, %cst_30 {dimension_numbers = #tpu.dot_dimension_numbers<[1], [0], [0], [1], [0, 0, 1, 1], [], []>} : vector<8x8xf32>, vector<8x128xf32>, vector<8x128xf32> -> vector<8x128xf32>
    %48 = arith.mulf %30, %47 : vector<8x128xf32>
    %c0_31 = arith.constant 0 : index
    %c0_32 = arith.constant 0 : index
    %49 = vector.load %arg12[%c0_31, %c0_32] : memref<128x128xf32, #tpu.memory_space<vmem>>, vector<128x128xf32>
    %cst_33 = arith.constant dense<0.000000e+00> : vector<8x128xf32>
    %50 = tpu.matmul %48, %49, %cst_33 {dimension_numbers = #tpu.dot_dimension_numbers<[1], [0], [0], [1], [0, 0, 1, 1], [], []>} : vector<8x128xf32>, vector<128x128xf32>, vector<8x128xf32> -> vector<8x128xf32>
    %c0_34 = arith.constant 0 : index
    %c0_35 = arith.constant 0 : index
    %51 = vector.load %arg13[%c0_34, %c0_35] : memref<8x128xf32, #tpu.memory_space<vmem>>, vector<8x128xf32>
    tpu.vector_store %arg13[%c0_34, %c0_35], %50 {strides = array<i32>} : memref<8x128xf32, #tpu.memory_space<vmem>>, vector<8x128xf32>,
    return
  }
  func.func @transform_0(%arg0: i32) -> (i32, i32) {
    %c0_i32 = arith.constant 0 : i32
    %c0_i32_0 = arith.constant 0 : i32
    return %arg0, %c0_i32 : i32, i32
  }
  func.func @transform_1(%arg0: i32) -> (i32, i32) {
    %c0_i32 = arith.constant 0 : i32
    %c0_i32_0 = arith.constant 0 : i32
    %c0_i32_1 = arith.constant 0 : i32
    return %c0_i32, %c0_i32_0 : i32, i32
  }
  func.func @transform_2(%arg0: i32) -> (i32, i32) {
    %c0_i32 = arith.constant 0 : i32
    %c0_i32_0 = arith.constant 0 : i32
    %c0_i32_1 = arith.constant 0 : i32
    return %c0_i32, %c0_i32_0 : i32, i32
  }
  func.func @transform_3(%arg0: i32) -> (i32, i32) {
    %c0_i32 = arith.constant 0 : i32
    %c0_i32_0 = arith.constant 0 : i32
    %c0_i32_1 = arith.constant 0 : i32
    return %c0_i32, %c0_i32_0 : i32, i32
  }
  func.func @transform_4(%arg0: i32) -> (i32, i32) {
    %c0_i32 = arith.constant 0 : i32
    %c0_i32_0 = arith.constant 0 : i32
    %c0_i32_1 = arith.constant 0 : i32
    return %c0_i32, %c0_i32_0 : i32, i32
  }
  func.func @transform_5(%arg0: i32) -> (i32, i32) {
    %c0_i32 = arith.constant 0 : i32
    %c0_i32_0 = arith.constant 0 : i32
    %c0_i32_1 = arith.constant 0 : i32
    return %c0_i32, %c0_i32_0 : i32, i32
  }
  func.func @transform_6(%arg0: i32) -> (i32, i32) {
    %c0_i32 = arith.constant 0 : i32
    %c0_i32_0 = arith.constant 0 : i32
    %c0_i32_1 = arith.constant 0 : i32
    return %c0_i32, %c0_i32_0 : i32, i32
  }
  func.func @transform_7(%arg0: i32) -> (i32, i32) {
    %c0_i32 = arith.constant 0 : i32
    %c0_i32_0 = arith.constant 0 : i32
    %c0_i32_1 = arith.constant 0 : i32
    return %c0_i32, %c0_i32_0 : i32, i32
  }
  func.func @transform_8(%arg0: i32) -> (i32, i32) {
    %c0_i32 = arith.constant 0 : i32
    %c0_i32_0 = arith.constant 0 : i32
    %c0_i32_1 = arith.constant 0 : i32
    return %c0_i32, %c0_i32_0 : i32, i32
  }
  func.func @transform_9(%arg0: i32) -> (i32, i32) {
    %c0_i32 = arith.constant 0 : i32
    %c0_i32_0 = arith.constant 0 : i32
    %c0_i32_1 = arith.constant 0 : i32
    return %c0_i32, %c0_i32_0 : i32, i32
  }
  func.func @transform_10(%arg0: i32) -> (i32, i32) {
    %c0_i32 = arith.constant 0 : i32
    %c0_i32_0 = arith.constant 0 : i32
    %c0_i32_1 = arith.constant 0 : i32
    return %c0_i32, %c0_i32_0 : i32, i32
  }
  func.func @transform_11(%arg0: i32) -> (i32, i32) {
    %c0_i32 = arith.constant 0 : i32
    %c0_i32_0 = arith.constant 0 : i32
    %c0_i32_1 = arith.constant 0 : i32
    return %c0_i32, %c0_i32_0 : i32, i32
  }
  func.func @transform_12(%arg0: i32) -> (i32, i32) {
    %c0_i32 = arith.constant 0 : i32
    %c0_i32_0 = arith.constant 0 : i32
    return %arg0, %c0_i32 : i32, i32
  }
}

module attributes {stable_mosaic.version = 11 : i64} {
  func.func @kernel(%arg0: i32, %arg1: memref<8x32xf32, #tpu.memory_space<vmem>>, %arg2: memref<32x384xf32, #tpu.memory_space<vmem>>, %arg3: memref<384x384xf32, #tpu.memory_space<vmem>>, %arg4: memref<384x96xf32, #tpu.memory_space<vmem>>, %arg5: memref<1x384xf32, #tpu.memory_space<vmem>>, %arg6: memref<1x384xf32, #tpu.memory_space<vmem>>, %arg7: memref<1x96xf32, #tpu.memory_space<vmem>>, %arg8: memref<32x8xf32, #tpu.memory_space<vmem>>, %arg9: memref<1x8xf32, #tpu.memory_space<vmem>>, %arg10: memref<8x8xf32, #tpu.memory_space<vmem>>, %arg11: memref<8x128xf32, #tpu.memory_space<vmem>>, %arg12: memref<128x128xf32, #tpu.memory_space<vmem>>, %arg13: memref<8x128xf32, #tpu.memory_space<vmem>>) attributes {dimension_semantics = [#tpu.dimension_semantics<parallel>], iteration_bounds = array<i64: 1>, scalar_prefetch = 0 : i64, scratch_operands = 0 : i64, tpu.core_type = #tpu.core_type<tc>, window_params = [{transform_indices = @transform_0, window_bounds = array<i64: 8, 32>}, {pipeline_mode = #tpu.pipeline_mode<synchronous>, transform_indices = @transform_1, window_bounds = array<i64: 32, 384>}, {pipeline_mode = #tpu.pipeline_mode<synchronous>, transform_indices = @transform_2, window_bounds = array<i64: 384, 384>}, {pipeline_mode = #tpu.pipeline_mode<synchronous>, transform_indices = @transform_3, window_bounds = array<i64: 384, 96>}, {pipeline_mode = #tpu.pipeline_mode<synchronous>, transform_indices = @transform_4, window_bounds = array<i64: 1, 384>}, {pipeline_mode = #tpu.pipeline_mode<synchronous>, transform_indices = @transform_5, window_bounds = array<i64: 1, 384>}, {pipeline_mode = #tpu.pipeline_mode<synchronous>, transform_indices = @transform_6, window_bounds = array<i64: 1, 96>}, {pipeline_mode = #tpu.pipeline_mode<synchronous>, transform_indices = @transform_7, window_bounds = array<i64: 32, 8>}, {pipeline_mode = #tpu.pipeline_mode<synchronous>, transform_indices = @transform_8, window_bounds = array<i64: 1, 8>}, {pipeline_mode = #tpu.pipeline_mode<synchronous>, transform_indices = @transform_9, window_bounds = array<i64: 8, 8>}, {pipeline_mode = #tpu.pipeline_mode<synchronous>, transform_indices = @transform_10, window_bounds = array<i64: 8, 128>}, {pipeline_mode = #tpu.pipeline_mode<synchronous>, transform_indices = @transform_11, window_bounds = array<i64: 128, 128>}, {transform_indices = @transform_12, window_bounds = array<i64: 8, 128>}]} {
    %c0 = arith.constant 0 : index
    %c0_0 = arith.constant 0 : index
    %0 = vector.load %arg1[%c0, %c0_0] : memref<8x32xf32, #tpu.memory_space<vmem>>, vector<8x32xf32>
    %c0_1 = arith.constant 0 : index
    %c0_2 = arith.constant 0 : index
    %1 = vector.load %arg2[%c0_1, %c0_2] : memref<32x384xf32, #tpu.memory_space<vmem>>, vector<32x384xf32>
    %cst = arith.constant dense<0.000000e+00> : vector<8x384xf32>
    %2 = tpu.matmul %0, %1, %cst {dimension_numbers = #tpu.dot_dimension_numbers<[1], [0], [0], [1], [0, 0, 1, 1], [], []>} : vector<8x32xf32>, vector<32x384xf32>, vector<8x384xf32> -> vector<8x384xf32>
    %c0_3 = arith.constant 0 : index
    %c0_4 = arith.constant 0 : index
    %3 = vector.load %arg5[%c0_3, %c0_4] : memref<1x384xf32, #tpu.memory_space<vmem>>, vector<1x384xf32>
    %4 = vector.broadcast %3 : vector<1x384xf32> to vector<8x384xf32>
    %5 = arith.addf %2, %4 : vector<8x384xf32>
    %cst_5 = arith.constant 0.000000e+00 : f32
    %6 = vector.broadcast %cst_5 : f32 to vector<8x384xf32>
    %7 = arith.maximumf %5, %6 : vector<8x384xf32>
    %c0_6 = arith.constant 0 : index
    %c0_7 = arith.constant 0 : index
    %8 = vector.load %arg3[%c0_6, %c0_7] : memref<384x384xf32, #tpu.memory_space<vmem>>, vector<384x384xf32>
    %cst_8 = arith.constant dense<0.000000e+00> : vector<8x384xf32>
    %9 = tpu.matmul %7, %8, %cst_8 {dimension_numbers = #tpu.dot_dimension_numbers<[1], [0], [0], [1], [0, 0, 1, 1], [], []>} : vector<8x384xf32>, vector<384x384xf32>, vector<8x384xf32> -> vector<8x384xf32>
    %c0_9 = arith.constant 0 : index
    %c0_10 = arith.constant 0 : index
    %10 = vector.load %arg6[%c0_9, %c0_10] : memref<1x384xf32, #tpu.memory_space<vmem>>, vector<1x384xf32>
    %11 = vector.broadcast %10 : vector<1x384xf32> to vector<8x384xf32>
    %12 = arith.addf %9, %11 : vector<8x384xf32>
    %cst_11 = arith.constant 0.000000e+00 : f32
    %13 = vector.broadcast %cst_11 : f32 to vector<8x384xf32>
    %14 = arith.maximumf %12, %13 : vector<8x384xf32>
    %c0_12 = arith.constant 0 : index
    %c0_13 = arith.constant 0 : index
    %15 = vector.load %arg4[%c0_12, %c0_13] : memref<384x96xf32, #tpu.memory_space<vmem>>, vector<384x96xf32>
    %cst_14 = arith.constant dense<0.000000e+00> : vector<8x96xf32>
    %16 = tpu.matmul %14, %15, %cst_14 {dimension_numbers = #tpu.dot_dimension_numbers<[1], [0], [0], [1], [0, 0, 1, 1], [], []>} : vector<8x384xf32>, vector<384x96xf32>, vector<8x96xf32> -> vector<8x96xf32>
    %c0_15 = arith.constant 0 : index
    %c0_16 = arith.constant 0 : index
    %17 = vector.load %arg7[%c0_15, %c0_16] : memref<1x96xf32, #tpu.memory_space<vmem>>, vector<1x96xf32>
    %18 = vector.broadcast %17 : vector<1x96xf32> to vector<8x96xf32>
    %19 = arith.addf %16, %18 : vector<8x96xf32>
    %cst_17 = arith.constant 0.000000e+00 : f32
    %20 = vector.broadcast %cst_17 : f32 to vector<8x96xf32>
    %21 = arith.maximumf %19, %20 : vector<8x96xf32>
    %22 = vector.extract_strided_slice %21 {offsets = [0, 0], sizes = [8, 16], strides = [1, 1]} : vector<8x96xf32> to vector<8x16xf32>
    %23 = vector.extract_strided_slice %21 {offsets = [0, 16], sizes = [8, 16], strides = [1, 1]} : vector<8x96xf32> to vector<8x16xf32>
    %24 = vector.extract_strided_slice %21 {offsets = [0, 32], sizes = [8, 16], strides = [1, 1]} : vector<8x96xf32> to vector<8x16xf32>
    %25 = vector.extract_strided_slice %21 {offsets = [0, 48], sizes = [8, 16], strides = [1, 1]} : vector<8x96xf32> to vector<8x16xf32>
    %26 = vector.extract_strided_slice %21 {offsets = [0, 0], sizes = [8, 16], strides = [1, 1]} : vector<8x96xf32> to vector<8x16xf32>
    %27 = vector.extract_strided_slice %21 {offsets = [0, 16], sizes = [8, 16], strides = [1, 1]} : vector<8x96xf32> to vector<8x16xf32>
    %28 = vector.extract_strided_slice %21 {offsets = [0, 64], sizes = [8, 16], strides = [1, 1]} : vector<8x96xf32> to vector<8x16xf32>
    %29 = vector.extract_strided_slice %21 {offsets = [0, 80], sizes = [8, 16], strides = [1, 1]} : vector<8x96xf32> to vector<8x16xf32>
    %30 = tpu.concatenate %22, %23, %24, %25, %26, %27, %28, %29 in 1 : vector<8x16xf32>, vector<8x16xf32>, vector<8x16xf32>, vector<8x16xf32>, vector<8x16xf32>, vector<8x16xf32>, vector<8x16xf32>, vector<8x16xf32> -> vector<8x128xf32>
    %c0_18 = arith.constant 0 : index
    %c0_19 = arith.constant 0 : index
    %31 = vector.load %arg8[%c0_18, %c0_19] : memref<32x8xf32, #tpu.memory_space<vmem>>, vector<32x8xf32>
    %cst_20 = arith.constant dense<0.000000e+00> : vector<8x8xf32>
    %32 = tpu.matmul %0, %31, %cst_20 {dimension_numbers = #tpu.dot_dimension_numbers<[1], [0], [0], [1], [0, 0, 1, 1], [], []>} : vector<8x32xf32>, vector<32x8xf32>, vector<8x8xf32> -> vector<8x8xf32>
    %c0_21 = arith.constant 0 : index
    %c0_22 = arith.constant 0 : index
    %33 = vector.load %arg9[%c0_21, %c0_22] : memref<1x8xf32, #tpu.memory_space<vmem>>, vector<1x8xf32>
    %34 = vector.broadcast %33 : vector<1x8xf32> to vector<8x8xf32>
    %35 = arith.addf %32, %34 : vector<8x8xf32>
    %cst_23 = arith.constant dense<0xFF800000> : vector<8xf32>
    %36 = vector.multi_reduction <maximumf>, %35, %cst_23 [1] : vector<8x8xf32> to vector<8xf32>
    %37 = vector.shape_cast %36 : vector<8xf32> to vector<8x1xf32>
    %38 = vector.broadcast %37 : vector<8x1xf32> to vector<8x8xf32>
    %39 = arith.subf %35, %38 : vector<8x8xf32>
    %40 = math.exp %39 : vector<8x8xf32>
    %c0_24 = arith.constant 0 : index
    %c0_25 = arith.constant 0 : index
    %41 = vector.load %arg10[%c0_24, %c0_25] : memref<8x8xf32, #tpu.memory_space<vmem>>, vector<8x8xf32>
    %cst_26 = arith.constant dense<0.000000e+00> : vector<8x8xf32>
    %42 = tpu.matmul %40, %41, %cst_26 {dimension_numbers = #tpu.dot_dimension_numbers<[1], [0], [0], [1], [0, 0, 1, 1], [], []>} : vector<8x8xf32>, vector<8x8xf32>, vector<8x8xf32> -> vector<8x8xf32>
    %cst_27 = arith.constant 1.000000e-30 : f32
    %43 = vector.broadcast %cst_27 : f32 to vector<8x8xf32>
    %44 = arith.maximumf %42, %43 : vector<8x8xf32>
    %45 = arith.divf %40, %44 : vector<8x8xf32>
    %c0_28 = arith.constant 0 : index
    %c0_29 = arith.constant 0 : index
    %46 = vector.load %arg11[%c0_28, %c0_29] : memref<8x128xf32, #tpu.memory_space<vmem>>, vector<8x128xf32>
    %cst_30 = arith.constant dense<0.000000e+00> : vector<8x128xf32>
    %47 = tpu.matmul %45, %46, %cst_30 {dimension_numbers = #tpu.dot_dimension_numbers<[1], [0], [0], [1], [0, 0, 1, 1], [], []>} : vector<8x8xf32>, vector<8x128xf32>, vector<8x128xf32> -> vector<8x128xf32>
    %48 = arith.mulf %30, %47 : vector<8x128xf32>
    %c0_31 = arith.constant 0 : index
    %c0_32 = arith.constant 0 : index
    %49 = vector.load %arg12[%c0_31, %c0_32] : memref<128x128xf32, #tpu.memory_space<vmem>>, vector<128x128xf32>
    %cst_33 = arith.constant dense<0.000000e+00> : vector<8x128xf32>
    %50 = tpu.matmul %48, %49, %cst_33 {dimension_numbers = #tpu.dot_dimension_numbers<[1], [0], [0], [1], [0, 0, 1, 1], [], []>} : vector<8x128xf32>, vector<128x128xf32>, vector<8x128xf32> -> vector<8x128xf32>
    %c0_34 = arith.constant 0 : index
    %c0_35 = arith.constant 0 : index
    %51 = vector.load %arg13[%c0_34, %c0_35] : memref<8x128xf32, #tpu.memory_space<vmem>>, vector<8x128xf32>
    tpu.vector_store %arg13[%c0_34, %c0_35], %50 {strides = array<i32>} : memref<8x128xf32, #tpu.memory_space<vmem>>, vector<8x128xf32>,
    return
  }
  func.func @transform_0(%arg0: i32) -> (i32, i32) {
    %c0_i32 = arith.constant 0 : i32
    %c0_i32_0 = arith.constant 0 : i32
    return %arg0, %c0_i32 : i32, i32
  }
  func.func @transform_1(%arg0: i32) -> (i32, i32) {
    %c0_i32 = arith.constant 0 : i32
    %c0_i32_0 = arith.constant 0 : i32
    %c0_i32_1 = arith.constant 0 : i32
    return %c0_i32, %c0_i32_0 : i32, i32
  }
  func.func @transform_2(%arg0: i32) -> (i32, i32) {
    %c0_i32 = arith.constant 0 : i32
    %c0_i32_0 = arith.constant 0 : i32
    %c0_i32_1 = arith.constant 0 : i32
    return %c0_i32, %c0_i32_0 : i32, i32
  }
  func.func @transform_3(%arg0: i32) -> (i32, i32) {
    %c0_i32 = arith.constant 0 : i32
    %c0_i32_0 = arith.constant 0 : i32
    %c0_i32_1 = arith.constant 0 : i32
    return %c0_i32, %c0_i32_0 : i32, i32
  }
  func.func @transform_4(%arg0: i32) -> (i32, i32) {
    %c0_i32 = arith.constant 0 : i32
    %c0_i32_0 = arith.constant 0 : i32
    %c0_i32_1 = arith.constant 0 : i32
    return %c0_i32, %c0_i32_0 : i32, i32
  }
  func.func @transform_5(%arg0: i32) -> (i32, i32) {
    %c0_i32 = arith.constant 0 : i32
    %c0_i32_0 = arith.constant 0 : i32
    %c0_i32_1 = arith.constant 0 : i32
    return %c0_i32, %c0_i32_0 : i32, i32
  }
  func.func @transform_6(%arg0: i32) -> (i32, i32) {
    %c0_i32 = arith.constant 0 : i32
    %c0_i32_0 = arith.constant 0 : i32
    %c0_i32_1 = arith.constant 0 : i32
    return %c0_i32, %c0_i32_0 : i32, i32
  }
  func.func @transform_7(%arg0: i32) -> (i32, i32) {
    %c0_i32 = arith.constant 0 : i32
    %c0_i32_0 = arith.constant 0 : i32
    %c0_i32_1 = arith.constant 0 : i32
    return %c0_i32, %c0_i32_0 : i32, i32
  }
  func.func @transform_8(%arg0: i32) -> (i32, i32) {
    %c0_i32 = arith.constant 0 : i32
    %c0_i32_0 = arith.constant 0 : i32
    %c0_i32_1 = arith.constant 0 : i32
    return %c0_i32, %c0_i32_0 : i32, i32
  }
  func.func @transform_9(%arg0: i32) -> (i32, i32) {
    %c0_i32 = arith.constant 0 : i32
    %c0_i32_0 = arith.constant 0 : i32
    %c0_i32_1 = arith.constant 0 : i32
    return %c0_i32, %c0_i32_0 : i32, i32
  }
  func.func @transform_10(%arg0: i32) -> (i32, i32) {
    %c0_i32 = arith.constant 0 : i32
    %c0_i32_0 = arith.constant 0 : i32
    %c0_i32_1 = arith.constant 0 : i32
    return %c0_i32, %c0_i32_0 : i32, i32
  }
  func.func @transform_11(%arg0: i32) -> (i32, i32) {
    %c0_i32 = arith.constant 0 : i32
    %c0_i32_0 = arith.constant 0 : i32
    %c0_i32_1 = arith.constant 0 : i32
    return %c0_i32, %c0_i32_0 : i32, i32
  }
  func.func @transform_12(%arg0: i32) -> (i32, i32) {
    %c0_i32 = arith.constant 0 : i32
    %c0_i32_0 = arith.constant 0 : i32
    return %arg0, %c0_i32 : i32, i32
  }
}

</mosaic_0001>

<llo_original>
// kernel: tpu_custom_call.1
$region0: #{tpu_custom_call.1}
  #allocation0 [shape = 'u32[]', space=smem, size = 0x4, offset = 0x4, fixed_abs, tag = 'smem constant byte address 0x4 - core index']
  #allocation1 [shape = 'u32[144,128]{1,0:T(1,128)}', space=vmem, size = 0x12000, scoped, tag = 'internal scratch']
  %s0 = inlined_call_operand.vmem [shape: f32[8,32], index: 0, kind: input, shape index: {}]
  %s1 = inlined_call_operand.vmem [shape: f32[32,384], index: 1, kind: input, shape index: {}]
  %s2 = inlined_call_operand.hbm [shape: f32[384,384], index: 2, kind: input, shape index: {}]
  %s3 = inlined_call_operand.vmem [shape: f32[384,96], index: 3, kind: input, shape index: {}]
  %s4 = inlined_call_operand.vmem [shape: f32[1,384], index: 4, kind: input, shape index: {}]
  %s5 = inlined_call_operand.vmem [shape: f32[1,384], index: 5, kind: input, shape index: {}]
  %s6 = inlined_call_operand.vmem [shape: f32[1,96], index: 6, kind: input, shape index: {}]
  %s7 = inlined_call_operand.vmem [shape: f32[32,8], index: 7, kind: input, shape index: {}]
  %s8 = inlined_call_operand.vmem [shape: f32[1,8], index: 8, kind: input, shape index: {}]
  %s9 = inlined_call_operand.vmem [shape: f32[8,8], index: 9, kind: input, shape index: {}]
  %s10 = inlined_call_operand.vmem [shape: f32[8,128], index: 10, kind: input, shape index: {}]
  %s11 = inlined_call_operand.vmem [shape: f32[128,128], index: 11, kind: input, shape index: {}]
  %s12 = inlined_call_operand.hbm [shape: f32[8,128], index: 12, kind: output, shape index: {}]
  %s13 = sld [smem:[#allocation0]]
  $region62: #{tpu_custom_call.1} parent=0
    _
  %s15 = ssub.s32 1, %s13
  %s16 = scalar_select 0, %s15, %s13
  $region1: #{tpu_custom_call.1} parent=0
    #allocation2 [shape = 'u8[589824]{0}', space=vmem, size = 0x90000, scoped, tag = 'input window, operand 2, single buffered']
    #allocation3 [shape = 's32[1]{0}', space=sflag, size = 0x4, scoped, tag = 'scoped memory for tpu_custom_call.1']
    #allocation4 [shape = 's32[1]{0}', space=sflag, size = 0x4, scoped, tag = 'scoped memory for tpu_custom_call.1']
    #allocation5 [shape = 'u8[4096]{0}', space=vmem, size = 0x1000, scoped, tag = 'output window, operand 0, single buffered']
    %17 = vsyncpa [#allocation3], 0
    %18 = vsyncpa [#allocation4], 0
    // Predicated region
    $region2: #{tpu_custom_call.1} parent=1 // pred_check
      _
    $region3: #{tpu_custom_call.1} parent=1 // pred_check_branch
      %20 = sbr.rel (0) target = $region5
    $region4: #{tpu_custom_call.1} parent=1 // pred_region
      _
    $region5: #{tpu_custom_call.1} parent=1 // pred_fallthru
      _
    // Predicated region
    $region6: #{tpu_custom_call.1} parent=1 // pred_check
      _
    $region7: #{tpu_custom_call.1} parent=1 // pred_check_branch
      %22 = sbr.rel (0) target = $region9
    $region8: #{tpu_custom_call.1} parent=1 // pred_region
      _
    $region9: #{tpu_custom_call.1} parent=1 // pred_fallthru
      _
    // Predicated region
    $region10: #{tpu_custom_call.1} parent=1 // pred_check
      _
    $region11: #{tpu_custom_call.1} parent=1 // pred_check_branch
      %24 = sbr.rel (0) target = $region13
    $region12: #{tpu_custom_call.1} parent=1 // pred_region
      %s26 = ssub.s32 18432, 18432
      %27 = vsyncadd [#allocation3], %s26
      %s28 = sshll.u32 [#allocation2], 4
      %s29 = int_to_ptr.vmem [resolvable:$true] %s28
      %34 = dma.hbm_to_vmem [thread:$0]  %s2, 18432, %s29, [#allocation3], 384, 384, 24
    $region13: #{tpu_custom_call.1} parent=1 // pred_fallthru
      _
    // Predicated region
    $region14: #{tpu_custom_call.1} parent=1 // pred_check
      _
    $region15: #{tpu_custom_call.1} parent=1 // pred_check_branch
      %36 = sbr.rel (0) target = $region17
    $region16: #{tpu_custom_call.1} parent=1 // pred_region
      _
    $region17: #{tpu_custom_call.1} parent=1 // pred_fallthru
      _
    // Predicated region
    $region18: #{tpu_custom_call.1} parent=1 // pred_check
      _
    $region19: #{tpu_custom_call.1} parent=1 // pred_check_branch
      %38 = sbr.rel (0) target = $region21
    $region20: #{tpu_custom_call.1} parent=1 // pred_region
      _
    $region21: #{tpu_custom_call.1} parent=1 // pred_fallthru
      _
    // Predicated region
    $region22: #{tpu_custom_call.1} parent=1 // pred_check
      _
    $region23: #{tpu_custom_call.1} parent=1 // pred_check_branch
      %40 = sbr.rel (0) target = $region25
    $region24: #{tpu_custom_call.1} parent=1 // pred_region
      _
    $region25: #{tpu_custom_call.1} parent=1 // pred_fallthru
      _
    // Predicated region
    $region26: #{tpu_custom_call.1} parent=1 // pred_check
      _
    $region27: #{tpu_custom_call.1} parent=1 // pred_check_branch
      %42 = sbr.rel (0) target = $region29
    $region28: #{tpu_custom_call.1} parent=1 // pred_region
      _
    $region29: #{tpu_custom_call.1} parent=1 // pred_fallthru
      _
    // Predicated region
    $region30: #{tpu_custom_call.1} parent=1 // pred_check
      _
    $region31: #{tpu_custom_call.1} parent=1 // pred_check_branch
      %44 = sbr.rel (0) target = $region33
    $region32: #{tpu_custom_call.1} parent=1 // pred_region
      _
    $region33: #{tpu_custom_call.1} parent=1 // pred_fallthru
      _
    // Predicated region
    $region34: #{tpu_custom_call.1} parent=1 // pred_check
      _
    $region35: #{tpu_custom_call.1} parent=1 // pred_check_branch
      %46 = sbr.rel (0) target = $region37
    $region36: #{tpu_custom_call.1} parent=1 // pred_region
      _
    $region37: #{tpu_custom_call.1} parent=1 // pred_fallthru
      _
    // Predicated region
    $region38: #{tpu_custom_call.1} parent=1 // pred_check
      _
    $region39: #{tpu_custom_call.1} parent=1 // pred_check_branch
      %48 = sbr.rel (0) target = $region41
    $region40: #{tpu_custom_call.1} parent=1 // pred_region
      _
    $region41: #{tpu_custom_call.1} parent=1 // pred_fallthru
      _
    // Predicated region
    $region42: #{tpu_custom_call.1} parent=1 // pred_check
      _
    $region43: #{tpu_custom_call.1} parent=1 // pred_check_branch
      %50 = sbr.rel (0) target = $region45
    $region44: #{tpu_custom_call.1} parent=1 // pred_region
      _
    $region45: #{tpu_custom_call.1} parent=1 // pred_fallthru
      _
    // Predicated region
    $region46: #{tpu_custom_call.1} parent=1 // pred_check
      _
    $region47: #{tpu_custom_call.1} parent=1 // pred_check_branch
      %52 = sbr.rel (0) target = $region49
    $region48: #{tpu_custom_call.1} parent=1 // pred_region
      _
    $region49: #{tpu_custom_call.1} parent=1 // pred_fallthru
      _
    // Predicated region
    $region50: #{tpu_custom_call.1} parent=1 // pred_check
      _
    $region51: #{tpu_custom_call.1} parent=1 // pred_check_branch
      %54 = sbr.rel (0) target = $region53
    $region52: #{tpu_custom_call.1} parent=1 // pred_region
      %55 = dma.done [#allocation3], 18432
    $region53: #{tpu_custom_call.1} parent=1 // pred_fallthru
      _
    %v56 = vld [vmem:[%s0] sm:$0xff]
    %v57 = vld [vmem:[%s1] sm:$0xff]
    %v58 = vld [vmem:[%s1 + $0x8] sm:$0xff]
    %v59 = vld [vmem:[%s1 + $0x10] sm:$0xff]
    %v60 = vld [vmem:[%s1 + $0x18] sm:$0xff]
    %v61 = vld [vmem:[%s1 + $0x20] sm:$0xff]
    %v62 = vld [vmem:[%s1 + $0x28] sm:$0xff]
    %v63 = vld [vmem:[%s1 + $0x30] sm:$0xff]
    %v64 = vld [vmem:[%s1 + $0x38] sm:$0xff]
    %v65 = vld [vmem:[%s1 + $0x40] sm:$0xff]
    %v66 = vld [vmem:[%s1 + $0x48] sm:$0xff]
    %v67 = vld [vmem:[%s1 + $0x50] sm:$0xff]
    %v68 = vld [vmem:[%s1 + $0x58] sm:$0xff]
    %v69 = vld [vmem:[%s4] sm:$0x7]
    %v71 = vlaneseq
    %v72 = vshrl.u32 %v71, 7
    %v73 = vsub.s32 0, %v72
    %v74 = vrot.slane %v69, %v73
    %v75 = vlaneseq
    %v76 = vshrl.u32 %v75, 7
    %v77 = vsub.s32 1, %v76
    %v78 = vrot.slane %v69, %v77
    %v79 = vlaneseq
    %v80 = vshrl.u32 %v79, 7
    %v81 = vsub.s32 2, %v80
    %v82 = vrot.slane %v69, %v81
    %vm86 = vcmask 261120
    %v88 = vsel %vm86, %v56, 0
    %90 = vmatprep.subr.mxu0 0.0
    %91 = vmatpush1.msra.mxu0 0.0
    %92 = vmatprep.subr.mxu0 0.0
    %93 = vmatpush1.msra.mxu0 0.0
    %94 = vmatprep.subr.mxu0 0.0
    %95 = vmatpush1.msra.mxu0 0.0
    %96 = vmatprep.subr.mxu0 0.0
    %97 = vmatpush1.msra.mxu0 0.0
    %98 = vmatprep.subr.mxu0 0.0
    %99 = vmatpush1.msra.mxu0 0.0
    %100 = vmatprep.subr.mxu0 0.0
    %101 = vmatpush1.msra.mxu0 0.0
    %102 = vmatprep.subr.mxu0 0.0
    %103 = vmatpush1.msra.mxu0 0.0
    %104 = vmatprep.subr.mxu0 0.0
    %105 = vmatpush1.msra.mxu0 0.0
    %106 = vmatprep.subr.mxu0 0.0
    %107 = vmatpush1.msra.mxu0 0.0
    %108 = vmatprep.subr.mxu0 0.0
    %109 = vmatpush1.msra.mxu0 0.0
    %110 = vmatprep.subr.mxu0 0.0
    %111 = vmatpush1.msra.mxu0 0.0
    %112 = vmatprep.subr.mxu0 0.0
    %113 = vmatpush1.msra.mxu0 0.0
    %114 = vmatprep.subr.mxu0 %v67
    %115 = vmatpush1.msra.mxu0 %v66
    %116 = vmatprep.subr.mxu0 %v64
    %117 = vmatpush1.msra.mxu0 %v63
    %118 = vmatprep.subr.mxu0 %v61
    %119 = vmatpush1.msra.mxu0 %v60
    %120 = vmatprep.subr.mxu0 %v58
    %121 = vmatpush1.msra.mxu0 %v57
    %122 = vmatprep.subr.mxu0 0.0
    %123 = vmatpush2.msra.mxu0 0.0
    %124 = vmatprep.subr.mxu0 0.0
    %125 = vmatpush2.msra.mxu0 0.0
    %126 = vmatprep.subr.mxu0 0.0
    %127 = vmatpush2.msra.mxu0 0.0
    %128 = vmatprep.subr.mxu0 0.0
    %129 = vmatpush2.msra.mxu0 0.0
    %130 = vmatprep.subr.mxu0 0.0
    %131 = vmatpush2.msra.mxu0 0.0
    %132 = vmatprep.subr.mxu0 0.0
    %133 = vmatpush2.msra.mxu0 0.0
    %134 = vmatprep.subr.mxu0 0.0
    %135 = vmatpush2.msra.mxu0 0.0
    %136 = vmatprep.subr.mxu0 0.0
    %137 = vmatpush2.msra.mxu0 0.0
    %138 = vmatprep.subr.mxu0 0.0
    %139 = vmatpush2.msra.mxu0 0.0
    %140 = vmatprep.subr.mxu0 0.0
    %141 = vmatpush2.msra.mxu0 0.0
    %142 = vmatprep.subr.mxu0 0.0
    %143 = vmatpush2.msra.mxu0 0.0
    %144 = vmatprep.subr.mxu0 0.0
    %145 = vmatpush2.msra.mxu0 0.0
    %146 = vmatprep.subr.mxu0 0.0
    %147 = vmatpush2.msra.mxu0 0.0
    %148 = vmatprep.subr.mxu0 0.0
    %149 = vmatpush2.msra.mxu0 0.0
    %150 = vmatprep.subr.mxu0 0.0
    %151 = vmatpush2.msra.mxu0 0.0
    %152 = vmatprep.subr.mxu0 0.0
    %153 = vmatpush2.msra.mxu0 0.0
    %154 = vmatprep.mubr.f32.mxu0 0.0
    %155 = vmatmul.mubr.f32.gmra.mxu0 %v88
    %v156 = vpop.f32.mrf.mxu0
    %v157 = vadd.f32 %v74, %v156
    %v158 = vpop.f32.mrf.mxu0
    %v159 = vadd.f32 %v78, %v158
    %160 = vdwg.mxu0
    %161 = vmatprep.subr.mxu0 0.0
    %162 = vmatpush1.msra.mxu0 0.0
    %163 = vmatprep.subr.mxu0 0.0
    %164 = vmatpush1.msra.mxu0 0.0
    %165 = vmatprep.subr.mxu0 0.0
    %166 = vmatpush1.msra.mxu0 0.0
    %167 = vmatprep.subr.mxu0 0.0
    %168 = vmatpush1.msra.mxu0 0.0
    %169 = vmatprep.subr.mxu0 0.0
    %170 = vmatpush1.msra.mxu0 0.0
    %171 = vmatprep.subr.mxu0 0.0
    %172 = vmatpush1.msra.mxu0 0.0
    %173 = vmatprep.subr.mxu0 0.0
    %174 = vmatpush1.msra.mxu0 0.0
    %175 = vmatprep.subr.mxu0 0.0
    %176 = vmatpush1.msra.mxu0 0.0
    %177 = vmatprep.subr.mxu0 0.0
    %178 = vmatpush1.msra.mxu0 0.0
    %179 = vmatprep.subr.mxu0 0.0
    %180 = vmatpush1.msra.mxu0 0.0
    %181 = vmatprep.subr.mxu0 0.0
    %182 = vmatpush1.msra.mxu0 0.0
    %183 = vmatprep.subr.mxu0 0.0
    %184 = vmatpush1.msra.mxu0 0.0
    %185 = vmatprep.subr.mxu0 0.0
    %186 = vmatpush1.msra.mxu0 %v68
    %187 = vmatprep.subr.mxu0 0.0
    %188 = vmatpush1.msra.mxu0 %v65
    %189 = vmatprep.subr.mxu0 0.0
    %190 = vmatpush1.msra.mxu0 %v62
    %191 = vmatprep.subr.mxu0 0.0
    %192 = vmatpush1.msra.mxu0 %v59
    %193 = vmatprep.subr.mxu0 0.0
    %194 = vmatpush2.msra.mxu0 0.0
    %195 = vmatprep.subr.mxu0 0.0
    %196 = vmatpush2.msra.mxu0 0.0
    %197 = vmatprep.subr.mxu0 0.0
    %198 = vmatpush2.msra.mxu0 0.0
    %199 = vmatprep.subr.mxu0 0.0
    %200 = vmatpush2.msra.mxu0 0.0
    %201 = vmatprep.subr.mxu0 0.0
    %202 = vmatpush2.msra.mxu0 0.0
    %203 = vmatprep.subr.mxu0 0.0
    %204 = vmatpush2.msra.mxu0 0.0
    %205 = vmatprep.subr.mxu0 0.0
    %206 = vmatpush2.msra.mxu0 0.0
    %207 = vmatprep.subr.mxu0 0.0
    %208 = vmatpush2.msra.mxu0 0.0
    %209 = vmatprep.subr.mxu0 0.0
    %210 = vmatpush2.msra.mxu0 0.0
    %211 = vmatprep.subr.mxu0 0.0
    %212 = vmatpush2.msra.mxu0 0.0
    %213 = vmatprep.subr.mxu0 0.0
    %214 = vmatpush2.msra.mxu0 0.0
    %215 = vmatprep.subr.mxu0 0.0
    %216 = vmatpush2.msra.mxu0 0.0
    %217 = vmatprep.subr.mxu0 0.0
    %218 = vmatpush2.msra.mxu0 0.0
    %219 = vmatprep.subr.mxu0 0.0
    %220 = vmatpush2.msra.mxu0 0.0
    %221 = vmatprep.subr.mxu0 0.0
    %222 = vmatpush2.msra.mxu0 0.0
    %223 = vmatprep.subr.mxu0 0.0
    %224 = vmatpush2.msra.mxu0 0.0
    %225 = vmatprep.mubr.f32.mxu0 0.0
    %226 = vmatmul.mubr.f32.gmra.mxu0 %v88
    %v227 = vpop.f32.mrf.mxu0
    %v228 = vadd.f32 %v82, %v227
    %v229 = vpop.f32.mrf.mxu0
    %230 = vdwg.mxu0
    %v231 = vmax.f32 %v157, 0.0
    %v232 = vmax.f32 %v159, 0.0
    %v233 = vmax.f32 %v228, 0.0
    %v234 = vld [vmem:[#allocation2] sm:$0xff]
    %v235 = vld [vmem:[#allocation2 + $0x8] sm:$0xff]
    %v236 = vld [vmem:[#allocation2 + $0x10] sm:$0xff]
    %v237 = vld [vmem:[#allocation2 + $0x18] sm:$0xff]
    %v238 = vld [vmem:[#allocation2 + $0x20] sm:$0xff]
    %v239 = vld [vmem:[#allocation2 + $0x28] sm:$0xff]
    %v240 = vld [vmem:[#allocation2 + $0x30] sm:$0xff]
    %v241 = vld [vmem:[#allocation2 + $0x38] sm:$0xff]
    %v242 = vld [vmem:[#allocation2 + $0x40] sm:$0xff]
    %v243 = vld [vmem:[#allocation2 + $0x48] sm:$0xff]
    %v244 = vld [vmem:[#allocation2 + $0x50] sm:$0xff]
    %v245 = vld [vmem:[#allocation2 + $0x58] sm:$0xff]
    %v246 = vld [vmem:[#allocation2 + $0x60] sm:$0xff]
    %v247 = vld [vmem:[#allocation2 + $0x68] sm:$0xff]
    %v248 = vld [vmem:[#allocation2 + $0x70] sm:$0xff]
    %v249 = vld [vmem:[#allocation2 + $0x78] sm:$0xff]
    %v250 = vld [vmem:[#allocation2 + $0x80] sm:$0xff]
    %v251 = vld [vmem:[#allocation2 + $0x88] sm:$0xff]
    %v252 = vld [vmem:[#allocation2 + $0x90] sm:$0xff]
    %v253 = vld [vmem:[#allocation2 + $0x98] sm:$0xff]
    %v254 = vld [vmem:[#allocation2 + $0xa0] sm:$0xff]
    %v255 = vld [vmem:[#allocation2 + $0xa8] sm:$0xff]
    %v256 = vld [vmem:[#allocation2 + $0xb0] sm:$0xff]
    %v257 = vld [vmem:[#allocation2 + $0xb8] sm:$0xff]
    %v258 = vld [vmem:[#allocation2 + $0xc0] sm:$0xff]
    %v259 = vld [vmem:[#allocation2 + $0xc8] sm:$0xff]
    %v260 = vld [vmem:[#allocation2 + $0xd0] sm:$0xff]
    %v261 = vld [vmem:[#allocation2 + $0xd8] sm:$0xff]
    %v262 = vld [vmem:[#allocation2 + $0xe0] sm:$0xff]
    %v263 = vld [vmem:[#allocation2 + $0xe8] sm:$0xff]
    %v264 = vld [vmem:[#allocation2 + $0xf0] sm:$0xff]
    %v265 = vld [vmem:[#allocation2 + $0xf8] sm:$0xff]
    %v266 = vld [vmem:[#allocation2 + $0x100] sm:$0xff]
    %v267 = vld [vmem:[#allocation2 + $0x108] sm:$0xff]
    %v268 = vld [vmem:[#allocation2 + $0x110] sm:$0xff]
    %v269 = vld [vmem:[#allocation2 + $0x118] sm:$0xff]
    %v270 = vld [vmem:[#allocation2 + $0x120] sm:$0xff]
    %v271 = vld [vmem:[#allocation2 + $0x128] sm:$0xff]
    %v272 = vld [vmem:[#allocation2 + $0x130] sm:$0xff]
    %v273 = vld [vmem:[#allocation2 + $0x138] sm:$0xff]
    %v274 = vld [vmem:[#allocation2 + $0x140] sm:$0xff]
    %v275 = vld [vmem:[#allocation2 + $0x148] sm:$0xff]
    %v276 = vld [vmem:[#allocation2 + $0x150] sm:$0xff]
    %v277 = vld [vmem:[#allocation2 + $0x158] sm:$0xff]
    %v278 = vld [vmem:[#allocation2 + $0x160] sm:$0xff]
    %v279 = vld [vmem:[#allocation2 + $0x168] sm:$0xff]
    %v280 = vld [vmem:[#allocation2 + $0x170] sm:$0xff]
    %v281 = vld [vmem:[#allocation2 + $0x178] sm:$0xff]
    %v282 = vld [vmem:[#allocation2 + $0x180] sm:$0xff]
    %v283 = vld [vmem:[#allocation2 + $0x188] sm:$0xff]
    %v284 = vld [vmem:[#allocation2 + $0x190] sm:$0xff]
    %v285 = vld [vmem:[#allocation2 + $0x198] sm:$0xff]
    %v286 = vld [vmem:[#allocation2 + $0x1a0] sm:$0xff]
    %v287 = vld [vmem:[#allocation2 + $0x1a8] sm:$0xff]
    %v288 = vld [vmem:[#allocation2 + $0x1b0] sm:$0xff]
    %v289 = vld [vmem:[#allocation2 + $0x1b8] sm:$0xff]
    %v290 = vld [vmem:[#allocation2 + $0x1c0] sm:$0xff]
    %v291 = vld [vmem:[#allocation2 + $0x1c8] sm:$0xff]
    %v292 = vld [vmem:[#allocation2 + $0x1d0] sm:$0xff]
    %v293 = vld [vmem:[#allocation2 + $0x1d8] sm:$0xff]
    %v294 = vld [vmem:[#allocation2 + $0x1e0] sm:$0xff]
    %v295 = vld [vmem:[#allocation2 + $0x1e8] sm:$0xff]
    %v296 = vld [vmem:[#allocation2 + $0x1f0] sm:$0xff]
    %v297 = vld [vmem:[#allocation2 + $0x1f8] sm:$0xff]
    %v298 = vld [vmem:[#allocation2 + $0x200] sm:$0xff]
    %v299 = vld [vmem:[#allocation2 + $0x208] sm:$0xff]
    %v300 = vld [vmem:[#allocation2 + $0x210] sm:$0xff]
    %v301 = vld [vmem:[#allocation2 + $0x218] sm:$0xff]
    %v302 = vld [vmem:[#allocation2 + $0x220] sm:$0xff]
    %v303 = vld [vmem:[#allocation2 + $0x228] sm:$0xff]
    %v304 = vld [vmem:[#allocation2 + $0x230] sm:$0xff]
    %v305 = vld [vmem:[#allocation2 + $0x238] sm:$0xff]
    %v306 = vld [vmem:[#allocation2 + $0x240] sm:$0xff]
    %v307 = vld [vmem:[#allocation2 + $0x248] sm:$0xff]
    %v308 = vld [vmem:[#allocation2 + $0x250] sm:$0xff]
    %v309 = vld [vmem:[#allocation2 + $0x258] sm:$0xff]
    %v310 = vld [vmem:[#allocation2 + $0x260] sm:$0xff]
    %v311 = vld [vmem:[#allocation2 + $0x268] sm:$0xff]
    %v312 = vld [vmem:[#allocation2 + $0x270] sm:$0xff]
    %v313 = vld [vmem:[#allocation2 + $0x278] sm:$0xff]
    %v314 = vld [vmem:[#allocation2 + $0x280] sm:$0xff]
    %v315 = vld [vmem:[#allocation2 + $0x288] sm:$0xff]
    %v316 = vld [vmem:[#allocation2 + $0x290] sm:$0xff]
    %v317 = vld [vmem:[#allocation2 + $0x298] sm:$0xff]
    %v318 = vld [vmem:[#allocation2 + $0x2a0] sm:$0xff]
    %v319 = vld [vmem:[#allocation2 + $0x2a8] sm:$0xff]
    %v320 = vld [vmem:[#allocation2 + $0x2b0] sm:$0xff]
    %v321 = vld [vmem:[#allocation2 + $0x2b8] sm:$0xff]
    %v322 = vld [vmem:[#allocation2 + $0x2c0] sm:$0xff]
    %v323 = vld [vmem:[#allocation2 + $0x2c8] sm:$0xff]
    %v324 = vld [vmem:[#allocation2 + $0x2d0] sm:$0xff]
    %v325 = vld [vmem:[#allocation2 + $0x2d8] sm:$0xff]
    %v326 = vld [vmem:[#allocation2 + $0x2e0] sm:$0xff]
    %v327 = vld [vmem:[#allocation2 + $0x2e8] sm:$0xff]
    %v328 = vld [vmem:[#allocation2 + $0x2f0] sm:$0xff]
    %v329 = vld [vmem:[#allocation2 + $0x2f8] sm:$0xff]
    %v330 = vld [vmem:[#allocation2 + $0x300] sm:$0xff]
    %v331 = vld [vmem:[#allocation2 + $0x308] sm:$0xff]
    %v332 = vld [vmem:[#allocation2 + $0x310] sm:$0xff]
    %v333 = vld [vmem:[#allocation2 + $0x318] sm:$0xff]
    %v334 = vld [vmem:[#allocation2 + $0x320] sm:$0xff]
    %v335 = vld [vmem:[#allocation2 + $0x328] sm:$0xff]
    %v336 = vld [vmem:[#allocation2 + $0x330] sm:$0xff]
    %v337 = vld [vmem:[#allocation2 + $0x338] sm:$0xff]
    %v338 = vld [vmem:[#allocation2 + $0x340] sm:$0xff]
    %v339 = vld [vmem:[#allocation2 + $0x348] sm:$0xff]
    %v340 = vld [vmem:[#allocation2 + $0x350] sm:$0xff]
    %v341 = vld [vmem:[#allocation2 + $0x358] sm:$0xff]
    %v342 = vld [vmem:[#allocation2 + $0x360] sm:$0xff]
    %v343 = vld [vmem:[#allocation2 + $0x368] sm:$0xff]
    %v344 = vld [vmem:[#allocation2 + $0x370] sm:$0xff]
    %v345 = vld [vmem:[#allocation2 + $0x378] sm:$0xff]
    %v346 = vld [vmem:[#allocation2 + $0x380] sm:$0xff]
    %v347 = vld [vmem:[#allocation2 + $0x388] sm:$0xff]
    %v348 = vld [vmem:[#allocation2 + $0x390] sm:$0xff]
    %v349 = vld [vmem:[#allocation2 + $0x398] sm:$0xff]
    %v350 = vld [vmem:[#allocation2 + $0x3a0] sm:$0xff]
    %v351 = vld [vmem:[#allocation2 + $0x3a8] sm:$0xff]
    %v352 = vld [vmem:[#allocation2 + $0x3b0] sm:$0xff]
    %v353 = vld [vmem:[#allocation2 + $0x3b8] sm:$0xff]
    %v354 = vld [vmem:[#allocation2 + $0x3c0] sm:$0xff]
    %v355 = vld [vmem:[#allocation2 + $0x3c8] sm:$0xff]
    %v356 = vld [vmem:[#allocation2 + $0x3d0] sm:$0xff]
    %v357 = vld [vmem:[#allocation2 + $0x3d8] sm:$0xff]
    %v358 = vld [vmem:[#allocation2 + $0x3e0] sm:$0xff]
    %v359 = vld [vmem:[#allocation2 + $0x3e8] sm:$0xff]
    %v360 = vld [vmem:[#allocation2 + $0x3f0] sm:$0xff]
    %v361 = vld [vmem:[#allocation2 + $0x3f8] sm:$0xff]
    %v362 = vld [vmem:[#allocation2 + $0x400] sm:$0xff]
    %v363 = vld [vmem:[#allocation2 + $0x408] sm:$0xff]
    %v364 = vld [vmem:[#allocation2 + $0x410] sm:$0xff]
    %v365 = vld [vmem:[#allocation2 + $0x418] sm:$0xff]
    %v366 = vld [vmem:[#allocation2 + $0x420] sm:$0xff]
    %v367 = vld [vmem:[#allocation2 + $0x428] sm:$0xff]
    %v368 = vld [vmem:[#allocation2 + $0x430] sm:$0xff]
    %v369 = vld [vmem:[#allocation2 + $0x438] sm:$0xff]
    %v370 = vld [vmem:[#allocation2 + $0x440] sm:$0xff]
    %v371 = vld [vmem:[#allocation2 + $0x448] sm:$0xff]
    %v372 = vld [vmem:[#allocation2 + $0x450] sm:$0xff]
    %v373 = vld [vmem:[#allocation2 + $0x458] sm:$0xff]
    %v374 = vld [vmem:[#allocation2 + $0x460] sm:$0xff]
    %v375 = vld [vmem:[#allocation2 + $0x468] sm:$0xff]
    %v376 = vld [vmem:[#allocation2 + $0x470] sm:$0xff]
    %v377 = vld [vmem:[#allocation2 + $0x478] sm:$0xff]
    %v378 = vld [vmem:[%s5] sm:$0x7]
    %v380 = vlaneseq
    %v381 = vshrl.u32 %v380, 7
    %v382 = vsub.s32 0, %v381
    %v383 = vrot.slane %v378, %v382
    %v384 = vlaneseq
    %v385 = vshrl.u32 %v384, 7
    %v386 = vsub.s32 1, %v385
    %v387 = vrot.slane %v378, %v386
    %v388 = vlaneseq
    %v389 = vshrl.u32 %v388, 7
    %v390 = vsub.s32 2, %v389
    %v391 = vrot.slane %v378, %v390
    %395 = vmatprep.subr.mxu0 %v280
    %396 = vmatpush1.msra.mxu0 %v279
    %397 = vmatprep.subr.mxu0 %v277
    %398 = vmatpush1.msra.mxu0 %v276
    %399 = vmatprep.subr.mxu0 %v274
    %400 = vmatpush1.msra.mxu0 %v273
    %401 = vmatprep.subr.mxu0 %v271
    %402 = vmatpush1.msra.mxu0 %v270
    %403 = vmatprep.subr.mxu0 %v268
    %404 = vmatpush1.msra.mxu0 %v267
    %405 = vmatprep.subr.mxu0 %v265
    %406 = vmatpush1.msra.mxu0 %v264
    %407 = vmatprep.subr.mxu0 %v262
    %408 = vmatpush1.msra.mxu0 %v261
    %409 = vmatprep.subr.mxu0 %v259
    %410 = vmatpush1.msra.mxu0 %v258
    %411 = vmatprep.subr.mxu0 %v256
    %412 = vmatpush1.msra.mxu0 %v255
    %413 = vmatprep.subr.mxu0 %v253
    %414 = vmatpush1.msra.mxu0 %v252
    %415 = vmatprep.subr.mxu0 %v250
    %416 = vmatpush1.msra.mxu0 %v249
    %417 = vmatprep.subr.mxu0 %v247
    %418 = vmatpush1.msra.mxu0 %v246
    %419 = vmatprep.subr.mxu0 %v244
    %420 = vmatpush1.msra.mxu0 %v243
    %421 = vmatprep.subr.mxu0 %v241
    %422 = vmatpush1.msra.mxu0 %v240
    %423 = vmatprep.subr.mxu0 %v238
    %424 = vmatpush1.msra.mxu0 %v237
    %425 = vmatprep.subr.mxu0 %v235
    %426 = vmatpush1.msra.mxu0 %v234
    %427 = vmatprep.subr.mxu0 %v328
    %428 = vmatpush2.msra.mxu0 %v327
    %429 = vmatprep.subr.mxu0 %v325
    %430 = vmatpush2.msra.mxu0 %v324
    %431 = vmatprep.subr.mxu0 %v322
    %432 = vmatpush2.msra.mxu0 %v321
    %433 = vmatprep.subr.mxu0 %v319
    %434 = vmatpush2.msra.mxu0 %v318
    %435 = vmatprep.subr.mxu0 %v316
    %436 = vmatpush2.msra.mxu0 %v315
    %437 = vmatprep.subr.mxu0 %v313
    %438 = vmatpush2.msra.mxu0 %v312
    %439 = vmatprep.subr.mxu0 %v310
    %440 = vmatpush2.msra.mxu0 %v309
    %441 = vmatprep.subr.mxu0 %v307
    %442 = vmatpush2.msra.mxu0 %v306
    %443 = vmatprep.subr.mxu0 %v304
    %444 = vmatpush2.msra.mxu0 %v303
    %445 = vmatprep.subr.mxu0 %v301
    %446 = vmatpush2.msra.mxu0 %v300
    %447 = vmatprep.subr.mxu0 %v298
    %448 = vmatpush2.msra.mxu0 %v297
    %449 = vmatprep.subr.mxu0 %v295
    %450 = vmatpush2.msra.mxu0 %v294
    %451 = vmatprep.subr.mxu0 %v292
    %452 = vmatpush2.msra.mxu0 %v291
    %453 = vmatprep.subr.mxu0 %v289
    %454 = vmatpush2.msra.mxu0 %v288
    %455 = vmatprep.subr.mxu0 %v286
    %456 = vmatpush2.msra.mxu0 %v285
    %457 = vmatprep.subr.mxu0 %v283
    %458 = vmatpush2.msra.mxu0 %v282
    %459 = vmatprep.mubr.f32.mxu0 %v232
    %460 = vmatmul.mubr.f32.gmra.mxu0 %v231
    %v461 = vpop.f32.mrf.mxu0
    %v462 = vadd.f32 %v383, %v461
    %v463 = vpop.f32.mrf.mxu0
    %v464 = vadd.f32 %v387, %v463
    %465 = vdwg.mxu0
    %466 = vmatprep.subr.mxu0 %v376
    %467 = vmatpush1.msra.mxu0 %v375
    %468 = vmatprep.subr.mxu0 %v373
    %469 = vmatpush1.msra.mxu0 %v372
    %470 = vmatprep.subr.mxu0 %v370
    %471 = vmatpush1.msra.mxu0 %v369
    %472 = vmatprep.subr.mxu0 %v367
    %473 = vmatpush1.msra.mxu0 %v366
    %474 = vmatprep.subr.mxu0 %v364
    %475 = vmatpush1.msra.mxu0 %v363
    %476 = vmatprep.subr.mxu0 %v361
    %477 = vmatpush1.msra.mxu0 %v360
    %478 = vmatprep.subr.mxu0 %v358
    %479 = vmatpush1.msra.mxu0 %v357
    %480 = vmatprep.subr.mxu0 %v355
    %481 = vmatpush1.msra.mxu0 %v354
    %482 = vmatprep.subr.mxu0 %v352
    %483 = vmatpush1.msra.mxu0 %v351
    %484 = vmatprep.subr.mxu0 %v349
    %485 = vmatpush1.msra.mxu0 %v348
    %486 = vmatprep.subr.mxu0 %v346
    %487 = vmatpush1.msra.mxu0 %v345
    %488 = vmatprep.subr.mxu0 %v343
    %489 = vmatpush1.msra.mxu0 %v342
    %490 = vmatprep.subr.mxu0 %v340
    %491 = vmatpush1.msra.mxu0 %v339
    %492 = vmatprep.subr.mxu0 %v337
    %493 = vmatpush1.msra.mxu0 %v336
    %494 = vmatprep.subr.mxu0 %v334
    %495 = vmatpush1.msra.mxu0 %v333
    %496 = vmatprep.subr.mxu0 %v331
    %497 = vmatpush1.msra.mxu0 %v330
    %498 = vmatprep.subr.mxu0 0.0
    %499 = vmatpush2.msra.mxu0 0.0
    %500 = vmatprep.subr.mxu0 0.0
    %501 = vmatpush2.msra.mxu0 0.0
    %502 = vmatprep.subr.mxu0 0.0
    %503 = vmatpush2.msra.mxu0 0.0
    %504 = vmatprep.subr.mxu0 0.0
    %505 = vmatpush2.msra.mxu0 0.0
    %506 = vmatprep.subr.mxu0 0.0
    %507 = vmatpush2.msra.mxu0 0.0
    %508 = vmatprep.subr.mxu0 0.0
    %509 = vmatpush2.msra.mxu0 0.0
    %510 = vmatprep.subr.mxu0 0.0
    %511 = vmatpush2.msra.mxu0 0.0
    %512 = vmatprep.subr.mxu0 0.0
    %513 = vmatpush2.msra.mxu0 0.0
    %514 = vmatprep.subr.mxu0 0.0
    %515 = vmatpush2.msra.mxu0 0.0
    %516 = vmatprep.subr.mxu0 0.0
    %517 = vmatpush2.msra.mxu0 0.0
    %518 = vmatprep.subr.mxu0 0.0
    %519 = vmatpush2.msra.mxu0 0.0
    %520 = vmatprep.subr.mxu0 0.0
    %521 = vmatpush2.msra.mxu0 0.0
    %522 = vmatprep.subr.mxu0 0.0
    %523 = vmatpush2.msra.mxu0 0.0
    %524 = vmatprep.subr.mxu0 0.0
    %525 = vmatpush2.msra.mxu0 0.0
    %526 = vmatprep.subr.mxu0 0.0
    %527 = vmatpush2.msra.mxu0 0.0
    %528 = vmatprep.subr.mxu0 0.0
    %529 = vmatpush2.msra.mxu0 0.0
    %530 = vmatprep.mubr.f32.mxu0 0.0
    %531 = vmatmul.mubr.f32.gmra.mxu0 %v233
    %v532 = vpop.f32.mrf.mxu0
    %v533 = vadd.f32 %v462, %v532
    %v534 = vpop.f32.mrf.mxu0
    %v535 = vadd.f32 %v464, %v534
    %536 = vdwg.mxu0
    %537 = vmatprep.subr.mxu0 0.0
    %538 = vmatpush1.msra.mxu0 %v281
    %539 = vmatprep.subr.mxu0 0.0
    %540 = vmatpush1.msra.mxu0 %v278
    %541 = vmatprep.subr.mxu0 0.0
    %542 = vmatpush1.msra.mxu0 %v275
    %543 = vmatprep.subr.mxu0 0.0
    %544 = vmatpush1.msra.mxu0 %v272
    %545 = vmatprep.subr.mxu0 0.0
    %546 = vmatpush1.msra.mxu0 %v269
    %547 = vmatprep.subr.mxu0 0.0
    %548 = vmatpush1.msra.mxu0 %v266
    %549 = vmatprep.subr.mxu0 0.0
    %550 = vmatpush1.msra.mxu0 %v263
    %551 = vmatprep.subr.mxu0 0.0
    %552 = vmatpush1.msra.mxu0 %v260
    %553 = vmatprep.subr.mxu0 0.0
    %554 = vmatpush1.msra.mxu0 %v257
    %555 = vmatprep.subr.mxu0 0.0
    %556 = vmatpush1.msra.mxu0 %v254
    %557 = vmatprep.subr.mxu0 0.0
    %558 = vmatpush1.msra.mxu0 %v251
    %559 = vmatprep.subr.mxu0 0.0
    %560 = vmatpush1.msra.mxu0 %v248
    %561 = vmatprep.subr.mxu0 0.0
    %562 = vmatpush1.msra.mxu0 %v245
    %563 = vmatprep.subr.mxu0 0.0
    %564 = vmatpush1.msra.mxu0 %v242
    %565 = vmatprep.subr.mxu0 0.0
    %566 = vmatpush1.msra.mxu0 %v239
    %567 = vmatprep.subr.mxu0 0.0
    %568 = vmatpush1.msra.mxu0 %v236
    %569 = vmatprep.subr.mxu0 0.0
    %570 = vmatpush2.msra.mxu0 %v329
    %571 = vmatprep.subr.mxu0 0.0
    %572 = vmatpush2.msra.mxu0 %v326
    %573 = vmatprep.subr.mxu0 0.0
    %574 = vmatpush2.msra.mxu0 %v323
    %575 = vmatprep.subr.mxu0 0.0
    %576 = vmatpush2.msra.mxu0 %v320
    %577 = vmatprep.subr.mxu0 0.0
    %578 = vmatpush2.msra.mxu0 %v317
    %579 = vmatprep.subr.mxu0 0.0
    %580 = vmatpush2.msra.mxu0 %v314
    %581 = vmatprep.subr.mxu0 0.0
    %582 = vmatpush2.msra.mxu0 %v311
    %583 = vmatprep.subr.mxu0 0.0
    %584 = vmatpush2.msra.mxu0 %v308
    %585 = vmatprep.subr.mxu0 0.0
    %586 = vmatpush2.msra.mxu0 %v305
    %587 = vmatprep.subr.mxu0 0.0
    %588 = vmatpush2.msra.mxu0 %v302
    %589 = vmatprep.subr.mxu0 0.0
    %590 = vmatpush2.msra.mxu0 %v299
    %591 = vmatprep.subr.mxu0 0.0
    %592 = vmatpush2.msra.mxu0 %v296
    %593 = vmatprep.subr.mxu0 0.0
    %594 = vmatpush2.msra.mxu0 %v293
    %595 = vmatprep.subr.mxu0 0.0
    %596 = vmatpush2.msra.mxu0 %v290
    %597 = vmatprep.subr.mxu0 0.0
    %598 = vmatpush2.msra.mxu0 %v287
    %599 = vmatprep.subr.mxu0 0.0
    %600 = vmatpush2.msra.mxu0 %v284
    %601 = vmatprep.mubr.f32.mxu0 %v232
    %602 = vmatmul.mubr.f32.gmra.mxu0 %v231
    %v603 = vpop.f32.mrf.mxu0
    %v604 = vadd.f32 %v391, %v603
    %v605 = vpop.f32.mrf.mxu0
    %606 = vdwg.mxu0
    %607 = vmatprep.subr.mxu0 0.0
    %608 = vmatpush1.msra.mxu0 %v377
    %609 = vmatprep.subr.mxu0 0.0
    %610 = vmatpush1.msra.mxu0 %v374
    %611 = vmatprep.subr.mxu0 0.0
    %612 = vmatpush1.msra.mxu0 %v371
    %613 = vmatprep.subr.mxu0 0.0
    %614 = vmatpush1.msra.mxu0 %v368
    %615 = vmatprep.subr.mxu0 0.0
    %616 = vmatpush1.msra.mxu0 %v365
    %617 = vmatprep.subr.mxu0 0.0
    %618 = vmatpush1.msra.mxu0 %v362
    %619 = vmatprep.subr.mxu0 0.0
    %620 = vmatpush1.msra.mxu0 %v359
    %621 = vmatprep.subr.mxu0 0.0
    %622 = vmatpush1.msra.mxu0 %v356
    %623 = vmatprep.subr.mxu0 0.0
    %624 = vmatpush1.msra.mxu0 %v353
    %625 = vmatprep.subr.mxu0 0.0
    %626 = vmatpush1.msra.mxu0 %v350
    %627 = vmatprep.subr.mxu0 0.0
    %628 = vmatpush1.msra.mxu0 %v347
    %629 = vmatprep.subr.mxu0 0.0
    %630 = vmatpush1.msra.mxu0 %v344
    %631 = vmatprep.subr.mxu0 0.0
    %632 = vmatpush1.msra.mxu0 %v341
    %633 = vmatprep.subr.mxu0 0.0
    %634 = vmatpush1.msra.mxu0 %v338
    %635 = vmatprep.subr.mxu0 0.0
    %636 = vmatpush1.msra.mxu0 %v335
    %637 = vmatprep.subr.mxu0 0.0
    %638 = vmatpush1.msra.mxu0 %v332
    %639 = vmatprep.subr.mxu0 0.0
    %640 = vmatpush2.msra.mxu0 0.0
    %641 = vmatprep.subr.mxu0 0.0
    %642 = vmatpush2.msra.mxu0 0.0
    %643 = vmatprep.subr.mxu0 0.0
    %644 = vmatpush2.msra.mxu0 0.0
    %645 = vmatprep.subr.mxu0 0.0
    %646 = vmatpush2.msra.mxu0 0.0
    %647 = vmatprep.subr.mxu0 0.0
    %648 = vmatpush2.msra.mxu0 0.0
    %649 = vmatprep.subr.mxu0 0.0
    %650 = vmatpush2.msra.mxu0 0.0
    %651 = vmatprep.subr.mxu0 0.0
    %652 = vmatpush2.msra.mxu0 0.0
    %653 = vmatprep.subr.mxu0 0.0
    %654 = vmatpush2.msra.mxu0 0.0
    %655 = vmatprep.subr.mxu0 0.0
    %656 = vmatpush2.msra.mxu0 0.0
    %657 = vmatprep.subr.mxu0 0.0
    %658 = vmatpush2.msra.mxu0 0.0
    %659 = vmatprep.subr.mxu0 0.0
    %660 = vmatpush2.msra.mxu0 0.0
    %661 = vmatprep.subr.mxu0 0.0
    %662 = vmatpush2.msra.mxu0 0.0
    %663 = vmatprep.subr.mxu0 0.0
    %664 = vmatpush2.msra.mxu0 0.0
    %665 = vmatprep.subr.mxu0 0.0
    %666 = vmatpush2.msra.mxu0 0.0
    %667 = vmatprep.subr.mxu0 0.0
    %668 = vmatpush2.msra.mxu0 0.0
    %669 = vmatprep.subr.mxu0 0.0
    %670 = vmatpush2.msra.mxu0 0.0
    %671 = vmatprep.mubr.f32.mxu0 0.0
    %672 = vmatmul.mubr.f32.gmra.mxu0 %v233
    %v673 = vpop.f32.mrf.mxu0
    %v674 = vadd.f32 %v604, %v673
    %v675 = vpop.f32.mrf.mxu0
    %676 = vdwg.mxu0
    %v677 = vmax.f32 %v533, 0.0
    %v678 = vmax.f32 %v535, 0.0
    %v679 = vmax.f32 %v674, 0.0
    %v680 = vld [vmem:[%s3] sm:$0xff]
    %v681 = vld [vmem:[%s3 + $0x8] sm:$0xff]
    %v682 = vld [vmem:[%s3 + $0x10] sm:$0xff]
    %v683 = vld [vmem:[%s3 + $0x18] sm:$0xff]
    %v684 = vld [vmem:[%s3 + $0x20] sm:$0xff]
    %v685 = vld [vmem:[%s3 + $0x28] sm:$0xff]
    %v686 = vld [vmem:[%s3 + $0x30] sm:$0xff]
    %v687 = vld [vmem:[%s3 + $0x38] sm:$0xff]
    %v688 = vld [vmem:[%s3 + $0x40] sm:$0xff]
    %v689 = vld [vmem:[%s3 + $0x48] sm:$0xff]
    %v690 = vld [vmem:[%s3 + $0x50] sm:$0xff]
    %v691 = vld [vmem:[%s3 + $0x58] sm:$0xff]
    %v692 = vld [vmem:[%s3 + $0x60] sm:$0xff]
    %v693 = vld [vmem:[%s3 + $0x68] sm:$0xff]
    %v694 = vld [vmem:[%s3 + $0x70] sm:$0xff]
    %v695 = vld [vmem:[%s3 + $0x78] sm:$0xff]
    %v696 = vld [vmem:[%s3 + $0x80] sm:$0xff]
    %v697 = vld [vmem:[%s3 + $0x88] sm:$0xff]
    %v698 = vld [vmem:[%s3 + $0x90] sm:$0xff]
    %v699 = vld [vmem:[%s3 + $0x98] sm:$0xff]
    %v700 = vld [vmem:[%s3 + $0xa0] sm:$0xff]
    %v701 = vld [vmem:[%s3 + $0xa8] sm:$0xff]
    %v702 = vld [vmem:[%s3 + $0xb0] sm:$0xff]
    %v703 = vld [vmem:[%s3 + $0xb8] sm:$0xff]
    %v704 = vld [vmem:[%s3 + $0xc0] sm:$0xff]
    %v705 = vld [vmem:[%s3 + $0xc8] sm:$0xff]
    %v706 = vld [vmem:[%s3 + $0xd0] sm:$0xff]
    %v707 = vld [vmem:[%s3 + $0xd8] sm:$0xff]
    %v708 = vld [vmem:[%s3 + $0xe0] sm:$0xff]
    %v709 = vld [vmem:[%s3 + $0xe8] sm:$0xff]
    %v710 = vld [vmem:[%s3 + $0xf0] sm:$0xff]
    %v711 = vld [vmem:[%s3 + $0xf8] sm:$0xff]
    %v712 = vld [vmem:[%s3 + $0x100] sm:$0xff]
    %v713 = vld [vmem:[%s3 + $0x108] sm:$0xff]
    %v714 = vld [vmem:[%s3 + $0x110] sm:$0xff]
    %v715 = vld [vmem:[%s3 + $0x118] sm:$0xff]
    %v716 = vld [vmem:[%s3 + $0x120] sm:$0xff]
    %v717 = vld [vmem:[%s3 + $0x128] sm:$0xff]
    %v718 = vld [vmem:[%s3 + $0x130] sm:$0xff]
    %v719 = vld [vmem:[%s3 + $0x138] sm:$0xff]
    %v720 = vld [vmem:[%s3 + $0x140] sm:$0xff]
    %v721 = vld [vmem:[%s3 + $0x148] sm:$0xff]
    %v722 = vld [vmem:[%s3 + $0x150] sm:$0xff]
    %v723 = vld [vmem:[%s3 + $0x158] sm:$0xff]
    %v724 = vld [vmem:[%s3 + $0x160] sm:$0xff]
    %v725 = vld [vmem:[%s3 + $0x168] sm:$0xff]
    %v726 = vld [vmem:[%s3 + $0x170] sm:$0xff]
    %v727 = vld [vmem:[%s3 + $0x178] sm:$0xff]
    %v728 = vld [vmem:[%s6] sm:$0x1]
    %v730 = vlaneseq
    %v731 = vshrl.u32 %v730, 7
    %v732 = vsub.s32 0, %v731
    %v733 = vrot.slane %v728, %v732
    %735 = vmatprep.subr.mxu0 0.0
    %736 = vmatpush1.msra.mxu0 %v695
    %737 = vmatprep.subr.mxu0 0.0
    %738 = vmatpush1.msra.mxu0 %v694
    %739 = vmatprep.subr.mxu0 0.0
    %740 = vmatpush1.msra.mxu0 %v693
    %741 = vmatprep.subr.mxu0 0.0
    %742 = vmatpush1.msra.mxu0 %v692
    %743 = vmatprep.subr.mxu0 0.0
    %744 = vmatpush1.msra.mxu0 %v691
    %745 = vmatprep.subr.mxu0 0.0
    %746 = vmatpush1.msra.mxu0 %v690
    %747 = vmatprep.subr.mxu0 0.0
    %748 = vmatpush1.msra.mxu0 %v689
    %749 = vmatprep.subr.mxu0 0.0
    %750 = vmatpush1.msra.mxu0 %v688
    %751 = vmatprep.subr.mxu0 0.0
    %752 = vmatpush1.msra.mxu0 %v687
    %753 = vmatprep.subr.mxu0 0.0
    %754 = vmatpush1.msra.mxu0 %v686
    %755 = vmatprep.subr.mxu0 0.0
    %756 = vmatpush1.msra.mxu0 %v685
    %757 = vmatprep.subr.mxu0 0.0
    %758 = vmatpush1.msra.mxu0 %v684
    %759 = vmatprep.subr.mxu0 0.0
    %760 = vmatpush1.msra.mxu0 %v683
    %761 = vmatprep.subr.mxu0 0.0
    %762 = vmatpush1.msra.mxu0 %v682
    %763 = vmatprep.subr.mxu0 0.0
    %764 = vmatpush1.msra.mxu0 %v681
    %765 = vmatprep.subr.mxu0 0.0
    %766 = vmatpush1.msra.mxu0 %v680
    %767 = vmatprep.subr.mxu0 0.0
    %768 = vmatpush2.msra.mxu0 %v711
    %769 = vmatprep.subr.mxu0 0.0
    %770 = vmatpush2.msra.mxu0 %v710
    %771 = vmatprep.subr.mxu0 0.0
    %772 = vmatpush2.msra.mxu0 %v709
    %773 = vmatprep.subr.mxu0 0.0
    %774 = vmatpush2.msra.mxu0 %v708
    %775 = vmatprep.subr.mxu0 0.0
    %776 = vmatpush2.msra.mxu0 %v707
    %777 = vmatprep.subr.mxu0 0.0
    %778 = vmatpush2.msra.mxu0 %v706
    %779 = vmatprep.subr.mxu0 0.0
    %780 = vmatpush2.msra.mxu0 %v705
    %781 = vmatprep.subr.mxu0 0.0
    %782 = vmatpush2.msra.mxu0 %v704
    %783 = vmatprep.subr.mxu0 0.0
    %784 = vmatpush2.msra.mxu0 %v703
    %785 = vmatprep.subr.mxu0 0.0
    %786 = vmatpush2.msra.mxu0 %v702
    %787 = vmatprep.subr.mxu0 0.0
    %788 = vmatpush2.msra.mxu0 %v701
    %789 = vmatprep.subr.mxu0 0.0
    %790 = vmatpush2.msra.mxu0 %v700
    %791 = vmatprep.subr.mxu0 0.0
    %792 = vmatpush2.msra.mxu0 %v699
    %793 = vmatprep.subr.mxu0 0.0
    %794 = vmatpush2.msra.mxu0 %v698
    %795 = vmatprep.subr.mxu0 0.0
    %796 = vmatpush2.msra.mxu0 %v697
    %797 = vmatprep.subr.mxu0 0.0
    %798 = vmatpush2.msra.mxu0 %v696
    %799 = vmatprep.mubr.f32.mxu0 %v678
    %800 = vmatmul.mubr.f32.gmra.mxu0 %v677
    %v801 = vpop.f32.mrf.mxu0
    %v802 = vadd.f32 %v733, %v801
    %v803 = vpop.f32.mrf.mxu0
    %804 = vdwg.mxu0
    %805 = vmatprep.subr.mxu0 0.0
    %806 = vmatpush1.msra.mxu0 %v727
    %807 = vmatprep.subr.mxu0 0.0
    %808 = vmatpush1.msra.mxu0 %v726
    %809 = vmatprep.subr.mxu0 0.0
    %810 = vmatpush1.msra.mxu0 %v725
    %811 = vmatprep.subr.mxu0 0.0
    %812 = vmatpush1.msra.mxu0 %v724
    %813 = vmatprep.subr.mxu0 0.0
    %814 = vmatpush1.msra.mxu0 %v723
    %815 = vmatprep.subr.mxu0 0.0
    %816 = vmatpush1.msra.mxu0 %v722
    %817 = vmatprep.subr.mxu0 0.0
    %818 = vmatpush1.msra.mxu0 %v721
    %819 = vmatprep.subr.mxu0 0.0
    %820 = vmatpush1.msra.mxu0 %v720
    %821 = vmatprep.subr.mxu0 0.0
    %822 = vmatpush1.msra.mxu0 %v719
    %823 = vmatprep.subr.mxu0 0.0
    %824 = vmatpush1.msra.mxu0 %v718
    %825 = vmatprep.subr.mxu0 0.0
    %826 = vmatpush1.msra.mxu0 %v717
    %827 = vmatprep.subr.mxu0 0.0
    %828 = vmatpush1.msra.mxu0 %v716
    %829 = vmatprep.subr.mxu0 0.0
    %830 = vmatpush1.msra.mxu0 %v715
    %831 = vmatprep.subr.mxu0 0.0
    %832 = vmatpush1.msra.mxu0 %v714
    %833 = vmatprep.subr.mxu0 0.0
    %834 = vmatpush1.msra.mxu0 %v713
    %835 = vmatprep.subr.mxu0 0.0
    %836 = vmatpush1.msra.mxu0 %v712
    %837 = vmatprep.subr.mxu0 0.0
    %838 = vmatpush2.msra.mxu0 0.0
    %839 = vmatprep.subr.mxu0 0.0
    %840 = vmatpush2.msra.mxu0 0.0
    %841 = vmatprep.subr.mxu0 0.0
    %842 = vmatpush2.msra.mxu0 0.0
    %843 = vmatprep.subr.mxu0 0.0
    %844 = vmatpush2.msra.mxu0 0.0
    %845 = vmatprep.subr.mxu0 0.0
    %846 = vmatpush2.msra.mxu0 0.0
    %847 = vmatprep.subr.mxu0 0.0
    %848 = vmatpush2.msra.mxu0 0.0
    %849 = vmatprep.subr.mxu0 0.0
    %850 = vmatpush2.msra.mxu0 0.0
    %851 = vmatprep.subr.mxu0 0.0
    %852 = vmatpush2.msra.mxu0 0.0
    %853 = vmatprep.subr.mxu0 0.0
    %854 = vmatpush2.msra.mxu0 0.0
    %855 = vmatprep.subr.mxu0 0.0
    %856 = vmatpush2.msra.mxu0 0.0
    %857 = vmatprep.subr.mxu0 0.0
    %858 = vmatpush2.msra.mxu0 0.0
    %859 = vmatprep.subr.mxu0 0.0
    %860 = vmatpush2.msra.mxu0 0.0
    %861 = vmatprep.subr.mxu0 0.0
    %862 = vmatpush2.msra.mxu0 0.0
    %863 = vmatprep.subr.mxu0 0.0
    %864 = vmatpush2.msra.mxu0 0.0
    %865 = vmatprep.subr.mxu0 0.0
    %866 = vmatpush2.msra.mxu0 0.0
    %867 = vmatprep.subr.mxu0 0.0
    %868 = vmatpush2.msra.mxu0 0.0
    %869 = vmatprep.mubr.f32.mxu0 0.0
    %870 = vmatmul.mubr.f32.gmra.mxu0 %v679
    %v871 = vpop.f32.mrf.mxu0
    %v872 = vadd.f32 %v802, %v871
    %v873 = vpop.f32.mrf.mxu0
    %874 = vdwg.mxu0
    %v875 = vmax.f32 %v872, 0.0
    %877 = vrot.lane.b32.xlu0 %v875, 64
    %v878 = vpop.permute.xlu0 %877
    %880 = vrot.lane.b32.xlu0 %v875, 32
    %v881 = vpop.permute.xlu0 %880
    %vm883 = vcmask 523264
    %v884 = vsel %vm883, %v875, %v878
    %vm885 = vcmask 654336
    %v886 = vsel %vm885, %v884, %v878
    %vm887 = vcmask 785408
    %v888 = vsel %vm887, %v886, %v881
    %vm889 = vcmask 916480
    %v890 = vsel %vm889, %v888, %v881
    %v891 = vld [vmem:[%s7] sm:$0xff]
    %v892 = vld [vmem:[%s7 + $0x8] sm:$0xff]
    %v893 = vld [vmem:[%s7 + $0x10] sm:$0xff]
    %v894 = vld [vmem:[%s7 + $0x18] sm:$0xff]
    %v895 = vld [vmem:[%s8] sm:$0x1]
    %v897 = vlaneseq
    %v898 = vshrl.u32 %v897, 7
    %v899 = vsub.s32 0, %v898
    %v900 = vrot.slane %v895, %v899
    %902 = vmatprep.subr.mxu0 0.0
    %903 = vmatpush1.msra.mxu0 0.0
    %904 = vmatprep.subr.mxu0 0.0
    %905 = vmatpush1.msra.mxu0 0.0
    %906 = vmatprep.subr.mxu0 0.0
    %907 = vmatpush1.msra.mxu0 0.0
    %908 = vmatprep.subr.mxu0 0.0
    %909 = vmatpush1.msra.mxu0 0.0
    %910 = vmatprep.subr.mxu0 0.0
    %911 = vmatpush1.msra.mxu0 0.0
    %912 = vmatprep.subr.mxu0 0.0
    %913 = vmatpush1.msra.mxu0 0.0
    %914 = vmatprep.subr.mxu0 0.0
    %915 = vmatpush1.msra.mxu0 0.0
    %916 = vmatprep.subr.mxu0 0.0
    %917 = vmatpush1.msra.mxu0 0.0
    %918 = vmatprep.subr.mxu0 0.0
    %919 = vmatpush1.msra.mxu0 0.0
    %920 = vmatprep.subr.mxu0 0.0
    %921 = vmatpush1.msra.mxu0 0.0
    %922 = vmatprep.subr.mxu0 0.0
    %923 = vmatpush1.msra.mxu0 0.0
    %924 = vmatprep.subr.mxu0 0.0
    %925 = vmatpush1.msra.mxu0 0.0
    %926 = vmatprep.subr.mxu0 0.0
    %927 = vmatpush1.msra.mxu0 %v894
    %928 = vmatprep.subr.mxu0 0.0
    %929 = vmatpush1.msra.mxu0 %v893
    %930 = vmatprep.subr.mxu0 0.0
    %931 = vmatpush1.msra.mxu0 %v892
    %932 = vmatprep.subr.mxu0 0.0
    %933 = vmatpush1.msra.mxu0 %v891
    %934 = vmatprep.subr.mxu0 0.0
    %935 = vmatpush2.msra.mxu0 0.0
    %936 = vmatprep.subr.mxu0 0.0
    %937 = vmatpush2.msra.mxu0 0.0
    %938 = vmatprep.subr.mxu0 0.0
    %939 = vmatpush2.msra.mxu0 0.0
    %940 = vmatprep.subr.mxu0 0.0
    %941 = vmatpush2.msra.mxu0 0.0
    %942 = vmatprep.subr.mxu0 0.0
    %943 = vmatpush2.msra.mxu0 0.0
    %944 = vmatprep.subr.mxu0 0.0
    %945 = vmatpush2.msra.mxu0 0.0
    %946 = vmatprep.subr.mxu0 0.0
    %947 = vmatpush2.msra.mxu0 0.0
    %948 = vmatprep.subr.mxu0 0.0
    %949 = vmatpush2.msra.mxu0 0.0
    %950 = vmatprep.subr.mxu0 0.0
    %951 = vmatpush2.msra.mxu0 0.0
    %952 = vmatprep.subr.mxu0 0.0
    %953 = vmatpush2.msra.mxu0 0.0
    %954 = vmatprep.subr.mxu0 0.0
    %955 = vmatpush2.msra.mxu0 0.0
    %956 = vmatprep.subr.mxu0 0.0
    %957 = vmatpush2.msra.mxu0 0.0
    %958 = vmatprep.subr.mxu0 0.0
    %959 = vmatpush2.msra.mxu0 0.0
    %960 = vmatprep.subr.mxu0 0.0
    %961 = vmatpush2.msra.mxu0 0.0
    %962 = vmatprep.subr.mxu0 0.0
    %963 = vmatpush2.msra.mxu0 0.0
    %964 = vmatprep.subr.mxu0 0.0
    %965 = vmatpush2.msra.mxu0 0.0
    %966 = vmatprep.mubr.f32.mxu0 0.0
    %967 = vmatmul.mubr.f32.gmra.mxu0 %v88
    %v968 = vpop.f32.mrf.mxu0
    %v969 = vadd.f32 %v900, %v968
    %v970 = vpop.f32.mrf.mxu0
    %971 = vdwg.mxu0
    %vm972 = vcmask 64512
    %v973 = vsel %vm972, %v969, -inf
    %974 = vmax.xlane.f32.xlu0 %v973
    %v975 = vpop.xlane.xlu0 %974
    %v976 = vsub.f32 %v969, %v975
    %v977 = vmul.f32 %v976, 1.442695
    %v978 = vpow.pop %v977
    %v979 = vld [vmem:[%s9] sm:$0xff]
    %v981 = vsel %vm972, %v978, 0
    %983 = vmatprep.subr.mxu0 0.0
    %984 = vmatpush1.msra.mxu0 0.0
    %985 = vmatprep.subr.mxu0 0.0
    %986 = vmatpush1.msra.mxu0 0.0
    %987 = vmatprep.subr.mxu0 0.0
    %988 = vmatpush1.msra.mxu0 0.0
    %989 = vmatprep.subr.mxu0 0.0
    %990 = vmatpush1.msra.mxu0 0.0
    %991 = vmatprep.subr.mxu0 0.0
    %992 = vmatpush1.msra.mxu0 0.0
    %993 = vmatprep.subr.mxu0 0.0
    %994 = vmatpush1.msra.mxu0 0.0
    %995 = vmatprep.subr.mxu0 0.0
    %996 = vmatpush1.msra.mxu0 0.0
    %997 = vmatprep.subr.mxu0 0.0
    %998 = vmatpush1.msra.mxu0 0.0
    %999 = vmatprep.subr.mxu0 0.0
    %1000 = vmatpush1.msra.mxu0 0.0
    %1001 = vmatprep.subr.mxu0 0.0
    %1002 = vmatpush1.msra.mxu0 0.0
    %1003 = vmatprep.subr.mxu0 0.0
    %1004 = vmatpush1.msra.mxu0 0.0
    %1005 = vmatprep.subr.mxu0 0.0
    %1006 = vmatpush1.msra.mxu0 0.0
    %1007 = vmatprep.subr.mxu0 0.0
    %1008 = vmatpush1.msra.mxu0 0.0
    %1009 = vmatprep.subr.mxu0 0.0
    %1010 = vmatpush1.msra.mxu0 0.0
    %1011 = vmatprep.subr.mxu0 0.0
    %1012 = vmatpush1.msra.mxu0 0.0
    %1013 = vmatprep.subr.mxu0 0.0
    %1014 = vmatpush1.msra.mxu0 %v979
    %1015 = vmatprep.subr.mxu0 0.0
    %1016 = vmatpush2.msra.mxu0 0.0
    %1017 = vmatprep.subr.mxu0 0.0
    %1018 = vmatpush2.msra.mxu0 0.0
    %1019 = vmatprep.subr.mxu0 0.0
    %1020 = vmatpush2.msra.mxu0 0.0
    %1021 = vmatprep.subr.mxu0 0.0
    %1022 = vmatpush2.msra.mxu0 0.0
    %1023 = vmatprep.subr.mxu0 0.0
    %1024 = vmatpush2.msra.mxu0 0.0
    %1025 = vmatprep.subr.mxu0 0.0
    %1026 = vmatpush2.msra.mxu0 0.0
    %1027 = vmatprep.subr.mxu0 0.0
    %1028 = vmatpush2.msra.mxu0 0.0
    %1029 = vmatprep.subr.mxu0 0.0
    %1030 = vmatpush2.msra.mxu0 0.0
    %1031 = vmatprep.subr.mxu0 0.0
    %1032 = vmatpush2.msra.mxu0 0.0
    %1033 = vmatprep.subr.mxu0 0.0
    %1034 = vmatpush2.msra.mxu0 0.0
    %1035 = vmatprep.subr.mxu0 0.0
    %1036 = vmatpush2.msra.mxu0 0.0
    %1037 = vmatprep.subr.mxu0 0.0
    %1038 = vmatpush2.msra.mxu0 0.0
    %1039 = vmatprep.subr.mxu0 0.0
    %1040 = vmatpush2.msra.mxu0 0.0
    %1041 = vmatprep.subr.mxu0 0.0
    %1042 = vmatpush2.msra.mxu0 0.0
    %1043 = vmatprep.subr.mxu0 0.0
    %1044 = vmatpush2.msra.mxu0 0.0
    %1045 = vmatprep.subr.mxu0 0.0
    %1046 = vmatpush2.msra.mxu0 0.0
    %1047 = vmatprep.mubr.f32.mxu0 0.0
    %1048 = vmatmul.mubr.f32.gmra.mxu0 %v981
    %v1049 = vpop.f32.mrf.mxu0
    %v1050 = vadd.f32 0.0, %v1049
    %v1051 = vpop.f32.mrf.mxu0
    %1052 = vdwg.mxu0
    %v1053 = vmax.f32 %v1050, 1e-30
    %v1054 = vrcp.pop %v1053
    %v1055 = vmul.f32 %v978, %v1054
    %v1056 = vld [vmem:[%s10] sm:$0xff]
    %v1058 = vsel %vm972, %v1055, 0
    %1060 = vmatprep.subr.mxu0 0.0
    %1061 = vmatpush1.msra.mxu0 0.0
    %1062 = vmatprep.subr.mxu0 0.0
    %1063 = vmatpush1.msra.mxu0 0.0
    %1064 = vmatprep.subr.mxu0 0.0
    %1065 = vmatpush1.msra.mxu0 0.0
    %1066 = vmatprep.subr.mxu0 0.0
    %1067 = vmatpush1.msra.mxu0 0.0
    %1068 = vmatprep.subr.mxu0 0.0
    %1069 = vmatpush1.msra.mxu0 0.0
    %1070 = vmatprep.subr.mxu0 0.0
    %1071 = vmatpush1.msra.mxu0 0.0
    %1072 = vmatprep.subr.mxu0 0.0
    %1073 = vmatpush1.msra.mxu0 0.0
    %1074 = vmatprep.subr.mxu0 0.0
    %1075 = vmatpush1.msra.mxu0 0.0
    %1076 = vmatprep.subr.mxu0 0.0
    %1077 = vmatpush1.msra.mxu0 0.0
    %1078 = vmatprep.subr.mxu0 0.0
    %1079 = vmatpush1.msra.mxu0 0.0
    %1080 = vmatprep.subr.mxu0 0.0
    %1081 = vmatpush1.msra.mxu0 0.0
    %1082 = vmatprep.subr.mxu0 0.0
    %1083 = vmatpush1.msra.mxu0 0.0
    %1084 = vmatprep.subr.mxu0 0.0
    %1085 = vmatpush1.msra.mxu0 0.0
    %1086 = vmatprep.subr.mxu0 0.0
    %1087 = vmatpush1.msra.mxu0 0.0
    %1088 = vmatprep.subr.mxu0 0.0
    %1089 = vmatpush1.msra.mxu0 0.0
    %1090 = vmatprep.subr.mxu0 0.0
    %1091 = vmatpush1.msra.mxu0 %v1056
    %1092 = vmatprep.subr.mxu0 0.0
    %1093 = vmatpush2.msra.mxu0 0.0
    %1094 = vmatprep.subr.mxu0 0.0
    %1095 = vmatpush2.msra.mxu0 0.0
    %1096 = vmatprep.subr.mxu0 0.0
    %1097 = vmatpush2.msra.mxu0 0.0
    %1098 = vmatprep.subr.mxu0 0.0
    %1099 = vmatpush2.msra.mxu0 0.0
    %1100 = vmatprep.subr.mxu0 0.0
    %1101 = vmatpush2.msra.mxu0 0.0
    %1102 = vmatprep.subr.mxu0 0.0
    %1103 = vmatpush2.msra.mxu0 0.0
    %1104 = vmatprep.subr.mxu0 0.0
    %1105 = vmatpush2.msra.mxu0 0.0
    %1106 = vmatprep.subr.mxu0 0.0
    %1107 = vmatpush2.msra.mxu0 0.0
    %1108 = vmatprep.subr.mxu0 0.0
    %1109 = vmatpush2.msra.mxu0 0.0
    %1110 = vmatprep.subr.mxu0 0.0
    %1111 = vmatpush2.msra.mxu0 0.0
    %1112 = vmatprep.subr.mxu0 0.0
    %1113 = vmatpush2.msra.mxu0 0.0
    %1114 = vmatprep.subr.mxu0 0.0
    %1115 = vmatpush2.msra.mxu0 0.0
    %1116 = vmatprep.subr.mxu0 0.0
    %1117 = vmatpush2.msra.mxu0 0.0
    %1118 = vmatprep.subr.mxu0 0.0
    %1119 = vmatpush2.msra.mxu0 0.0
    %1120 = vmatprep.subr.mxu0 0.0
    %1121 = vmatpush2.msra.mxu0 0.0
    %1122 = vmatprep.subr.mxu0 0.0
    %1123 = vmatpush2.msra.mxu0 0.0
    %1124 = vmatprep.mubr.f32.mxu0 0.0
    %1125 = vmatmul.mubr.f32.gmra.mxu0 %v1058
    %v1126 = vpop.f32.mrf.mxu0
    %v1127 = vadd.f32 0.0, %v1126
    %v1128 = vpop.f32.mrf.mxu0
    %1129 = vdwg.mxu0
    %v1130 = vmul.f32 %v890, %v1127
    %v1131 = vld [vmem:[%s11] sm:$0xff]
    %v1132 = vld [vmem:[%s11 + $0x8] sm:$0xff]
    %v1133 = vld [vmem:[%s11 + $0x10] sm:$0xff]
    %v1134 = vld [vmem:[%s11 + $0x18] sm:$0xff]
    %v1135 = vld [vmem:[%s11 + $0x20] sm:$0xff]
    %v1136 = vld [vmem:[%s11 + $0x28] sm:$0xff]
    %v1137 = vld [vmem:[%s11 + $0x30] sm:$0xff]
    %v1138 = vld [vmem:[%s11 + $0x38] sm:$0xff]
    %v1139 = vld [vmem:[%s11 + $0x40] sm:$0xff]
    %v1140 = vld [vmem:[%s11 + $0x48] sm:$0xff]
    %v1141 = vld [vmem:[%s11 + $0x50] sm:$0xff]
    %v1142 = vld [vmem:[%s11 + $0x58] sm:$0xff]
    %v1143 = vld [vmem:[%s11 + $0x60] sm:$0xff]
    %v1144 = vld [vmem:[%s11 + $0x68] sm:$0xff]
    %v1145 = vld [vmem:[%s11 + $0x70] sm:$0xff]
    %v1146 = vld [vmem:[%s11 + $0x78] sm:$0xff]
    %1147 = vmatprep.subr.mxu0 0.0
    %1148 = vmatpush1.msra.mxu0 %v1146
    %1149 = vmatprep.subr.mxu0 0.0
    %1150 = vmatpush1.msra.mxu0 %v1145
    %1151 = vmatprep.subr.mxu0 0.0
    %1152 = vmatpush1.msra.mxu0 %v1144
    %1153 = vmatprep.subr.mxu0 0.0
    %1154 = vmatpush1.msra.mxu0 %v1143
    %1155 = vmatprep.subr.mxu0 0.0
    %1156 = vmatpush1.msra.mxu0 %v1142
    %1157 = vmatprep.subr.mxu0 0.0
    %1158 = vmatpush1.msra.mxu0 %v1141
    %1159 = vmatprep.subr.mxu0 0.0
    %1160 = vmatpush1.msra.mxu0 %v1140
    %1161 = vmatprep.subr.mxu0 0.0
    %1162 = vmatpush1.msra.mxu0 %v1139
    %1163 = vmatprep.subr.mxu0 0.0
    %1164 = vmatpush1.msra.mxu0 %v1138
    %1165 = vmatprep.subr.mxu0 0.0
    %1166 = vmatpush1.msra.mxu0 %v1137
    %1167 = vmatprep.subr.mxu0 0.0
    %1168 = vmatpush1.msra.mxu0 %v1136
    %1169 = vmatprep.subr.mxu0 0.0
    %1170 = vmatpush1.msra.mxu0 %v1135
    %1171 = vmatprep.subr.mxu0 0.0
    %1172 = vmatpush1.msra.mxu0 %v1134
    %1173 = vmatprep.subr.mxu0 0.0
    %1174 = vmatpush1.msra.mxu0 %v1133
    %1175 = vmatprep.subr.mxu0 0.0
    %1176 = vmatpush1.msra.mxu0 %v1132
    %1177 = vmatprep.subr.mxu0 0.0
    %1178 = vmatpush1.msra.mxu0 %v1131
    %1179 = vmatprep.subr.mxu0 0.0
    %1180 = vmatpush2.msra.mxu0 0.0
    %1181 = vmatprep.subr.mxu0 0.0
    %1182 = vmatpush2.msra.mxu0 0.0
    %1183 = vmatprep.subr.mxu0 0.0
    %1184 = vmatpush2.msra.mxu0 0.0
    %1185 = vmatprep.subr.mxu0 0.0
    %1186 = vmatpush2.msra.mxu0 0.0
    %1187 = vmatprep.subr.mxu0 0.0
    %1188 = vmatpush2.msra.mxu0 0.0
    %1189 = vmatprep.subr.mxu0 0.0
    %1190 = vmatpush2.msra.mxu0 0.0
    %1191 = vmatprep.subr.mxu0 0.0
    %1192 = vmatpush2.msra.mxu0 0.0
    %1193 = vmatprep.subr.mxu0 0.0
    %1194 = vmatpush2.msra.mxu0 0.0
    %1195 = vmatprep.subr.mxu0 0.0
    %1196 = vmatpush2.msra.mxu0 0.0
    %1197 = vmatprep.subr.mxu0 0.0
    %1198 = vmatpush2.msra.mxu0 0.0
    %1199 = vmatprep.subr.mxu0 0.0
    %1200 = vmatpush2.msra.mxu0 0.0
    %1201 = vmatprep.subr.mxu0 0.0
    %1202 = vmatpush2.msra.mxu0 0.0
    %1203 = vmatprep.subr.mxu0 0.0
    %1204 = vmatpush2.msra.mxu0 0.0
    %1205 = vmatprep.subr.mxu0 0.0
    %1206 = vmatpush2.msra.mxu0 0.0
    %1207 = vmatprep.subr.mxu0 0.0
    %1208 = vmatpush2.msra.mxu0 0.0
    %1209 = vmatprep.subr.mxu0 0.0
    %1210 = vmatpush2.msra.mxu0 0.0
    %1211 = vmatprep.mubr.f32.mxu0 0.0
    %1212 = vmatmul.mubr.f32.gmra.mxu0 %v1130
    %v1213 = vpop.f32.mrf.mxu0
    %v1214 = vadd.f32 0.0, %v1213
    %v1215 = vpop.f32.mrf.mxu0
    %1216 = vdwg.mxu0
    %1217 = vst [vmem:[#allocation5] sm:$0xff] %v1214
    // Predicated region
    $region54: #{tpu_custom_call.1} parent=1 // pred_check
      _
    $region55: #{tpu_custom_call.1} parent=1 // pred_check_branch
      %1219 = sbr.rel (0) target = $region57
    $region56: #{tpu_custom_call.1} parent=1 // pred_region
      %s1221 = ssub.s32 128, 128
      %1222 = vsyncadd [#allocation4], %s1221
      %s1224 = sshll.u32 [#allocation5], 4
      %s1225 = int_to_ptr.vmem [resolvable:$true] %s1224
      %1227 = dma.vmem_to_hbm [thread:$0]  %s1225, 128, %s12, [#allocation4]
    $region57: #{tpu_custom_call.1} parent=1 // pred_fallthru
      _
    // Predicated region
    $region58: #{tpu_custom_call.1} parent=1 // pred_check
      _
    $region59: #{tpu_custom_call.1} parent=1 // pred_check_branch
      %1229 = sbr.rel (0) target = $region61
    $region60: #{tpu_custom_call.1} parent=1 // pred_region
      %1230 = dma.done [#allocation4], 128
    $region61: #{tpu_custom_call.1} parent=1 // pred_fallthru
      _
    %1231 = vsyncpa [#allocation3], 1
    %1232 = vsyncpa [#allocation4], 1

// kernel: tpu_custom_call.1
$region0: #{tpu_custom_call.1}
  #allocation0 [shape = 'u32[]', space=smem, size = 0x4, offset = 0x4, fixed_abs, tag = 'smem constant byte address 0x4 - core index']
  #allocation1 [shape = 'u32[144,128]{1,0:T(1,128)}', space=vmem, size = 0x12000, scoped, tag = 'internal scratch']
  %s0 = inlined_call_operand.vmem [shape: f32[8,32], index: 0, kind: input, shape index: {}]
  %s1 = inlined_call_operand.vmem [shape: f32[32,384], index: 1, kind: input, shape index: {}]
  %s2 = inlined_call_operand.hbm [shape: f32[384,384], index: 2, kind: input, shape index: {}]
  %s3 = inlined_call_operand.vmem [shape: f32[384,96], index: 3, kind: input, shape index: {}]
  %s4 = inlined_call_operand.vmem [shape: f32[1,384], index: 4, kind: input, shape index: {}]
  %s5 = inlined_call_operand.vmem [shape: f32[1,384], index: 5, kind: input, shape index: {}]
  %s6 = inlined_call_operand.vmem [shape: f32[1,96], index: 6, kind: input, shape index: {}]
  %s7 = inlined_call_operand.vmem [shape: f32[32,8], index: 7, kind: input, shape index: {}]
  %s8 = inlined_call_operand.vmem [shape: f32[1,8], index: 8, kind: input, shape index: {}]
  %s9 = inlined_call_operand.vmem [shape: f32[8,8], index: 9, kind: input, shape index: {}]
  %s10 = inlined_call_operand.vmem [shape: f32[8,128], index: 10, kind: input, shape index: {}]
  %s11 = inlined_call_operand.vmem [shape: f32[128,128], index: 11, kind: input, shape index: {}]
  %s12 = inlined_call_operand.hbm [shape: f32[8,128], index: 12, kind: output, shape index: {}]
  %s13 = sld [smem:[#allocation0]]
  $region62: #{tpu_custom_call.1} parent=0
    _
  %s15 = ssub.s32 1, %s13
  %s16 = scalar_select 0, %s15, %s13
  $region1: #{tpu_custom_call.1} parent=0
    #allocation2 [shape = 'u8[589824]{0}', space=vmem, size = 0x90000, scoped, tag = 'input window, operand 2, single buffered']
    #allocation3 [shape = 's32[1]{0}', space=sflag, size = 0x4, scoped, tag = 'scoped memory for tpu_custom_call.1']
    #allocation4 [shape = 's32[1]{0}', space=sflag, size = 0x4, scoped, tag = 'scoped memory for tpu_custom_call.1']
    #allocation5 [shape = 'u8[4096]{0}', space=vmem, size = 0x1000, scoped, tag = 'output window, operand 0, single buffered']
    %17 = vsyncpa [#allocation3], 0
    %18 = vsyncpa [#allocation4], 0
    // Predicated region
    $region2: #{tpu_custom_call.1} parent=1 // pred_check
      _
    $region3: #{tpu_custom_call.1} parent=1 // pred_check_branch
      %20 = sbr.rel (0) target = $region5
    $region4: #{tpu_custom_call.1} parent=1 // pred_region
      _
    $region5: #{tpu_custom_call.1} parent=1 // pred_fallthru
      _
    // Predicated region
    $region6: #{tpu_custom_call.1} parent=1 // pred_check
      _
    $region7: #{tpu_custom_call.1} parent=1 // pred_check_branch
      %22 = sbr.rel (0) target = $region9
    $region8: #{tpu_custom_call.1} parent=1 // pred_region
      _
    $region9: #{tpu_custom_call.1} parent=1 // pred_fallthru
      _
    // Predicated region
    $region10: #{tpu_custom_call.1} parent=1 // pred_check
      _
    $region11: #{tpu_custom_call.1} parent=1 // pred_check_branch
      %24 = sbr.rel (0) target = $region13
    $region12: #{tpu_custom_call.1} parent=1 // pred_region
      %s26 = ssub.s32 18432, 18432
      %27 = vsyncadd [#allocation3], %s26
      %s28 = sshll.u32 [#allocation2], 4
      %s29 = int_to_ptr.vmem [resolvable:$true] %s28
      %34 = dma.hbm_to_vmem [thread:$0]  %s2, 18432, %s29, [#allocation3], 384, 384, 24
    $region13: #{tpu_custom_call.1} parent=1 // pred_fallthru
      _
    // Predicated region
    $region14: #{tpu_custom_call.1} parent=1 // pred_check
      _
    $region15: #{tpu_custom_call.1} parent=1 // pred_check_branch
      %36 = sbr.rel (0) target = $region17
    $region16: #{tpu_custom_call.1} parent=1 // pred_region
      _
    $region17: #{tpu_custom_call.1} parent=1 // pred_fallthru
      _
    // Predicated region
    $region18: #{tpu_custom_call.1} parent=1 // pred_check
      _
    $region19: #{tpu_custom_call.1} parent=1 // pred_check_branch
      %38 = sbr.rel (0) target = $region21
    $region20: #{tpu_custom_call.1} parent=1 // pred_region
      _
    $region21: #{tpu_custom_call.1} parent=1 // pred_fallthru
      _
    // Predicated region
    $region22: #{tpu_custom_call.1} parent=1 // pred_check
      _
    $region23: #{tpu_custom_call.1} parent=1 // pred_check_branch
      %40 = sbr.rel (0) target = $region25
    $region24: #{tpu_custom_call.1} parent=1 // pred_region
      _
    $region25: #{tpu_custom_call.1} parent=1 // pred_fallthru
      _
    // Predicated region
    $region26: #{tpu_custom_call.1} parent=1 // pred_check
      _
    $region27: #{tpu_custom_call.1} parent=1 // pred_check_branch
      %42 = sbr.rel (0) target = $region29
    $region28: #{tpu_custom_call.1} parent=1 // pred_region
      _
    $region29: #{tpu_custom_call.1} parent=1 // pred_fallthru
      _
    // Predicated region
    $region30: #{tpu_custom_call.1} parent=1 // pred_check
      _
    $region31: #{tpu_custom_call.1} parent=1 // pred_check_branch
      %44 = sbr.rel (0) target = $region33
    $region32: #{tpu_custom_call.1} parent=1 // pred_region
      _
    $region33: #{tpu_custom_call.1} parent=1 // pred_fallthru
      _
    // Predicated region
    $region34: #{tpu_custom_call.1} parent=1 // pred_check
      _
    $region35: #{tpu_custom_call.1} parent=1 // pred_check_branch
      %46 = sbr.rel (0) target = $region37
    $region36: #{tpu_custom_call.1} parent=1 // pred_region
      _
    $region37: #{tpu_custom_call.1} parent=1 // pred_fallthru
      _
    // Predicated region
    $region38: #{tpu_custom_call.1} parent=1 // pred_check
      _
    $region39: #{tpu_custom_call.1} parent=1 // pred_check_branch
      %48 = sbr.rel (0) target = $region41
    $region40: #{tpu_custom_call.1} parent=1 // pred_region
      _
    $region41: #{tpu_custom_call.1} parent=1 // pred_fallthru
      _
    // Predicated region
    $region42: #{tpu_custom_call.1} parent=1 // pred_check
      _
    $region43: #{tpu_custom_call.1} parent=1 // pred_check_branch
      %50 = sbr.rel (0) target = $region45
    $region44: #{tpu_custom_call.1} parent=1 // pred_region
      _
    $region45: #{tpu_custom_call.1} parent=1 // pred_fallthru
      _
    // Predicated region
    $region46: #{tpu_custom_call.1} parent=1 // pred_check
      _
    $region47: #{tpu_custom_call.1} parent=1 // pred_check_branch
      %52 = sbr.rel (0) target = $region49
    $region48: #{tpu_custom_call.1} parent=1 // pred_region
      _
    $region49: #{tpu_custom_call.1} parent=1 // pred_fallthru
      _
    // Predicated region
    $region50: #{tpu_custom_call.1} parent=1 // pred_check
      _
    $region51: #{tpu_custom_call.1} parent=1 // pred_check_branch
      %54 = sbr.rel (0) target = $region53
    $region52: #{tpu_custom_call.1} parent=1 // pred_region
      %55 = dma.done [#allocation3], 18432
    $region53: #{tpu_custom_call.1} parent=1 // pred_fallthru
      _
    %v56 = vld [vmem:[%s0] sm:$0xff]
    %v57 = vld [vmem:[%s1] sm:$0xff]
    %v58 = vld [vmem:[%s1 + $0x8] sm:$0xff]
    %v59 = vld [vmem:[%s1 + $0x10] sm:$0xff]
    %v60 = vld [vmem:[%s1 + $0x18] sm:$0xff]
    %v61 = vld [vmem:[%s1 + $0x20] sm:$0xff]
    %v62 = vld [vmem:[%s1 + $0x28] sm:$0xff]
    %v63 = vld [vmem:[%s1 + $0x30] sm:$0xff]
    %v64 = vld [vmem:[%s1 + $0x38] sm:$0xff]
    %v65 = vld [vmem:[%s1 + $0x40] sm:$0xff]
    %v66 = vld [vmem:[%s1 + $0x48] sm:$0xff]
    %v67 = vld [vmem:[%s1 + $0x50] sm:$0xff]
    %v68 = vld [vmem:[%s1 + $0x58] sm:$0xff]
    %v69 = vld [vmem:[%s4] sm:$0x7]
    %v71 = vlaneseq
    %v72 = vshrl.u32 %v71, 7
    %v73 = vsub.s32 0, %v72
    %v74 = vrot.slane %v69, %v73
    %v75 = vlaneseq
    %v76 = vshrl.u32 %v75, 7
    %v77 = vsub.s32 1, %v76
    %v78 = vrot.slane %v69, %v77
    %v79 = vlaneseq
    %v80 = vshrl.u32 %v79, 7
    %v81 = vsub.s32 2, %v80
    %v82 = vrot.slane %v69, %v81
    %vm86 = vcmask 261120
    %v88 = vsel %vm86, %v56, 0
    %90 = vmatprep.subr.mxu0 0.0
    %91 = vmatpush1.msra.mxu0 0.0
    %92 = vmatprep.subr.mxu0 0.0
    %93 = vmatpush1.msra.mxu0 0.0
    %94 = vmatprep.subr.mxu0 0.0
    %95 = vmatpush1.msra.mxu0 0.0
    %96 = vmatprep.subr.mxu0 0.0
    %97 = vmatpush1.msra.mxu0 0.0
    %98 = vmatprep.subr.mxu0 0.0
    %99 = vmatpush1.msra.mxu0 0.0
    %100 = vmatprep.subr.mxu0 0.0
    %101 = vmatpush1.msra.mxu0 0.0
    %102 = vmatprep.subr.mxu0 0.0
    %103 = vmatpush1.msra.mxu0 0.0
    %104 = vmatprep.subr.mxu0 0.0
    %105 = vmatpush1.msra.mxu0 0.0
    %106 = vmatprep.subr.mxu0 0.0
    %107 = vmatpush1.msra.mxu0 0.0
    %108 = vmatprep.subr.mxu0 0.0
    %109 = vmatpush1.msra.mxu0 0.0
    %110 = vmatprep.subr.mxu0 0.0
    %111 = vmatpush1.msra.mxu0 0.0
    %112 = vmatprep.subr.mxu0 0.0
    %113 = vmatpush1.msra.mxu0 0.0
    %114 = vmatprep.subr.mxu0 %v67
    %115 = vmatpush1.msra.mxu0 %v66
    %116 = vmatprep.subr.mxu0 %v64
    %117 = vmatpush1.msra.mxu0 %v63
    %118 = vmatprep.subr.mxu0 %v61
    %119 = vmatpush1.msra.mxu0 %v60
    %120 = vmatprep.subr.mxu0 %v58
    %121 = vmatpush1.msra.mxu0 %v57
    %122 = vmatprep.subr.mxu0 0.0
    %123 = vmatpush2.msra.mxu0 0.0
    %124 = vmatprep.subr.mxu0 0.0
    %125 = vmatpush2.msra.mxu0 0.0
    %126 = vmatprep.subr.mxu0 0.0
    %127 = vmatpush2.msra.mxu0 0.0
    %128 = vmatprep.subr.mxu0 0.0
    %129 = vmatpush2.msra.mxu0 0.0
    %130 = vmatprep.subr.mxu0 0.0
    %131 = vmatpush2.msra.mxu0 0.0
    %132 = vmatprep.subr.mxu0 0.0
    %133 = vmatpush2.msra.mxu0 0.0
    %134 = vmatprep.subr.mxu0 0.0
    %135 = vmatpush2.msra.mxu0 0.0
    %136 = vmatprep.subr.mxu0 0.0
    %137 = vmatpush2.msra.mxu0 0.0
    %138 = vmatprep.subr.mxu0 0.0
    %139 = vmatpush2.msra.mxu0 0.0
    %140 = vmatprep.subr.mxu0 0.0
    %141 = vmatpush2.msra.mxu0 0.0
    %142 = vmatprep.subr.mxu0 0.0
    %143 = vmatpush2.msra.mxu0 0.0
    %144 = vmatprep.subr.mxu0 0.0
    %145 = vmatpush2.msra.mxu0 0.0
    %146 = vmatprep.subr.mxu0 0.0
    %147 = vmatpush2.msra.mxu0 0.0
    %148 = vmatprep.subr.mxu0 0.0
    %149 = vmatpush2.msra.mxu0 0.0
    %150 = vmatprep.subr.mxu0 0.0
    %151 = vmatpush2.msra.mxu0 0.0
    %152 = vmatprep.subr.mxu0 0.0
    %153 = vmatpush2.msra.mxu0 0.0
    %154 = vmatprep.mubr.f32.mxu0 0.0
    %155 = vmatmul.mubr.f32.gmra.mxu0 %v88
    %v156 = vpop.f32.mrf.mxu0
    %v157 = vadd.f32 %v74, %v156
    %v158 = vpop.f32.mrf.mxu0
    %v159 = vadd.f32 %v78, %v158
    %160 = vdwg.mxu0
    %161 = vmatprep.subr.mxu0 0.0
    %162 = vmatpush1.msra.mxu0 0.0
    %163 = vmatprep.subr.mxu0 0.0
    %164 = vmatpush1.msra.mxu0 0.0
    %165 = vmatprep.subr.mxu0 0.0
    %166 = vmatpush1.msra.mxu0 0.0
    %167 = vmatprep.subr.mxu0 0.0
    %168 = vmatpush1.msra.mxu0 0.0
    %169 = vmatprep.subr.mxu0 0.0
    %170 = vmatpush1.msra.mxu0 0.0
    %171 = vmatprep.subr.mxu0 0.0
    %172 = vmatpush1.msra.mxu0 0.0
    %173 = vmatprep.subr.mxu0 0.0
    %174 = vmatpush1.msra.mxu0 0.0
    %175 = vmatprep.subr.mxu0 0.0
    %176 = vmatpush1.msra.mxu0 0.0
    %177 = vmatprep.subr.mxu0 0.0
    %178 = vmatpush1.msra.mxu0 0.0
    %179 = vmatprep.subr.mxu0 0.0
    %180 = vmatpush1.msra.mxu0 0.0
    %181 = vmatprep.subr.mxu0 0.0
    %182 = vmatpush1.msra.mxu0 0.0
    %183 = vmatprep.subr.mxu0 0.0
    %184 = vmatpush1.msra.mxu0 0.0
    %185 = vmatprep.subr.mxu0 0.0
    %186 = vmatpush1.msra.mxu0 %v68
    %187 = vmatprep.subr.mxu0 0.0
    %188 = vmatpush1.msra.mxu0 %v65
    %189 = vmatprep.subr.mxu0 0.0
    %190 = vmatpush1.msra.mxu0 %v62
    %191 = vmatprep.subr.mxu0 0.0
    %192 = vmatpush1.msra.mxu0 %v59
    %193 = vmatprep.subr.mxu0 0.0
    %194 = vmatpush2.msra.mxu0 0.0
    %195 = vmatprep.subr.mxu0 0.0
    %196 = vmatpush2.msra.mxu0 0.0
    %197 = vmatprep.subr.mxu0 0.0
    %198 = vmatpush2.msra.mxu0 0.0
    %199 = vmatprep.subr.mxu0 0.0
    %200 = vmatpush2.msra.mxu0 0.0
    %201 = vmatprep.subr.mxu0 0.0
    %202 = vmatpush2.msra.mxu0 0.0
    %203 = vmatprep.subr.mxu0 0.0
    %204 = vmatpush2.msra.mxu0 0.0
    %205 = vmatprep.subr.mxu0 0.0
    %206 = vmatpush2.msra.mxu0 0.0
    %207 = vmatprep.subr.mxu0 0.0
    %208 = vmatpush2.msra.mxu0 0.0
    %209 = vmatprep.subr.mxu0 0.0
    %210 = vmatpush2.msra.mxu0 0.0
    %211 = vmatprep.subr.mxu0 0.0
    %212 = vmatpush2.msra.mxu0 0.0
    %213 = vmatprep.subr.mxu0 0.0
    %214 = vmatpush2.msra.mxu0 0.0
    %215 = vmatprep.subr.mxu0 0.0
    %216 = vmatpush2.msra.mxu0 0.0
    %217 = vmatprep.subr.mxu0 0.0
    %218 = vmatpush2.msra.mxu0 0.0
    %219 = vmatprep.subr.mxu0 0.0
    %220 = vmatpush2.msra.mxu0 0.0
    %221 = vmatprep.subr.mxu0 0.0
    %222 = vmatpush2.msra.mxu0 0.0
    %223 = vmatprep.subr.mxu0 0.0
    %224 = vmatpush2.msra.mxu0 0.0
    %225 = vmatprep.mubr.f32.mxu0 0.0
    %226 = vmatmul.mubr.f32.gmra.mxu0 %v88
    %v227 = vpop.f32.mrf.mxu0
    %v228 = vadd.f32 %v82, %v227
    %v229 = vpop.f32.mrf.mxu0
    %230 = vdwg.mxu0
    %v231 = vmax.f32 %v157, 0.0
    %v232 = vmax.f32 %v159, 0.0
    %v233 = vmax.f32 %v228, 0.0
    %v234 = vld [vmem:[#allocation2] sm:$0xff]
    %v235 = vld [vmem:[#allocation2 + $0x8] sm:$0xff]
    %v236 = vld [vmem:[#allocation2 + $0x10] sm:$0xff]
    %v237 = vld [vmem:[#allocation2 + $0x18] sm:$0xff]
    %v238 = vld [vmem:[#allocation2 + $0x20] sm:$0xff]
    %v239 = vld [vmem:[#allocation2 + $0x28] sm:$0xff]
    %v240 = vld [vmem:[#allocation2 + $0x30] sm:$0xff]
    %v241 = vld [vmem:[#allocation2 + $0x38] sm:$0xff]
    %v242 = vld [vmem:[#allocation2 + $0x40] sm:$0xff]
    %v243 = vld [vmem:[#allocation2 + $0x48] sm:$0xff]
    %v244 = vld [vmem:[#allocation2 + $0x50] sm:$0xff]
    %v245 = vld [vmem:[#allocation2 + $0x58] sm:$0xff]
    %v246 = vld [vmem:[#allocation2 + $0x60] sm:$0xff]
    %v247 = vld [vmem:[#allocation2 + $0x68] sm:$0xff]
    %v248 = vld [vmem:[#allocation2 + $0x70] sm:$0xff]
    %v249 = vld [vmem:[#allocation2 + $0x78] sm:$0xff]
    %v250 = vld [vmem:[#allocation2 + $0x80] sm:$0xff]
    %v251 = vld [vmem:[#allocation2 + $0x88] sm:$0xff]
    %v252 = vld [vmem:[#allocation2 + $0x90] sm:$0xff]
    %v253 = vld [vmem:[#allocation2 + $0x98] sm:$0xff]
    %v254 = vld [vmem:[#allocation2 + $0xa0] sm:$0xff]
    %v255 = vld [vmem:[#allocation2 + $0xa8] sm:$0xff]
    %v256 = vld [vmem:[#allocation2 + $0xb0] sm:$0xff]
    %v257 = vld [vmem:[#allocation2 + $0xb8] sm:$0xff]
    %v258 = vld [vmem:[#allocation2 + $0xc0] sm:$0xff]
    %v259 = vld [vmem:[#allocation2 + $0xc8] sm:$0xff]
    %v260 = vld [vmem:[#allocation2 + $0xd0] sm:$0xff]
    %v261 = vld [vmem:[#allocation2 + $0xd8] sm:$0xff]
    %v262 = vld [vmem:[#allocation2 + $0xe0] sm:$0xff]
    %v263 = vld [vmem:[#allocation2 + $0xe8] sm:$0xff]
    %v264 = vld [vmem:[#allocation2 + $0xf0] sm:$0xff]
    %v265 = vld [vmem:[#allocation2 + $0xf8] sm:$0xff]
    %v266 = vld [vmem:[#allocation2 + $0x100] sm:$0xff]
    %v267 = vld [vmem:[#allocation2 + $0x108] sm:$0xff]
    %v268 = vld [vmem:[#allocation2 + $0x110] sm:$0xff]
    %v269 = vld [vmem:[#allocation2 + $0x118] sm:$0xff]
    %v270 = vld [vmem:[#allocation2 + $0x120] sm:$0xff]
    %v271 = vld [vmem:[#allocation2 + $0x128] sm:$0xff]
    %v272 = vld [vmem:[#allocation2 + $0x130] sm:$0xff]
    %v273 = vld [vmem:[#allocation2 + $0x138] sm:$0xff]
    %v274 = vld [vmem:[#allocation2 + $0x140] sm:$0xff]
    %v275 = vld [vmem:[#allocation2 + $0x148] sm:$0xff]
    %v276 = vld [vmem:[#allocation2 + $0x150] sm:$0xff]
    %v277 = vld [vmem:[#allocation2 + $0x158] sm:$0xff]
    %v278 = vld [vmem:[#allocation2 + $0x160] sm:$0xff]
    %v279 = vld [vmem:[#allocation2 + $0x168] sm:$0xff]
    %v280 = vld [vmem:[#allocation2 + $0x170] sm:$0xff]
    %v281 = vld [vmem:[#allocation2 + $0x178] sm:$0xff]
    %v282 = vld [vmem:[#allocation2 + $0x180] sm:$0xff]
    %v283 = vld [vmem:[#allocation2 + $0x188] sm:$0xff]
    %v284 = vld [vmem:[#allocation2 + $0x190] sm:$0xff]
    %v285 = vld [vmem:[#allocation2 + $0x198] sm:$0xff]
    %v286 = vld [vmem:[#allocation2 + $0x1a0] sm:$0xff]
    %v287 = vld [vmem:[#allocation2 + $0x1a8] sm:$0xff]
    %v288 = vld [vmem:[#allocation2 + $0x1b0] sm:$0xff]
    %v289 = vld [vmem:[#allocation2 + $0x1b8] sm:$0xff]
    %v290 = vld [vmem:[#allocation2 + $0x1c0] sm:$0xff]
    %v291 = vld [vmem:[#allocation2 + $0x1c8] sm:$0xff]
    %v292 = vld [vmem:[#allocation2 + $0x1d0] sm:$0xff]
    %v293 = vld [vmem:[#allocation2 + $0x1d8] sm:$0xff]
    %v294 = vld [vmem:[#allocation2 + $0x1e0] sm:$0xff]
    %v295 = vld [vmem:[#allocation2 + $0x1e8] sm:$0xff]
    %v296 = vld [vmem:[#allocation2 + $0x1f0] sm:$0xff]
    %v297 = vld [vmem:[#allocation2 + $0x1f8] sm:$0xff]
    %v298 = vld [vmem:[#allocation2 + $0x200] sm:$0xff]
    %v299 = vld [vmem:[#allocation2 + $0x208] sm:$0xff]
    %v300 = vld [vmem:[#allocation2 + $0x210] sm:$0xff]
    %v301 = vld [vmem:[#allocation2 + $0x218] sm:$0xff]
    %v302 = vld [vmem:[#allocation2 + $0x220] sm:$0xff]
    %v303 = vld [vmem:[#allocation2 + $0x228] sm:$0xff]
    %v304 = vld [vmem:[#allocation2 + $0x230] sm:$0xff]
    %v305 = vld [vmem:[#allocation2 + $0x238] sm:$0xff]
    %v306 = vld [vmem:[#allocation2 + $0x240] sm:$0xff]
    %v307 = vld [vmem:[#allocation2 + $0x248] sm:$0xff]
    %v308 = vld [vmem:[#allocation2 + $0x250] sm:$0xff]
    %v309 = vld [vmem:[#allocation2 + $0x258] sm:$0xff]
    %v310 = vld [vmem:[#allocation2 + $0x260] sm:$0xff]
    %v311 = vld [vmem:[#allocation2 + $0x268] sm:$0xff]
    %v312 = vld [vmem:[#allocation2 + $0x270] sm:$0xff]
    %v313 = vld [vmem:[#allocation2 + $0x278] sm:$0xff]
    %v314 = vld [vmem:[#allocation2 + $0x280] sm:$0xff]
    %v315 = vld [vmem:[#allocation2 + $0x288] sm:$0xff]
    %v316 = vld [vmem:[#allocation2 + $0x290] sm:$0xff]
    %v317 = vld [vmem:[#allocation2 + $0x298] sm:$0xff]
    %v318 = vld [vmem:[#allocation2 + $0x2a0] sm:$0xff]
    %v319 = vld [vmem:[#allocation2 + $0x2a8] sm:$0xff]
    %v320 = vld [vmem:[#allocation2 + $0x2b0] sm:$0xff]
    %v321 = vld [vmem:[#allocation2 + $0x2b8] sm:$0xff]
    %v322 = vld [vmem:[#allocation2 + $0x2c0] sm:$0xff]
    %v323 = vld [vmem:[#allocation2 + $0x2c8] sm:$0xff]
    %v324 = vld [vmem:[#allocation2 + $0x2d0] sm:$0xff]
    %v325 = vld [vmem:[#allocation2 + $0x2d8] sm:$0xff]
    %v326 = vld [vmem:[#allocation2 + $0x2e0] sm:$0xff]
    %v327 = vld [vmem:[#allocation2 + $0x2e8] sm:$0xff]
    %v328 = vld [vmem:[#allocation2 + $0x2f0] sm:$0xff]
    %v329 = vld [vmem:[#allocation2 + $0x2f8] sm:$0xff]
    %v330 = vld [vmem:[#allocation2 + $0x300] sm:$0xff]
    %v331 = vld [vmem:[#allocation2 + $0x308] sm:$0xff]
    %v332 = vld [vmem:[#allocation2 + $0x310] sm:$0xff]
    %v333 = vld [vmem:[#allocation2 + $0x318] sm:$0xff]
    %v334 = vld [vmem:[#allocation2 + $0x320] sm:$0xff]
    %v335 = vld [vmem:[#allocation2 + $0x328] sm:$0xff]
    %v336 = vld [vmem:[#allocation2 + $0x330] sm:$0xff]
    %v337 = vld [vmem:[#allocation2 + $0x338] sm:$0xff]
    %v338 = vld [vmem:[#allocation2 + $0x340] sm:$0xff]
    %v339 = vld [vmem:[#allocation2 + $0x348] sm:$0xff]
    %v340 = vld [vmem:[#allocation2 + $0x350] sm:$0xff]
    %v341 = vld [vmem:[#allocation2 + $0x358] sm:$0xff]
    %v342 = vld [vmem:[#allocation2 + $0x360] sm:$0xff]
    %v343 = vld [vmem:[#allocation2 + $0x368] sm:$0xff]
    %v344 = vld [vmem:[#allocation2 + $0x370] sm:$0xff]
    %v345 = vld [vmem:[#allocation2 + $0x378] sm:$0xff]
    %v346 = vld [vmem:[#allocation2 + $0x380] sm:$0xff]
    %v347 = vld [vmem:[#allocation2 + $0x388] sm:$0xff]
    %v348 = vld [vmem:[#allocation2 + $0x390] sm:$0xff]
    %v349 = vld [vmem:[#allocation2 + $0x398] sm:$0xff]
    %v350 = vld [vmem:[#allocation2 + $0x3a0] sm:$0xff]
    %v351 = vld [vmem:[#allocation2 + $0x3a8] sm:$0xff]
    %v352 = vld [vmem:[#allocation2 + $0x3b0] sm:$0xff]
    %v353 = vld [vmem:[#allocation2 + $0x3b8] sm:$0xff]
    %v354 = vld [vmem:[#allocation2 + $0x3c0] sm:$0xff]
    %v355 = vld [vmem:[#allocation2 + $0x3c8] sm:$0xff]
    %v356 = vld [vmem:[#allocation2 + $0x3d0] sm:$0xff]
    %v357 = vld [vmem:[#allocation2 + $0x3d8] sm:$0xff]
    %v358 = vld [vmem:[#allocation2 + $0x3e0] sm:$0xff]
    %v359 = vld [vmem:[#allocation2 + $0x3e8] sm:$0xff]
    %v360 = vld [vmem:[#allocation2 + $0x3f0] sm:$0xff]
    %v361 = vld [vmem:[#allocation2 + $0x3f8] sm:$0xff]
    %v362 = vld [vmem:[#allocation2 + $0x400] sm:$0xff]
    %v363 = vld [vmem:[#allocation2 + $0x408] sm:$0xff]
    %v364 = vld [vmem:[#allocation2 + $0x410] sm:$0xff]
    %v365 = vld [vmem:[#allocation2 + $0x418] sm:$0xff]
    %v366 = vld [vmem:[#allocation2 + $0x420] sm:$0xff]
    %v367 = vld [vmem:[#allocation2 + $0x428] sm:$0xff]
    %v368 = vld [vmem:[#allocation2 + $0x430] sm:$0xff]
    %v369 = vld [vmem:[#allocation2 + $0x438] sm:$0xff]
    %v370 = vld [vmem:[#allocation2 + $0x440] sm:$0xff]
    %v371 = vld [vmem:[#allocation2 + $0x448] sm:$0xff]
    %v372 = vld [vmem:[#allocation2 + $0x450] sm:$0xff]
    %v373 = vld [vmem:[#allocation2 + $0x458] sm:$0xff]
    %v374 = vld [vmem:[#allocation2 + $0x460] sm:$0xff]
    %v375 = vld [vmem:[#allocation2 + $0x468] sm:$0xff]
    %v376 = vld [vmem:[#allocation2 + $0x470] sm:$0xff]
    %v377 = vld [vmem:[#allocation2 + $0x478] sm:$0xff]
    %v378 = vld [vmem:[%s5] sm:$0x7]
    %v380 = vlaneseq
    %v381 = vshrl.u32 %v380, 7
    %v382 = vsub.s32 0, %v381
    %v383 = vrot.slane %v378, %v382
    %v384 = vlaneseq
    %v385 = vshrl.u32 %v384, 7
    %v386 = vsub.s32 1, %v385
    %v387 = vrot.slane %v378, %v386
    %v388 = vlaneseq
    %v389 = vshrl.u32 %v388, 7
    %v390 = vsub.s32 2, %v389
    %v391 = vrot.slane %v378, %v390
    %395 = vmatprep.subr.mxu0 %v280
    %396 = vmatpush1.msra.mxu0 %v279
    %397 = vmatprep.subr.mxu0 %v277
    %398 = vmatpush1.msra.mxu0 %v276
    %399 = vmatprep.subr.mxu0 %v274
    %400 = vmatpush1.msra.mxu0 %v273
    %401 = vmatprep.subr.mxu0 %v271
    %402 = vmatpush1.msra.mxu0 %v270
    %403 = vmatprep.subr.mxu0 %v268
    %404 = vmatpush1.msra.mxu0 %v267
    %405 = vmatprep.subr.mxu0 %v265
    %406 = vmatpush1.msra.mxu0 %v264
    %407 = vmatprep.subr.mxu0 %v262
    %408 = vmatpush1.msra.mxu0 %v261
    %409 = vmatprep.subr.mxu0 %v259
    %410 = vmatpush1.msra.mxu0 %v258
    %411 = vmatprep.subr.mxu0 %v256
    %412 = vmatpush1.msra.mxu0 %v255
    %413 = vmatprep.subr.mxu0 %v253
    %414 = vmatpush1.msra.mxu0 %v252
    %415 = vmatprep.subr.mxu0 %v250
    %416 = vmatpush1.msra.mxu0 %v249
    %417 = vmatprep.subr.mxu0 %v247
    %418 = vmatpush1.msra.mxu0 %v246
    %419 = vmatprep.subr.mxu0 %v244
    %420 = vmatpush1.msra.mxu0 %v243
    %421 = vmatprep.subr.mxu0 %v241
    %422 = vmatpush1.msra.mxu0 %v240
    %423 = vmatprep.subr.mxu0 %v238
    %424 = vmatpush1.msra.mxu0 %v237
    %425 = vmatprep.subr.mxu0 %v235
    %426 = vmatpush1.msra.mxu0 %v234
    %427 = vmatprep.subr.mxu0 %v328
    %428 = vmatpush2.msra.mxu0 %v327
    %429 = vmatprep.subr.mxu0 %v325
    %430 = vmatpush2.msra.mxu0 %v324
    %431 = vmatprep.subr.mxu0 %v322
    %432 = vmatpush2.msra.mxu0 %v321
    %433 = vmatprep.subr.mxu0 %v319
    %434 = vmatpush2.msra.mxu0 %v318
    %435 = vmatprep.subr.mxu0 %v316
    %436 = vmatpush2.msra.mxu0 %v315
    %437 = vmatprep.subr.mxu0 %v313
    %438 = vmatpush2.msra.mxu0 %v312
    %439 = vmatprep.subr.mxu0 %v310
    %440 = vmatpush2.msra.mxu0 %v309
    %441 = vmatprep.subr.mxu0 %v307
    %442 = vmatpush2.msra.mxu0 %v306
    %443 = vmatprep.subr.mxu0 %v304
    %444 = vmatpush2.msra.mxu0 %v303
    %445 = vmatprep.subr.mxu0 %v301
    %446 = vmatpush2.msra.mxu0 %v300
    %447 = vmatprep.subr.mxu0 %v298
    %448 = vmatpush2.msra.mxu0 %v297
    %449 = vmatprep.subr.mxu0 %v295
    %450 = vmatpush2.msra.mxu0 %v294
    %451 = vmatprep.subr.mxu0 %v292
    %452 = vmatpush2.msra.mxu0 %v291
    %453 = vmatprep.subr.mxu0 %v289
    %454 = vmatpush2.msra.mxu0 %v288
    %455 = vmatprep.subr.mxu0 %v286
    %456 = vmatpush2.msra.mxu0 %v285
    %457 = vmatprep.subr.mxu0 %v283
    %458 = vmatpush2.msra.mxu0 %v282
    %459 = vmatprep.mubr.f32.mxu0 %v232
    %460 = vmatmul.mubr.f32.gmra.mxu0 %v231
    %v461 = vpop.f32.mrf.mxu0
    %v462 = vadd.f32 %v383, %v461
    %v463 = vpop.f32.mrf.mxu0
    %v464 = vadd.f32 %v387, %v463
    %465 = vdwg.mxu0
    %466 = vmatprep.subr.mxu0 %v376
    %467 = vmatpush1.msra.mxu0 %v375
    %468 = vmatprep.subr.mxu0 %v373
    %469 = vmatpush1.msra.mxu0 %v372
    %470 = vmatprep.subr.mxu0 %v370
    %471 = vmatpush1.msra.mxu0 %v369
    %472 = vmatprep.subr.mxu0 %v367
    %473 = vmatpush1.msra.mxu0 %v366
    %474 = vmatprep.subr.mxu0 %v364
    %475 = vmatpush1.msra.mxu0 %v363
    %476 = vmatprep.subr.mxu0 %v361
    %477 = vmatpush1.msra.mxu0 %v360
    %478 = vmatprep.subr.mxu0 %v358
    %479 = vmatpush1.msra.mxu0 %v357
    %480 = vmatprep.subr.mxu0 %v355
    %481 = vmatpush1.msra.mxu0 %v354
    %482 = vmatprep.subr.mxu0 %v352
    %483 = vmatpush1.msra.mxu0 %v351
    %484 = vmatprep.subr.mxu0 %v349
    %485 = vmatpush1.msra.mxu0 %v348
    %486 = vmatprep.subr.mxu0 %v346
    %487 = vmatpush1.msra.mxu0 %v345
    %488 = vmatprep.subr.mxu0 %v343
    %489 = vmatpush1.msra.mxu0 %v342
    %490 = vmatprep.subr.mxu0 %v340
    %491 = vmatpush1.msra.mxu0 %v339
    %492 = vmatprep.subr.mxu0 %v337
    %493 = vmatpush1.msra.mxu0 %v336
    %494 = vmatprep.subr.mxu0 %v334
    %495 = vmatpush1.msra.mxu0 %v333
    %496 = vmatprep.subr.mxu0 %v331
    %497 = vmatpush1.msra.mxu0 %v330
    %498 = vmatprep.subr.mxu0 0.0
    %499 = vmatpush2.msra.mxu0 0.0
    %500 = vmatprep.subr.mxu0 0.0
    %501 = vmatpush2.msra.mxu0 0.0
    %502 = vmatprep.subr.mxu0 0.0
    %503 = vmatpush2.msra.mxu0 0.0
    %504 = vmatprep.subr.mxu0 0.0
    %505 = vmatpush2.msra.mxu0 0.0
    %506 = vmatprep.subr.mxu0 0.0
    %507 = vmatpush2.msra.mxu0 0.0
    %508 = vmatprep.subr.mxu0 0.0
    %509 = vmatpush2.msra.mxu0 0.0
    %510 = vmatprep.subr.mxu0 0.0
    %511 = vmatpush2.msra.mxu0 0.0
    %512 = vmatprep.subr.mxu0 0.0
    %513 = vmatpush2.msra.mxu0 0.0
    %514 = vmatprep.subr.mxu0 0.0
    %515 = vmatpush2.msra.mxu0 0.0
    %516 = vmatprep.subr.mxu0 0.0
    %517 = vmatpush2.msra.mxu0 0.0
    %518 = vmatprep.subr.mxu0 0.0
    %519 = vmatpush2.msra.mxu0 0.0
    %520 = vmatprep.subr.mxu0 0.0
    %521 = vmatpush2.msra.mxu0 0.0
    %522 = vmatprep.subr.mxu0 0.0
    %523 = vmatpush2.msra.mxu0 0.0
    %524 = vmatprep.subr.mxu0 0.0
    %525 = vmatpush2.msra.mxu0 0.0
    %526 = vmatprep.subr.mxu0 0.0
    %527 = vmatpush2.msra.mxu0 0.0
    %528 = vmatprep.subr.mxu0 0.0
    %529 = vmatpush2.msra.mxu0 0.0
    %530 = vmatprep.mubr.f32.mxu0 0.0
    %531 = vmatmul.mubr.f32.gmra.mxu0 %v233
    %v532 = vpop.f32.mrf.mxu0
    %v533 = vadd.f32 %v462, %v532
    %v534 = vpop.f32.mrf.mxu0
    %v535 = vadd.f32 %v464, %v534
    %536 = vdwg.mxu0
    %537 = vmatprep.subr.mxu0 0.0
    %538 = vmatpush1.msra.mxu0 %v281
    %539 = vmatprep.subr.mxu0 0.0
    %540 = vmatpush1.msra.mxu0 %v278
    %541 = vmatprep.subr.mxu0 0.0
    %542 = vmatpush1.msra.mxu0 %v275
    %543 = vmatprep.subr.mxu0 0.0
    %544 = vmatpush1.msra.mxu0 %v272
    %545 = vmatprep.subr.mxu0 0.0
    %546 = vmatpush1.msra.mxu0 %v269
    %547 = vmatprep.subr.mxu0 0.0
    %548 = vmatpush1.msra.mxu0 %v266
    %549 = vmatprep.subr.mxu0 0.0
    %550 = vmatpush1.msra.mxu0 %v263
    %551 = vmatprep.subr.mxu0 0.0
    %552 = vmatpush1.msra.mxu0 %v260
    %553 = vmatprep.subr.mxu0 0.0
    %554 = vmatpush1.msra.mxu0 %v257
    %555 = vmatprep.subr.mxu0 0.0
    %556 = vmatpush1.msra.mxu0 %v254
    %557 = vmatprep.subr.mxu0 0.0
    %558 = vmatpush1.msra.mxu0 %v251
    %559 = vmatprep.subr.mxu0 0.0
    %560 = vmatpush1.msra.mxu0 %v248
    %561 = vmatprep.subr.mxu0 0.0
    %562 = vmatpush1.msra.mxu0 %v245
    %563 = vmatprep.subr.mxu0 0.0
    %564 = vmatpush1.msra.mxu0 %v242
    %565 = vmatprep.subr.mxu0 0.0
    %566 = vmatpush1.msra.mxu0 %v239
    %567 = vmatprep.subr.mxu0 0.0
    %568 = vmatpush1.msra.mxu0 %v236
    %569 = vmatprep.subr.mxu0 0.0
    %570 = vmatpush2.msra.mxu0 %v329
    %571 = vmatprep.subr.mxu0 0.0
    %572 = vmatpush2.msra.mxu0 %v326
    %573 = vmatprep.subr.mxu0 0.0
    %574 = vmatpush2.msra.mxu0 %v323
    %575 = vmatprep.subr.mxu0 0.0
    %576 = vmatpush2.msra.mxu0 %v320
    %577 = vmatprep.subr.mxu0 0.0
    %578 = vmatpush2.msra.mxu0 %v317
    %579 = vmatprep.subr.mxu0 0.0
    %580 = vmatpush2.msra.mxu0 %v314
    %581 = vmatprep.subr.mxu0 0.0
    %582 = vmatpush2.msra.mxu0 %v311
    %583 = vmatprep.subr.mxu0 0.0
    %584 = vmatpush2.msra.mxu0 %v308
    %585 = vmatprep.subr.mxu0 0.0
    %586 = vmatpush2.msra.mxu0 %v305
    %587 = vmatprep.subr.mxu0 0.0
    %588 = vmatpush2.msra.mxu0 %v302
    %589 = vmatprep.subr.mxu0 0.0
    %590 = vmatpush2.msra.mxu0 %v299
    %591 = vmatprep.subr.mxu0 0.0
    %592 = vmatpush2.msra.mxu0 %v296
    %593 = vmatprep.subr.mxu0 0.0
    %594 = vmatpush2.msra.mxu0 %v293
    %595 = vmatprep.subr.mxu0 0.0
    %596 = vmatpush2.msra.mxu0 %v290
    %597 = vmatprep.subr.mxu0 0.0
    %598 = vmatpush2.msra.mxu0 %v287
    %599 = vmatprep.subr.mxu0 0.0
    %600 = vmatpush2.msra.mxu0 %v284
    %601 = vmatprep.mubr.f32.mxu0 %v232
    %602 = vmatmul.mubr.f32.gmra.mxu0 %v231
    %v603 = vpop.f32.mrf.mxu0
    %v604 = vadd.f32 %v391, %v603
    %v605 = vpop.f32.mrf.mxu0
    %606 = vdwg.mxu0
    %607 = vmatprep.subr.mxu0 0.0
    %608 = vmatpush1.msra.mxu0 %v377
    %609 = vmatprep.subr.mxu0 0.0
    %610 = vmatpush1.msra.mxu0 %v374
    %611 = vmatprep.subr.mxu0 0.0
    %612 = vmatpush1.msra.mxu0 %v371
    %613 = vmatprep.subr.mxu0 0.0
    %614 = vmatpush1.msra.mxu0 %v368
    %615 = vmatprep.subr.mxu0 0.0
    %616 = vmatpush1.msra.mxu0 %v365
    %617 = vmatprep.subr.mxu0 0.0
    %618 = vmatpush1.msra.mxu0 %v362
    %619 = vmatprep.subr.mxu0 0.0
    %620 = vmatpush1.msra.mxu0 %v359
    %621 = vmatprep.subr.mxu0 0.0
    %622 = vmatpush1.msra.mxu0 %v356
    %623 = vmatprep.subr.mxu0 0.0
    %624 = vmatpush1.msra.mxu0 %v353
    %625 = vmatprep.subr.mxu0 0.0
    %626 = vmatpush1.msra.mxu0 %v350
    %627 = vmatprep.subr.mxu0 0.0
    %628 = vmatpush1.msra.mxu0 %v347
    %629 = vmatprep.subr.mxu0 0.0
    %630 = vmatpush1.msra.mxu0 %v344
    %631 = vmatprep.subr.mxu0 0.0
    %632 = vmatpush1.msra.mxu0 %v341
    %633 = vmatprep.subr.mxu0 0.0
    %634 = vmatpush1.msra.mxu0 %v338
    %635 = vmatprep.subr.mxu0 0.0
    %636 = vmatpush1.msra.mxu0 %v335
    %637 = vmatprep.subr.mxu0 0.0
    %638 = vmatpush1.msra.mxu0 %v332
    %639 = vmatprep.subr.mxu0 0.0
    %640 = vmatpush2.msra.mxu0 0.0
    %641 = vmatprep.subr.mxu0 0.0
    %642 = vmatpush2.msra.mxu0 0.0
    %643 = vmatprep.subr.mxu0 0.0
    %644 = vmatpush2.msra.mxu0 0.0
    %645 = vmatprep.subr.mxu0 0.0
    %646 = vmatpush2.msra.mxu0 0.0
    %647 = vmatprep.subr.mxu0 0.0
    %648 = vmatpush2.msra.mxu0 0.0
    %649 = vmatprep.subr.mxu0 0.0
    %650 = vmatpush2.msra.mxu0 0.0
    %651 = vmatprep.subr.mxu0 0.0
    %652 = vmatpush2.msra.mxu0 0.0
    %653 = vmatprep.subr.mxu0 0.0
    %654 = vmatpush2.msra.mxu0 0.0
    %655 = vmatprep.subr.mxu0 0.0
    %656 = vmatpush2.msra.mxu0 0.0
    %657 = vmatprep.subr.mxu0 0.0
    %658 = vmatpush2.msra.mxu0 0.0
    %659 = vmatprep.subr.mxu0 0.0
    %660 = vmatpush2.msra.mxu0 0.0
    %661 = vmatprep.subr.mxu0 0.0
    %662 = vmatpush2.msra.mxu0 0.0
    %663 = vmatprep.subr.mxu0 0.0
    %664 = vmatpush2.msra.mxu0 0.0
    %665 = vmatprep.subr.mxu0 0.0
    %666 = vmatpush2.msra.mxu0 0.0
    %667 = vmatprep.subr.mxu0 0.0
    %668 = vmatpush2.msra.mxu0 0.0
    %669 = vmatprep.subr.mxu0 0.0
    %670 = vmatpush2.msra.mxu0 0.0
    %671 = vmatprep.mubr.f32.mxu0 0.0
    %672 = vmatmul.mubr.f32.gmra.mxu0 %v233
    %v673 = vpop.f32.mrf.mxu0
    %v674 = vadd.f32 %v604, %v673
    %v675 = vpop.f32.mrf.mxu0
    %676 = vdwg.mxu0
    %v677 = vmax.f32 %v533, 0.0
    %v678 = vmax.f32 %v535, 0.0
    %v679 = vmax.f32 %v674, 0.0
    %v680 = vld [vmem:[%s3] sm:$0xff]
    %v681 = vld [vmem:[%s3 + $0x8] sm:$0xff]
    %v682 = vld [vmem:[%s3 + $0x10] sm:$0xff]
    %v683 = vld [vmem:[%s3 + $0x18] sm:$0xff]
    %v684 = vld [vmem:[%s3 + $0x20] sm:$0xff]
    %v685 = vld [vmem:[%s3 + $0x28] sm:$0xff]
    %v686 = vld [vmem:[%s3 + $0x30] sm:$0xff]
    %v687 = vld [vmem:[%s3 + $0x38] sm:$0xff]
    %v688 = vld [vmem:[%s3 + $0x40] sm:$0xff]
    %v689 = vld [vmem:[%s3 + $0x48] sm:$0xff]
    %v690 = vld [vmem:[%s3 + $0x50] sm:$0xff]
    %v691 = vld [vmem:[%s3 + $0x58] sm:$0xff]
    %v692 = vld [vmem:[%s3 + $0x60] sm:$0xff]
    %v693 = vld [vmem:[%s3 + $0x68] sm:$0xff]
    %v694 = vld [vmem:[%s3 + $0x70] sm:$0xff]
    %v695 = vld [vmem:[%s3 + $0x78] sm:$0xff]
    %v696 = vld [vmem:[%s3 + $0x80] sm:$0xff]
    %v697 = vld [vmem:[%s3 + $0x88] sm:$0xff]
    %v698 = vld [vmem:[%s3 + $0x90] sm:$0xff]
    %v699 = vld [vmem:[%s3 + $0x98] sm:$0xff]
    %v700 = vld [vmem:[%s3 + $0xa0] sm:$0xff]
    %v701 = vld [vmem:[%s3 + $0xa8] sm:$0xff]
    %v702 = vld [vmem:[%s3 + $0xb0] sm:$0xff]
    %v703 = vld [vmem:[%s3 + $0xb8] sm:$0xff]
    %v704 = vld [vmem:[%s3 + $0xc0] sm:$0xff]
    %v705 = vld [vmem:[%s3 + $0xc8] sm:$0xff]
    %v706 = vld [vmem:[%s3 + $0xd0] sm:$0xff]
    %v707 = vld [vmem:[%s3 + $0xd8] sm:$0xff]
    %v708 = vld [vmem:[%s3 + $0xe0] sm:$0xff]
    %v709 = vld [vmem:[%s3 + $0xe8] sm:$0xff]
    %v710 = vld [vmem:[%s3 + $0xf0] sm:$0xff]
    %v711 = vld [vmem:[%s3 + $0xf8] sm:$0xff]
    %v712 = vld [vmem:[%s3 + $0x100] sm:$0xff]
    %v713 = vld [vmem:[%s3 + $0x108] sm:$0xff]
    %v714 = vld [vmem:[%s3 + $0x110] sm:$0xff]
    %v715 = vld [vmem:[%s3 + $0x118] sm:$0xff]
    %v716 = vld [vmem:[%s3 + $0x120] sm:$0xff]
    %v717 = vld [vmem:[%s3 + $0x128] sm:$0xff]
    %v718 = vld [vmem:[%s3 + $0x130] sm:$0xff]
    %v719 = vld [vmem:[%s3 + $0x138] sm:$0xff]
    %v720 = vld [vmem:[%s3 + $0x140] sm:$0xff]
    %v721 = vld [vmem:[%s3 + $0x148] sm:$0xff]
    %v722 = vld [vmem:[%s3 + $0x150] sm:$0xff]
    %v723 = vld [vmem:[%s3 + $0x158] sm:$0xff]
    %v724 = vld [vmem:[%s3 + $0x160] sm:$0xff]
    %v725 = vld [vmem:[%s3 + $0x168] sm:$0xff]
    %v726 = vld [vmem:[%s3 + $0x170] sm:$0xff]
    %v727 = vld [vmem:[%s3 + $0x178] sm:$0xff]
    %v728 = vld [vmem:[%s6] sm:$0x1]
    %v730 = vlaneseq
    %v731 = vshrl.u32 %v730, 7
    %v732 = vsub.s32 0, %v731
    %v733 = vrot.slane %v728, %v732
    %735 = vmatprep.subr.mxu0 0.0
    %736 = vmatpush1.msra.mxu0 %v695
    %737 = vmatprep.subr.mxu0 0.0
    %738 = vmatpush1.msra.mxu0 %v694
    %739 = vmatprep.subr.mxu0 0.0
    %740 = vmatpush1.msra.mxu0 %v693
    %741 = vmatprep.subr.mxu0 0.0
    %742 = vmatpush1.msra.mxu0 %v692
    %743 = vmatprep.subr.mxu0 0.0
    %744 = vmatpush1.msra.mxu0 %v691
    %745 = vmatprep.subr.mxu0 0.0
    %746 = vmatpush1.msra.mxu0 %v690
    %747 = vmatprep.subr.mxu0 0.0
    %748 = vmatpush1.msra.mxu0 %v689
    %749 = vmatprep.subr.mxu0 0.0
    %750 = vmatpush1.msra.mxu0 %v688
    %751 = vmatprep.subr.mxu0 0.0
    %752 = vmatpush1.msra.mxu0 %v687
    %753 = vmatprep.subr.mxu0 0.0
    %754 = vmatpush1.msra.mxu0 %v686
    %755 = vmatprep.subr.mxu0 0.0
    %756 = vmatpush1.msra.mxu0 %v685
    %757 = vmatprep.subr.mxu0 0.0
    %758 = vmatpush1.msra.mxu0 %v684
    %759 = vmatprep.subr.mxu0 0.0
    %760 = vmatpush1.msra.mxu0 %v683
    %761 = vmatprep.subr.mxu0 0.0
    %762 = vmatpush1.msra.mxu0 %v682
    %763 = vmatprep.subr.mxu0 0.0
    %764 = vmatpush1.msra.mxu0 %v681
    %765 = vmatprep.subr.mxu0 0.0
    %766 = vmatpush1.msra.mxu0 %v680
    %767 = vmatprep.subr.mxu0 0.0
    %768 = vmatpush2.msra.mxu0 %v711
    %769 = vmatprep.subr.mxu0 0.0
    %770 = vmatpush2.msra.mxu0 %v710
    %771 = vmatprep.subr.mxu0 0.0
    %772 = vmatpush2.msra.mxu0 %v709
    %773 = vmatprep.subr.mxu0 0.0
    %774 = vmatpush2.msra.mxu0 %v708
    %775 = vmatprep.subr.mxu0 0.0
    %776 = vmatpush2.msra.mxu0 %v707
    %777 = vmatprep.subr.mxu0 0.0
    %778 = vmatpush2.msra.mxu0 %v706
    %779 = vmatprep.subr.mxu0 0.0
    %780 = vmatpush2.msra.mxu0 %v705
    %781 = vmatprep.subr.mxu0 0.0
    %782 = vmatpush2.msra.mxu0 %v704
    %783 = vmatprep.subr.mxu0 0.0
    %784 = vmatpush2.msra.mxu0 %v703
    %785 = vmatprep.subr.mxu0 0.0
    %786 = vmatpush2.msra.mxu0 %v702
    %787 = vmatprep.subr.mxu0 0.0
    %788 = vmatpush2.msra.mxu0 %v701
    %789 = vmatprep.subr.mxu0 0.0
    %790 = vmatpush2.msra.mxu0 %v700
    %791 = vmatprep.subr.mxu0 0.0
    %792 = vmatpush2.msra.mxu0 %v699
    %793 = vmatprep.subr.mxu0 0.0
    %794 = vmatpush2.msra.mxu0 %v698
    %795 = vmatprep.subr.mxu0 0.0
    %796 = vmatpush2.msra.mxu0 %v697
    %797 = vmatprep.subr.mxu0 0.0
    %798 = vmatpush2.msra.mxu0 %v696
    %799 = vmatprep.mubr.f32.mxu0 %v678
    %800 = vmatmul.mubr.f32.gmra.mxu0 %v677
    %v801 = vpop.f32.mrf.mxu0
    %v802 = vadd.f32 %v733, %v801
    %v803 = vpop.f32.mrf.mxu0
    %804 = vdwg.mxu0
    %805 = vmatprep.subr.mxu0 0.0
    %806 = vmatpush1.msra.mxu0 %v727
    %807 = vmatprep.subr.mxu0 0.0
    %808 = vmatpush1.msra.mxu0 %v726
    %809 = vmatprep.subr.mxu0 0.0
    %810 = vmatpush1.msra.mxu0 %v725
    %811 = vmatprep.subr.mxu0 0.0
    %812 = vmatpush1.msra.mxu0 %v724
    %813 = vmatprep.subr.mxu0 0.0
    %814 = vmatpush1.msra.mxu0 %v723
    %815 = vmatprep.subr.mxu0 0.0
    %816 = vmatpush1.msra.mxu0 %v722
    %817 = vmatprep.subr.mxu0 0.0
    %818 = vmatpush1.msra.mxu0 %v721
    %819 = vmatprep.subr.mxu0 0.0
    %820 = vmatpush1.msra.mxu0 %v720
    %821 = vmatprep.subr.mxu0 0.0
    %822 = vmatpush1.msra.mxu0 %v719
    %823 = vmatprep.subr.mxu0 0.0
    %824 = vmatpush1.msra.mxu0 %v718
    %825 = vmatprep.subr.mxu0 0.0
    %826 = vmatpush1.msra.mxu0 %v717
    %827 = vmatprep.subr.mxu0 0.0
    %828 = vmatpush1.msra.mxu0 %v716
    %829 = vmatprep.subr.mxu0 0.0
    %830 = vmatpush1.msra.mxu0 %v715
    %831 = vmatprep.subr.mxu0 0.0
    %832 = vmatpush1.msra.mxu0 %v714
    %833 = vmatprep.subr.mxu0 0.0
    %834 = vmatpush1.msra.mxu0 %v713
    %835 = vmatprep.subr.mxu0 0.0
    %836 = vmatpush1.msra.mxu0 %v712
    %837 = vmatprep.subr.mxu0 0.0
    %838 = vmatpush2.msra.mxu0 0.0
    %839 = vmatprep.subr.mxu0 0.0
    %840 = vmatpush2.msra.mxu0 0.0
    %841 = vmatprep.subr.mxu0 0.0
    %842 = vmatpush2.msra.mxu0 0.0
    %843 = vmatprep.subr.mxu0 0.0
    %844 = vmatpush2.msra.mxu0 0.0
    %845 = vmatprep.subr.mxu0 0.0
    %846 = vmatpush2.msra.mxu0 0.0
    %847 = vmatprep.subr.mxu0 0.0
    %848 = vmatpush2.msra.mxu0 0.0
    %849 = vmatprep.subr.mxu0 0.0
    %850 = vmatpush2.msra.mxu0 0.0
    %851 = vmatprep.subr.mxu0 0.0
    %852 = vmatpush2.msra.mxu0 0.0
    %853 = vmatprep.subr.mxu0 0.0
    %854 = vmatpush2.msra.mxu0 0.0
    %855 = vmatprep.subr.mxu0 0.0
    %856 = vmatpush2.msra.mxu0 0.0
    %857 = vmatprep.subr.mxu0 0.0
    %858 = vmatpush2.msra.mxu0 0.0
    %859 = vmatprep.subr.mxu0 0.0
    %860 = vmatpush2.msra.mxu0 0.0
    %861 = vmatprep.subr.mxu0 0.0
    %862 = vmatpush2.msra.mxu0 0.0
    %863 = vmatprep.subr.mxu0 0.0
    %864 = vmatpush2.msra.mxu0 0.0
    %865 = vmatprep.subr.mxu0 0.0
    %866 = vmatpush2.msra.mxu0 0.0
    %867 = vmatprep.subr.mxu0 0.0
    %868 = vmatpush2.msra.mxu0 0.0
    %869 = vmatprep.mubr.f32.mxu0 0.0
    %870 = vmatmul.mubr.f32.gmra.mxu0 %v679
    %v871 = vpop.f32.mrf.mxu0
    %v872 = vadd.f32 %v802, %v871
    %v873 = vpop.f32.mrf.mxu0
    %874 = vdwg.mxu0
    %v875 = vmax.f32 %v872, 0.0
    %877 = vrot.lane.b32.xlu0 %v875, 64
    %v878 = vpop.permute.xlu0 %877
    %880 = vrot.lane.b32.xlu0 %v875, 32
    %v881 = vpop.permute.xlu0 %880
    %vm883 = vcmask 523264
    %v884 = vsel %vm883, %v875, %v878
    %vm885 = vcmask 654336
    %v886 = vsel %vm885, %v884, %v878
    %vm887 = vcmask 785408
    %v888 = vsel %vm887, %v886, %v881
    %vm889 = vcmask 916480
    %v890 = vsel %vm889, %v888, %v881
    %v891 = vld [vmem:[%s7] sm:$0xff]
    %v892 = vld [vmem:[%s7 + $0x8] sm:$0xff]
    %v893 = vld [vmem:[%s7 + $0x10] sm:$0xff]
    %v894 = vld [vmem:[%s7 + $0x18] sm:$0xff]
    %v895 = vld [vmem:[%s8] sm:$0x1]
    %v897 = vlaneseq
    %v898 = vshrl.u32 %v897, 7
    %v899 = vsub.s32 0, %v898
    %v900 = vrot.slane %v895, %v899
    %902 = vmatprep.subr.mxu0 0.0
    %903 = vmatpush1.msra.mxu0 0.0
    %904 = vmatprep.subr.mxu0 0.0
    %905 = vmatpush1.msra.mxu0 0.0
    %906 = vmatprep.subr.mxu0 0.0
    %907 = vmatpush1.msra.mxu0 0.0
    %908 = vmatprep.subr.mxu0 0.0
    %909 = vmatpush1.msra.mxu0 0.0
    %910 = vmatprep.subr.mxu0 0.0
    %911 = vmatpush1.msra.mxu0 0.0
    %912 = vmatprep.subr.mxu0 0.0
    %913 = vmatpush1.msra.mxu0 0.0
    %914 = vmatprep.subr.mxu0 0.0
    %915 = vmatpush1.msra.mxu0 0.0
    %916 = vmatprep.subr.mxu0 0.0
    %917 = vmatpush1.msra.mxu0 0.0
    %918 = vmatprep.subr.mxu0 0.0
    %919 = vmatpush1.msra.mxu0 0.0
    %920 = vmatprep.subr.mxu0 0.0
    %921 = vmatpush1.msra.mxu0 0.0
    %922 = vmatprep.subr.mxu0 0.0
    %923 = vmatpush1.msra.mxu0 0.0
    %924 = vmatprep.subr.mxu0 0.0
    %925 = vmatpush1.msra.mxu0 0.0
    %926 = vmatprep.subr.mxu0 0.0
    %927 = vmatpush1.msra.mxu0 %v894
    %928 = vmatprep.subr.mxu0 0.0
    %929 = vmatpush1.msra.mxu0 %v893
    %930 = vmatprep.subr.mxu0 0.0
    %931 = vmatpush1.msra.mxu0 %v892
    %932 = vmatprep.subr.mxu0 0.0
    %933 = vmatpush1.msra.mxu0 %v891
    %934 = vmatprep.subr.mxu0 0.0
    %935 = vmatpush2.msra.mxu0 0.0
    %936 = vmatprep.subr.mxu0 0.0
    %937 = vmatpush2.msra.mxu0 0.0
    %938 = vmatprep.subr.mxu0 0.0
    %939 = vmatpush2.msra.mxu0 0.0
    %940 = vmatprep.subr.mxu0 0.0
    %941 = vmatpush2.msra.mxu0 0.0
    %942 = vmatprep.subr.mxu0 0.0
    %943 = vmatpush2.msra.mxu0 0.0
    %944 = vmatprep.subr.mxu0 0.0
    %945 = vmatpush2.msra.mxu0 0.0
    %946 = vmatprep.subr.mxu0 0.0
    %947 = vmatpush2.msra.mxu0 0.0
    %948 = vmatprep.subr.mxu0 0.0
    %949 = vmatpush2.msra.mxu0 0.0
    %950 = vmatprep.subr.mxu0 0.0
    %951 = vmatpush2.msra.mxu0 0.0
    %952 = vmatprep.subr.mxu0 0.0
    %953 = vmatpush2.msra.mxu0 0.0
    %954 = vmatprep.subr.mxu0 0.0
    %955 = vmatpush2.msra.mxu0 0.0
    %956 = vmatprep.subr.mxu0 0.0
    %957 = vmatpush2.msra.mxu0 0.0
    %958 = vmatprep.subr.mxu0 0.0
    %959 = vmatpush2.msra.mxu0 0.0
    %960 = vmatprep.subr.mxu0 0.0
    %961 = vmatpush2.msra.mxu0 0.0
    %962 = vmatprep.subr.mxu0 0.0
    %963 = vmatpush2.msra.mxu0 0.0
    %964 = vmatprep.subr.mxu0 0.0
    %965 = vmatpush2.msra.mxu0 0.0
    %966 = vmatprep.mubr.f32.mxu0 0.0
    %967 = vmatmul.mubr.f32.gmra.mxu0 %v88
    %v968 = vpop.f32.mrf.mxu0
    %v969 = vadd.f32 %v900, %v968
    %v970 = vpop.f32.mrf.mxu0
    %971 = vdwg.mxu0
    %vm972 = vcmask 64512
    %v973 = vsel %vm972, %v969, -inf
    %974 = vmax.xlane.f32.xlu0 %v973
    %v975 = vpop.xlane.xlu0 %974
    %v976 = vsub.f32 %v969, %v975
    %v977 = vmul.f32 %v976, 1.442695
    %v978 = vpow.pop %v977
    %v979 = vld [vmem:[%s9] sm:$0xff]
    %v981 = vsel %vm972, %v978, 0
    %983 = vmatprep.subr.mxu0 0.0
    %984 = vmatpush1.msra.mxu0 0.0
    %985 = vmatprep.subr.mxu0 0.0
    %986 = vmatpush1.msra.mxu0 0.0
    %987 = vmatprep.subr.mxu0 0.0
    %988 = vmatpush1.msra.mxu0 0.0
    %989 = vmatprep.subr.mxu0 0.0
    %990 = vmatpush1.msra.mxu0 0.0
    %991 = vmatprep.subr.mxu0 0.0
    %992 = vmatpush1.msra.mxu0 0.0
    %993 = vmatprep.subr.mxu0 0.0
    %994 = vmatpush1.msra.mxu0 0.0
    %995 = vmatprep.subr.mxu0 0.0
    %996 = vmatpush1.msra.mxu0 0.0
    %997 = vmatprep.subr.mxu0 0.0
    %998 = vmatpush1.msra.mxu0 0.0
    %999 = vmatprep.subr.mxu0 0.0
    %1000 = vmatpush1.msra.mxu0 0.0
    %1001 = vmatprep.subr.mxu0 0.0
    %1002 = vmatpush1.msra.mxu0 0.0
    %1003 = vmatprep.subr.mxu0 0.0
    %1004 = vmatpush1.msra.mxu0 0.0
    %1005 = vmatprep.subr.mxu0 0.0
    %1006 = vmatpush1.msra.mxu0 0.0
    %1007 = vmatprep.subr.mxu0 0.0
    %1008 = vmatpush1.msra.mxu0 0.0
    %1009 = vmatprep.subr.mxu0 0.0
    %1010 = vmatpush1.msra.mxu0 0.0
    %1011 = vmatprep.subr.mxu0 0.0
    %1012 = vmatpush1.msra.mxu0 0.0
    %1013 = vmatprep.subr.mxu0 0.0
    %1014 = vmatpush1.msra.mxu0 %v979
    %1015 = vmatprep.subr.mxu0 0.0
    %1016 = vmatpush2.msra.mxu0 0.0
    %1017 = vmatprep.subr.mxu0 0.0
    %1018 = vmatpush2.msra.mxu0 0.0
    %1019 = vmatprep.subr.mxu0 0.0
    %1020 = vmatpush2.msra.mxu0 0.0
    %1021 = vmatprep.subr.mxu0 0.0
    %1022 = vmatpush2.msra.mxu0 0.0
    %1023 = vmatprep.subr.mxu0 0.0
    %1024 = vmatpush2.msra.mxu0 0.0
    %1025 = vmatprep.subr.mxu0 0.0
    %1026 = vmatpush2.msra.mxu0 0.0
    %1027 = vmatprep.subr.mxu0 0.0
    %1028 = vmatpush2.msra.mxu0 0.0
    %1029 = vmatprep.subr.mxu0 0.0
    %1030 = vmatpush2.msra.mxu0 0.0
    %1031 = vmatprep.subr.mxu0 0.0
    %1032 = vmatpush2.msra.mxu0 0.0
    %1033 = vmatprep.subr.mxu0 0.0
    %1034 = vmatpush2.msra.mxu0 0.0
    %1035 = vmatprep.subr.mxu0 0.0
    %1036 = vmatpush2.msra.mxu0 0.0
    %1037 = vmatprep.subr.mxu0 0.0
    %1038 = vmatpush2.msra.mxu0 0.0
    %1039 = vmatprep.subr.mxu0 0.0
    %1040 = vmatpush2.msra.mxu0 0.0
    %1041 = vmatprep.subr.mxu0 0.0
    %1042 = vmatpush2.msra.mxu0 0.0
    %1043 = vmatprep.subr.mxu0 0.0
    %1044 = vmatpush2.msra.mxu0 0.0
    %1045 = vmatprep.subr.mxu0 0.0
    %1046 = vmatpush2.msra.mxu0 0.0
    %1047 = vmatprep.mubr.f32.mxu0 0.0
    %1048 = vmatmul.mubr.f32.gmra.mxu0 %v981
    %v1049 = vpop.f32.mrf.mxu0
    %v1050 = vadd.f32 0.0, %v1049
    %v1051 = vpop.f32.mrf.mxu0
    %1052 = vdwg.mxu0
    %v1053 = vmax.f32 %v1050, 1e-30
    %v1054 = vrcp.pop %v1053
    %v1055 = vmul.f32 %v978, %v1054
    %v1056 = vld [vmem:[%s10] sm:$0xff]
    %v1058 = vsel %vm972, %v1055, 0
    %1060 = vmatprep.subr.mxu0 0.0
    %1061 = vmatpush1.msra.mxu0 0.0
    %1062 = vmatprep.subr.mxu0 0.0
    %1063 = vmatpush1.msra.mxu0 0.0
    %1064 = vmatprep.subr.mxu0 0.0
    %1065 = vmatpush1.msra.mxu0 0.0
    %1066 = vmatprep.subr.mxu0 0.0
    %1067 = vmatpush1.msra.mxu0 0.0
    %1068 = vmatprep.subr.mxu0 0.0
    %1069 = vmatpush1.msra.mxu0 0.0
    %1070 = vmatprep.subr.mxu0 0.0
    %1071 = vmatpush1.msra.mxu0 0.0
    %1072 = vmatprep.subr.mxu0 0.0
    %1073 = vmatpush1.msra.mxu0 0.0
    %1074 = vmatprep.subr.mxu0 0.0
    %1075 = vmatpush1.msra.mxu0 0.0
    %1076 = vmatprep.subr.mxu0 0.0
    %1077 = vmatpush1.msra.mxu0 0.0
    %1078 = vmatprep.subr.mxu0 0.0
    %1079 = vmatpush1.msra.mxu0 0.0
    %1080 = vmatprep.subr.mxu0 0.0
    %1081 = vmatpush1.msra.mxu0 0.0
    %1082 = vmatprep.subr.mxu0 0.0
    %1083 = vmatpush1.msra.mxu0 0.0
    %1084 = vmatprep.subr.mxu0 0.0
    %1085 = vmatpush1.msra.mxu0 0.0
    %1086 = vmatprep.subr.mxu0 0.0
    %1087 = vmatpush1.msra.mxu0 0.0
    %1088 = vmatprep.subr.mxu0 0.0
    %1089 = vmatpush1.msra.mxu0 0.0
    %1090 = vmatprep.subr.mxu0 0.0
    %1091 = vmatpush1.msra.mxu0 %v1056
    %1092 = vmatprep.subr.mxu0 0.0
    %1093 = vmatpush2.msra.mxu0 0.0
    %1094 = vmatprep.subr.mxu0 0.0
    %1095 = vmatpush2.msra.mxu0 0.0
    %1096 = vmatprep.subr.mxu0 0.0
    %1097 = vmatpush2.msra.mxu0 0.0
    %1098 = vmatprep.subr.mxu0 0.0
    %1099 = vmatpush2.msra.mxu0 0.0
    %1100 = vmatprep.subr.mxu0 0.0
    %1101 = vmatpush2.msra.mxu0 0.0
    %1102 = vmatprep.subr.mxu0 0.0
    %1103 = vmatpush2.msra.mxu0 0.0
    %1104 = vmatprep.subr.mxu0 0.0
    %1105 = vmatpush2.msra.mxu0 0.0
    %1106 = vmatprep.subr.mxu0 0.0
    %1107 = vmatpush2.msra.mxu0 0.0
    %1108 = vmatprep.subr.mxu0 0.0
    %1109 = vmatpush2.msra.mxu0 0.0
    %1110 = vmatprep.subr.mxu0 0.0
    %1111 = vmatpush2.msra.mxu0 0.0
    %1112 = vmatprep.subr.mxu0 0.0
    %1113 = vmatpush2.msra.mxu0 0.0
    %1114 = vmatprep.subr.mxu0 0.0
    %1115 = vmatpush2.msra.mxu0 0.0
    %1116 = vmatprep.subr.mxu0 0.0
    %1117 = vmatpush2.msra.mxu0 0.0
    %1118 = vmatprep.subr.mxu0 0.0
    %1119 = vmatpush2.msra.mxu0 0.0
    %1120 = vmatprep.subr.mxu0 0.0
    %1121 = vmatpush2.msra.mxu0 0.0
    %1122 = vmatprep.subr.mxu0 0.0
    %1123 = vmatpush2.msra.mxu0 0.0
    %1124 = vmatprep.mubr.f32.mxu0 0.0
    %1125 = vmatmul.mubr.f32.gmra.mxu0 %v1058
    %v1126 = vpop.f32.mrf.mxu0
    %v1127 = vadd.f32 0.0, %v1126
    %v1128 = vpop.f32.mrf.mxu0
    %1129 = vdwg.mxu0
    %v1130 = vmul.f32 %v890, %v1127
    %v1131 = vld [vmem:[%s11] sm:$0xff]
    %v1132 = vld [vmem:[%s11 + $0x8] sm:$0xff]
    %v1133 = vld [vmem:[%s11 + $0x10] sm:$0xff]
    %v1134 = vld [vmem:[%s11 + $0x18] sm:$0xff]
    %v1135 = vld [vmem:[%s11 + $0x20] sm:$0xff]
    %v1136 = vld [vmem:[%s11 + $0x28] sm:$0xff]
    %v1137 = vld [vmem:[%s11 + $0x30] sm:$0xff]
    %v1138 = vld [vmem:[%s11 + $0x38] sm:$0xff]
    %v1139 = vld [vmem:[%s11 + $0x40] sm:$0xff]
    %v1140 = vld [vmem:[%s11 + $0x48] sm:$0xff]
    %v1141 = vld [vmem:[%s11 + $0x50] sm:$0xff]
    %v1142 = vld [vmem:[%s11 + $0x58] sm:$0xff]
    %v1143 = vld [vmem:[%s11 + $0x60] sm:$0xff]
    %v1144 = vld [vmem:[%s11 + $0x68] sm:$0xff]
    %v1145 = vld [vmem:[%s11 + $0x70] sm:$0xff]
    %v1146 = vld [vmem:[%s11 + $0x78] sm:$0xff]
    %1147 = vmatprep.subr.mxu0 0.0
    %1148 = vmatpush1.msra.mxu0 %v1146
    %1149 = vmatprep.subr.mxu0 0.0
    %1150 = vmatpush1.msra.mxu0 %v1145
    %1151 = vmatprep.subr.mxu0 0.0
    %1152 = vmatpush1.msra.mxu0 %v1144
    %1153 = vmatprep.subr.mxu0 0.0
    %1154 = vmatpush1.msra.mxu0 %v1143
    %1155 = vmatprep.subr.mxu0 0.0
    %1156 = vmatpush1.msra.mxu0 %v1142
    %1157 = vmatprep.subr.mxu0 0.0
    %1158 = vmatpush1.msra.mxu0 %v1141
    %1159 = vmatprep.subr.mxu0 0.0
    %1160 = vmatpush1.msra.mxu0 %v1140
    %1161 = vmatprep.subr.mxu0 0.0
    %1162 = vmatpush1.msra.mxu0 %v1139
    %1163 = vmatprep.subr.mxu0 0.0
    %1164 = vmatpush1.msra.mxu0 %v1138
    %1165 = vmatprep.subr.mxu0 0.0
    %1166 = vmatpush1.msra.mxu0 %v1137
    %1167 = vmatprep.subr.mxu0 0.0
    %1168 = vmatpush1.msra.mxu0 %v1136
    %1169 = vmatprep.subr.mxu0 0.0
    %1170 = vmatpush1.msra.mxu0 %v1135
    %1171 = vmatprep.subr.mxu0 0.0
    %1172 = vmatpush1.msra.mxu0 %v1134
    %1173 = vmatprep.subr.mxu0 0.0
    %1174 = vmatpush1.msra.mxu0 %v1133
    %1175 = vmatprep.subr.mxu0 0.0
    %1176 = vmatpush1.msra.mxu0 %v1132
    %1177 = vmatprep.subr.mxu0 0.0
    %1178 = vmatpush1.msra.mxu0 %v1131
    %1179 = vmatprep.subr.mxu0 0.0
    %1180 = vmatpush2.msra.mxu0 0.0
    %1181 = vmatprep.subr.mxu0 0.0
    %1182 = vmatpush2.msra.mxu0 0.0
    %1183 = vmatprep.subr.mxu0 0.0
    %1184 = vmatpush2.msra.mxu0 0.0
    %1185 = vmatprep.subr.mxu0 0.0
    %1186 = vmatpush2.msra.mxu0 0.0
    %1187 = vmatprep.subr.mxu0 0.0
    %1188 = vmatpush2.msra.mxu0 0.0
    %1189 = vmatprep.subr.mxu0 0.0
    %1190 = vmatpush2.msra.mxu0 0.0
    %1191 = vmatprep.subr.mxu0 0.0
    %1192 = vmatpush2.msra.mxu0 0.0
    %1193 = vmatprep.subr.mxu0 0.0
    %1194 = vmatpush2.msra.mxu0 0.0
    %1195 = vmatprep.subr.mxu0 0.0
    %1196 = vmatpush2.msra.mxu0 0.0
    %1197 = vmatprep.subr.mxu0 0.0
    %1198 = vmatpush2.msra.mxu0 0.0
    %1199 = vmatprep.subr.mxu0 0.0
    %1200 = vmatpush2.msra.mxu0 0.0
    %1201 = vmatprep.subr.mxu0 0.0
    %1202 = vmatpush2.msra.mxu0 0.0
    %1203 = vmatprep.subr.mxu0 0.0
    %1204 = vmatpush2.msra.mxu0 0.0
    %1205 = vmatprep.subr.mxu0 0.0
    %1206 = vmatpush2.msra.mxu0 0.0
    %1207 = vmatprep.subr.mxu0 0.0
    %1208 = vmatpush2.msra.mxu0 0.0
    %1209 = vmatprep.subr.mxu0 0.0
    %1210 = vmatpush2.msra.mxu0 0.0
    %1211 = vmatprep.mubr.f32.mxu0 0.0
    %1212 = vmatmul.mubr.f32.gmra.mxu0 %v1130
    %v1213 = vpop.f32.mrf.mxu0
    %v1214 = vadd.f32 0.0, %v1213
    %v1215 = vpop.f32.mrf.mxu0
    %1216 = vdwg.mxu0
    %1217 = vst [vmem:[#allocation5] sm:$0xff] %v1214
    // Predicated region
    $region54: #{tpu_custom_call.1} parent=1 // pred_check
      _
    $region55: #{tpu_custom_call.1} parent=1 // pred_check_branch
      %1219 = sbr.rel (0) target = $region57
    $region56: #{tpu_custom_call.1} parent=1 // pred_region
      %s1221 = ssub.s32 128, 128
      %1222 = vsyncadd [#allocation4], %s1221
      %s1224 = sshll.u32 [#allocation5], 4
      %s1225 = int_to_ptr.vmem [resolvable:$true] %s1224
      %1227 = dma.vmem_to_hbm [thread:$0]  %s1225, 128, %s12, [#allocation4]
    $region57: #{tpu_custom_call.1} parent=1 // pred_fallthru
      _
    // Predicated region
    $region58: #{tpu_custom_call.1} parent=1 // pred_check
      _
    $region59: #{tpu_custom_call.1} parent=1 // pred_check_branch
      %1229 = sbr.rel (0) target = $region61
    $region60: #{tpu_custom_call.1} parent=1 // pred_region
      %1230 = dma.done [#allocation4], 128
    $region61: #{tpu_custom_call.1} parent=1 // pred_fallthru
      _
    %1231 = vsyncpa [#allocation3], 1
    %1232 = vsyncpa [#allocation4], 1

</llo_original>
